<compile_context>
chip_gen: v7x
topology: tpu7x:2x2x1
jax: 0.10.0
libtpu: 0.0.40
codegen_flags: <defaults>
</compile_context>

<pallas_src>
import functools

import numpy as np
import jax
import jax.numpy as jnp
from jax.experimental import pallas as pl
from jax.experimental.pallas import tpu as pltpu

KH = KW = 4
STRIDE = 2
TAPS = KH * KW        # 16 kernel taps per conv
BN_EPS = 1e-5
LEAKY_SLOPE = 0.2
OUT_LANES = 128       # final store kept lane-dense


# ----------------------------------------------------------------------------
# Fused Pallas kernel
# ----------------------------------------------------------------------------
def _bn_leaky_relu(y, gb, count):
    """Training-mode BatchNorm2d over the row axis (= N*H*W) + LeakyReLU(0.2).

    One-pass stats (review item): var = E[y^2] - E[y]^2 (biased, as PyTorch).
    y:  (rows, C) f32 pre-activation
    gb: (2, C)    row 0 = gamma, row 1 = beta
    """
    inv = 1.0 / float(count)
    mean = jnp.sum(y, axis=0, keepdims=True) * inv
    ex2 = jnp.sum(y * y, axis=0, keepdims=True) * inv
    var = jnp.maximum(ex2 - mean * mean, 0.0)
    scale = gb[0:1, :] * jax.lax.rsqrt(var + BN_EPS)        # gamma * rsqrt(var+eps)
    z = (y - mean) * scale + gb[1:2, :]                     # single FMA epilogue
    return jnp.where(z >= 0, z, LEAKY_SLOPE * z)


def _fused_disc_kernel(p1_ref, w1_ref, gb1_ref, sel2_ref, w2_ref, gb2_ref,
                       m3_ref, b3_ref, o_ref, a1re_sc, p2_sc, *, dims):
    """Whole discriminator forward; every intermediate lives in VMEM.

    p1_ref   (N*Q1, K1)     bf16  layer-1 im2col patches (K1 = im_chan*16)
    w1_ref   (K1, C1)       bf16  layer-1 weight
    gb1_ref  (2, C1)        f32   layer-1 BN gamma / beta
    sel2_ref (16*P2, Q1)    bf16  batch-shared stride-2 row selection (rows t-major)
    w2_ref   (16*C1, C2)    bf16  layer-2 weight with taps stacked along K
    gb2_ref  (2, C2)        f32   layer-2 BN gamma / beta
    m3_ref   (P3, Q2, C2)   f32   layer-3 taps scattered onto the Q2 spatial map
    b3_ref   (1, 1)         f32   layer-3 conv bias
    o_ref    (N*P3, 128)    f32   lane-dense output (real value broadcast over lanes)
    a1re_sc  (Q1, N*C1)     f32   scratch: a1 in shared-spatial-rows layout
    p2_sc    (N*P2, 16*C1)  f32   scratch: K-stacked layer-2 im2col patches
    """
    n, q1, p2, p3, c1, c2, taps = dims
    f32, bf16 = jnp.float32, jnp.bfloat16

    # ---- block 1: conv (one MXU matmul, bf16 x bf16 -> f32) + BN + LeakyReLU
    y1 = jnp.dot(p1_ref[...], w1_ref[...], preferred_element_type=f32)   # (N*Q1, C1)
    a1 = _bn_leaky_relu(y1, gb1_ref[...], n * q1)

    # Rearrange to shared-spatial-rows layout so the stride-2 gather is one
    # batch-shared matmul:  a1re[q, i*C1 + c] = a1[i*Q1 + q, c].
    # N tiny static slice-copies; TODO(synk): becomes a grid axis at large N.
    for i in range(n):
        a1re_sc[:, i * c1:(i + 1) * c1] = a1[i * q1:(i + 1) * q1, :]

    # ---- block 2: stride-2 im2col = ONE gather matmul for the whole batch ---
    g2 = jnp.dot(sel2_ref[...], a1re_sc[...].astype(bf16),
                 preferred_element_type=f32)                 # (16*P2, N*C1)
    # Assemble K-stacked patches with real channels packed contiguously:
    #   p2_sc[i*P2 + p, t*C1 + c] = g2[t*P2 + p, i*C1 + c]
    for i in range(n):
        for t in range(taps):
            p2_sc[i * p2:(i + 1) * p2, t * c1:(t + 1) * c1] = \
                g2[t * p2:(t + 1) * p2, i * c1:(i + 1) * c1]
    # One deep-K conv matmul (K = 16*C1), bf16 operands, f32 accumulation.
    y2 = jnp.dot(p2_sc[...].astype(bf16), w2_ref[...],
                 preferred_element_type=f32)                 # (N*P2, C2)
    a2 = _bn_leaky_relu(y2, gb2_ref[...], n * p2)

    # ---- block 3: final conv (C_out = 1) as a VPU masked multiply + reduce ---
    for i in range(n):
        blk = a2[i * p2:(i + 1) * p2, :]                     # (Q2, C2)
        for p in range(p3):
            v = jnp.sum(blk * m3_ref[p], axis=0, keepdims=True)      # (1, C2)
            v = jnp.sum(v, axis=1, keepdims=True) + b3_ref[...]      # (1, 1)
            r = i * p3 + p
            o_ref[r:r + 1, :] = jnp.broadcast_to(v, (1, o_ref.shape[1]))


# ----------------------------------------------------------------------------
# Plain-JAX operand preparation (tiny, shape-static, trace-time work)
# ----------------------------------------------------------------------------
def _im2col_nchw(x, k, s):
    """(N, C, H, W) -> (N*Ho*Wo, C*k*k); column index = c*k*k + di*k + dj,
    matching PyTorch's Conv2d weight.reshape(C_out, -1) ordering."""
    n, c, h, w = x.shape
    ho = (h - k) // s + 1
    wo = (w - k) // s + 1
    patches = []
    for di in range(k):
        for dj in range(k):
            patches.append(x[:, :, di:di + s * ho:s, dj:dj + s * wo:s])  # (N,C,ho,wo)
    col = jnp.stack(patches, axis=2)                   # (N, C, k*k, ho, wo)
    col = col.reshape(n, c * k * k, ho, wo)
    col = col.transpose(0, 2, 3, 1).reshape(n * ho * wo, c * k * k)
    return col, ho, wo


def _stacked_selection(hi, wi, ho, wo, k, s):
    """Batch-independent one-hot selection, rows stacked tap-major.

    shape (k*k*ho*wo, hi*wi); row t*ho*wo + (i*wo + j) (t = di*k + dj) selects
    input position (s*i + di, s*j + dj).  O(1) in batch size."""
    sel = np.zeros((k * k * ho * wo, hi * wi), np.float32)
    for di in range(k):
        for dj in range(k):
            t = di * k + dj
            for i in range(ho):
                for j in range(wo):
                    q = (s * i + di) * wi + (s * j + dj)
                    sel[t * ho * wo + i * wo + j, q] = 1.0
    return sel


def _pack_tap_weights_k(w):
    """(C_out, C_in, k, k) -> (k*k*C_in, C_out); row (di*k+dj)*C_in + c holds
    w[:, c, di, dj] -- the K-stacked layout matching p2_sc's column order."""
    c_out, c_in, k, _ = w.shape
    return jnp.transpose(w, (2, 3, 1, 0)).reshape(k * k * c_in, c_out)


def _final_tap_placement(hi, wi, ho, wo, k, s):
    """(ho*wo, hi*wi, k*k) one-hot: output position p, input position q, tap t."""
    plc = np.zeros((ho * wo, hi * wi, k * k), np.float32)
    for i in range(ho):
        for j in range(wo):
            p = i * wo + j
            for di in range(k):
                for dj in range(k):
                    q = (s * i + di) * wi + (s * j + dj)
                    plc[p, q, di * k + dj] = 1.0
    return plc


def _full_spec(shape):
    return pl.BlockSpec(shape, lambda *_: (0,) * len(shape))


def spectral_norm_discriminator(image, params):
    """Forward pass. image: (N, im_chan, H, W) NCHW. Returns (N, -1) like PyTorch."""
    image = image.astype(jnp.float32)
    n = image.shape[0]
    bf16 = jnp.bfloat16

    # layer-1 im2col stays in the wrapper (reads the HBM input once)
    col, h1, w1 = _im2col_nchw(image, KH, STRIDE)
    q1 = h1 * w1
    h2, w2 = (h1 - KH) // STRIDE + 1, (w1 - KW) // STRIDE + 1
    h3, w3 = (h2 - KH) // STRIDE + 1, (w2 - KW) // STRIDE + 1
    p2, p3 = h2 * w2, h3 * w3
    c1 = params["w1"].shape[0]
    c2 = params["w2"].shape[0]

    # bf16 MXU operands (exact for the 0/1 selection), f32 accumulation in-kernel.
    p1 = col.astype(bf16)                                             # (N*Q1, K1)
    w1m = params["w1"].reshape(c1, -1).T.astype(bf16)                 # (K1, C1)
    gb1 = jnp.stack([params["g1"], params["be1"]]).astype(jnp.float32)

    sel2 = jnp.asarray(_stacked_selection(h1, w1, h2, w2, KH, STRIDE), bf16)
    w2m = _pack_tap_weights_k(params["w2"]).astype(bf16)              # (16*C1, C2)
    gb2 = jnp.stack([params["g2"], params["be2"]]).astype(jnp.float32)

    # layer-3 (C_out = 1): scatter the taps onto the Q2 spatial map once.
    plc = jnp.asarray(_final_tap_placement(h2, w2, h3, w3, KH, STRIDE))
    w3taps = jnp.transpose(params["w3"][0], (1, 2, 0)).reshape(TAPS, c2)
    m3 = jnp.tensordot(plc, w3taps.astype(jnp.float32), axes=[[2], [0]])  # (P3,Q2,C2)
    b3 = params["b3"].reshape(1, 1).astype(jnp.float32)
    # NOTE: conv biases b1/b2 are intentionally dropped — a per-channel constant
    # added before training-mode BatchNorm is exactly cancelled by mean removal.

    dims = (n, q1, p2, p3, c1, c2, TAPS)
    operands = (p1, w1m, gb1, sel2, w2m, gb2, m3, b3)
    out = pl.pallas_call(
        functools.partial(_fused_disc_kernel, dims=dims),
        grid=(1,),
        out_shape=jax.ShapeDtypeStruct((n * p3, OUT_LANES), jnp.float32),
        in_specs=[_full_spec(x.shape) for x in operands],
        out_specs=_full_spec((n * p3, OUT_LANES)),
        scratch_shapes=[pltpu.VMEM((q1, n * c1), jnp.float32),
                        pltpu.VMEM((n * p2, TAPS * c1), jnp.float32)],
        compiler_params=pltpu.CompilerParams(
            dimension_semantics=("arbitrary",)),
    )(*operands)

    # the final conv has one real output channel -> lane 0 of every row
    return out[:, 0].reshape(n, p3)


# ----------------------------------------------------------------------------
# Parameter init (spectral norm = one power iteration, as PyTorch training fwd)
# ----------------------------------------------------------------------------
def _spectral_normalize(w, key, eps=1e-12):
    c_out = w.shape[0]
    w2d = w.reshape(c_out, -1)
    u = jax.random.normal(key, (c_out,), dtype=jnp.float32)
    u = u / (jnp.linalg.norm(u) + eps)
    v = w2d.T @ u
    v = v / (jnp.linalg.norm(v) + eps)
    u = w2d @ v
    u = u / (jnp.linalg.norm(u) + eps)
    sigma = u @ (w2d @ v)
    return w / sigma


def init_params(key, im_chan=1, hidden_dim=16):
    ks = jax.random.split(key, 6)

    def conv_w(k, c_out, c_in):
        return 0.1 * jax.random.normal(k, (c_out, c_in, KH, KW), dtype=jnp.float32)

    w1 = conv_w(ks[0], hidden_dim, im_chan)
    w2 = conv_w(ks[1], hidden_dim * 2, hidden_dim)
    w3 = conv_w(ks[2], 1, hidden_dim * 2)
    return {
        "w1": _spectral_normalize(w1, ks[3]),
        "w2": _spectral_normalize(w2, ks[4]),
        "w3": _spectral_normalize(w3, ks[5]),
        # conv biases (b1/b2 cancel under training-mode BN; kept for the reference)
        "b1": 0.01 * jnp.arange(hidden_dim, dtype=jnp.float32),
        "b2": 0.01 * jnp.arange(hidden_dim * 2, dtype=jnp.float32),
        "b3": jnp.array([0.03], dtype=jnp.float32),
        # BatchNorm affine params (perturbed from the default 1/0 so the affine
        # path is actually exercised by the numerical check)
        "g1": 1.0 + 0.01 * jnp.arange(hidden_dim, dtype=jnp.float32),
        "be1": 0.02 * jnp.arange(hidden_dim, dtype=jnp.float32),
        "g2": 1.0 + 0.005 * jnp.arange(hidden_dim * 2, dtype=jnp.float32),
        "be2": 0.01 * jnp.arange(hidden_dim * 2, dtype=jnp.float32),
    }


# ----------------------------------------------------------------------------
# Pure-JAX (XLA) reference matching the PyTorch module in training mode
# ----------------------------------------------------------------------------
def _reference_forward(image, params):
    def conv(x, w, b):
        y = jax.lax.conv_general_dilated(
            x, w, window_strides=(STRIDE, STRIDE), padding="VALID",
            dimension_numbers=("NCHW", "OIHW", "NCHW"),
            precision=jax.lax.Precision.HIGHEST)
        return y + b.reshape(1, -1, 1, 1)

    def bn_lrelu(x, g, b):
        mean = jnp.mean(x, axis=(0, 2, 3), keepdims=True)
        var = jnp.mean(jnp.square(x - mean), axis=(0, 2, 3), keepdims=True)
        z = (g.reshape(1, -1, 1, 1) * (x - mean) * jax.lax.rsqrt(var + BN_EPS)
             + b.reshape(1, -1, 1, 1))
        return jnp.where(z >= 0, z, LEAKY_SLOPE * z)

    h = bn_lrelu(conv(image, params["w1"], params["b1"]), params["g1"], params["be1"])
    h = bn_lrelu(conv(h, params["w2"], params["b2"]), params["g2"], params["be2"])
    h = conv(h, params["w3"], params["b3"])
    return h.reshape(h.shape[0], -1)


if __name__ == "__main__":
    key = jax.random.PRNGKey(0)
    k_param, k_x = jax.random.split(key)
    # 28x28 (MNIST-like) is the smallest "round" size that survives three
    # stride-2 4x4 valid convs: 28 -> 13 -> 5 -> 1.
    batch, im_chan, spatial, hidden_dim = 2, 1, 28, 16
    x = jax.random.normal(k_x, (batch, im_chan, spatial, spatial), dtype=jnp.float32)
    params = init_params(k_param, im_chan=im_chan, hidden_dim=hidden_dim)

    fwd = jax.jit(spectral_norm_discriminator)
    out = jax.block_until_ready(fwd(x, params))
    assert out.shape == (batch, 1), out.shape
    assert bool(jnp.all(jnp.isfinite(out)))

    # bf16 MXU operands (f32 accumulation) vs an f32 HIGHEST-precision reference:
    # expected relative error ~1%; tolerance re-validated accordingly.
    ref = jax.block_until_ready(_reference_forward(x, params))
    assert bool(jnp.allclose(out, ref, rtol=5e-2, atol=5e-2)), (out, ref)

    print("KERNEL_OK")
</pallas_src>

<mosaic_0001>
module attributes {stable_mosaic.version = 11 : i64} {
  func.func @_fused_disc_kernel(%arg0: i32, %arg1: memref<338x16xbf16, #tpu.memory_space<vmem>>, %arg2: memref<16x16xbf16, #tpu.memory_space<vmem>>, %arg3: memref<2x16xf32, #tpu.memory_space<vmem>>, %arg4: memref<400x169xbf16, #tpu.memory_space<vmem>>, %arg5: memref<256x32xbf16, #tpu.memory_space<vmem>>, %arg6: memref<2x32xf32, #tpu.memory_space<vmem>>, %arg7: memref<1x25x32xf32, #tpu.memory_space<vmem>>, %arg8: memref<1x1xf32, #tpu.memory_space<vmem>>, %arg9: memref<2x128xf32, #tpu.memory_space<vmem>>, %arg10: memref<169x32xf32, #tpu.memory_space<vmem>>, %arg11: memref<50x256xf32, #tpu.memory_space<vmem>>) attributes {dimension_semantics = [#tpu.dimension_semantics<arbitrary>], iteration_bounds = array<i64: 1>, scalar_prefetch = 0 : i64, scratch_operands = 2 : i64, tpu.core_type = #tpu.core_type<tc>, window_params = [{pipeline_mode = #tpu.pipeline_mode<synchronous>, transform_indices = @transform_0, window_bounds = array<i64: 338, 16>}, {pipeline_mode = #tpu.pipeline_mode<synchronous>, transform_indices = @transform_1, window_bounds = array<i64: 16, 16>}, {pipeline_mode = #tpu.pipeline_mode<synchronous>, transform_indices = @transform_2, window_bounds = array<i64: 2, 16>}, {pipeline_mode = #tpu.pipeline_mode<synchronous>, transform_indices = @transform_3, window_bounds = array<i64: 400, 169>}, {pipeline_mode = #tpu.pipeline_mode<synchronous>, transform_indices = @transform_4, window_bounds = array<i64: 256, 32>}, {pipeline_mode = #tpu.pipeline_mode<synchronous>, transform_indices = @transform_5, window_bounds = array<i64: 2, 32>}, {pipeline_mode = #tpu.pipeline_mode<synchronous>, transform_indices = @transform_6, window_bounds = array<i64: 1, 25, 32>}, {pipeline_mode = #tpu.pipeline_mode<synchronous>, transform_indices = @transform_7, window_bounds = array<i64: 1, 1>}, {pipeline_mode = #tpu.pipeline_mode<synchronous>, transform_indices = @transform_8, window_bounds = array<i64: 2, 128>}]} {
    %c0 = arith.constant 0 : index
    %c0_0 = arith.constant 0 : index
    %0 = vector.load %arg1[%c0, %c0_0] : memref<338x16xbf16, #tpu.memory_space<vmem>>, vector<338x16xbf16>
    %c0_1 = arith.constant 0 : index
    %c0_2 = arith.constant 0 : index
    %1 = vector.load %arg2[%c0_1, %c0_2] : memref<16x16xbf16, #tpu.memory_space<vmem>>, vector<16x16xbf16>
    %cst = arith.constant dense<0.000000e+00> : vector<338x16xf32>
    %2 = tpu.matmul %0, %1, %cst {dimension_numbers = #tpu.dot_dimension_numbers<[1], [0], [0], [1], [0, 0, 1, 1], [], []>} : vector<338x16xbf16>, vector<16x16xbf16>, vector<338x16xf32> -> vector<338x16xf32>
    %c0_3 = arith.constant 0 : index
    %c0_4 = arith.constant 0 : index
    %3 = vector.load %arg3[%c0_3, %c0_4] : memref<2x16xf32, #tpu.memory_space<vmem>>, vector<2x16xf32>
    %cst_5 = arith.constant dense<0.000000e+00> : vector<16xf32>
    %4 = vector.multi_reduction <add>, %2, %cst_5 [0] : vector<338x16xf32> to vector<16xf32>
    %5 = vector.shape_cast %4 : vector<16xf32> to vector<1x16xf32>
    %cst_6 = arith.constant 2.958580e-03 : f32
    %6 = vector.broadcast %cst_6 : f32 to vector<1x16xf32>
    %7 = arith.mulf %5, %6 : vector<1x16xf32>
    %8 = arith.mulf %2, %2 : vector<338x16xf32>
    %cst_7 = arith.constant dense<0.000000e+00> : vector<16xf32>
    %9 = vector.multi_reduction <add>, %8, %cst_7 [0] : vector<338x16xf32> to vector<16xf32>
    %10 = vector.shape_cast %9 : vector<16xf32> to vector<1x16xf32>
    %cst_8 = arith.constant 2.958580e-03 : f32
    %11 = vector.broadcast %cst_8 : f32 to vector<1x16xf32>
    %12 = arith.mulf %10, %11 : vector<1x16xf32>
    %13 = arith.mulf %7, %7 : vector<1x16xf32>
    %14 = arith.subf %12, %13 : vector<1x16xf32>
    %cst_9 = arith.constant 0.000000e+00 : f32
    %15 = vector.broadcast %cst_9 : f32 to vector<1x16xf32>
    %16 = arith.maximumf %14, %15 : vector<1x16xf32>
    %17 = vector.extract_strided_slice %3 {offsets = [0, 0], sizes = [1, 16], strides = [1, 1]} : vector<2x16xf32> to vector<1x16xf32>
    %cst_10 = arith.constant 9.99999974E-6 : f32
    %18 = vector.broadcast %cst_10 : f32 to vector<1x16xf32>
    %19 = arith.addf %16, %18 : vector<1x16xf32>
    %20 = math.rsqrt %19 : vector<1x16xf32>
    %21 = arith.mulf %17, %20 : vector<1x16xf32>
    %22 = vector.broadcast %7 : vector<1x16xf32> to vector<338x16xf32>
    %23 = arith.subf %2, %22 : vector<338x16xf32>
    %24 = vector.broadcast %21 : vector<1x16xf32> to vector<338x16xf32>
    %25 = arith.mulf %23, %24 : vector<338x16xf32>
    %26 = vector.extract_strided_slice %3 {offsets = [1, 0], sizes = [1, 16], strides = [1, 1]} : vector<2x16xf32> to vector<1x16xf32>
    %27 = vector.broadcast %26 : vector<1x16xf32> to vector<338x16xf32>
    %28 = arith.addf %25, %27 : vector<338x16xf32>
    %cst_11 = arith.constant 0.000000e+00 : f32
    %29 = vector.broadcast %cst_11 : f32 to vector<338x16xf32>
    %30 = arith.cmpf oge, %28, %29 : vector<338x16xf32>
    %cst_12 = arith.constant 2.000000e-01 : f32
    %31 = vector.broadcast %cst_12 : f32 to vector<338x16xf32>
    %32 = arith.mulf %31, %28 : vector<338x16xf32>
    %33 = arith.select %30, %28, %32 : vector<338x16xi1>, vector<338x16xf32>
    %34 = vector.extract_strided_slice %33 {offsets = [0, 0], sizes = [169, 16], strides = [1, 1]} : vector<338x16xf32> to vector<169x16xf32>
    %c0_13 = arith.constant 0 : index
    %c0_14 = arith.constant 0 : index
    %35 = vector.load %arg10[%c0_13, %c0_14] : memref<169x32xf32, #tpu.memory_space<vmem>>, vector<169x16xf32>
    tpu.vector_store %arg10[%c0_13, %c0_14], %34 {strides = array<i32>} : memref<169x32xf32, #tpu.memory_space<vmem>>, vector<169x16xf32>,
    %36 = vector.extract_strided_slice %33 {offsets = [169, 0], sizes = [169, 16], strides = [1, 1]} : vector<338x16xf32> to vector<169x16xf32>
    %c0_15 = arith.constant 0 : index
    %c16 = arith.constant 16 : index
    %37 = vector.load %arg10[%c0_15, %c16] : memref<169x32xf32, #tpu.memory_space<vmem>>, vector<169x16xf32>
    tpu.vector_store %arg10[%c0_15, %c16], %36 {strides = array<i32>} : memref<169x32xf32, #tpu.memory_space<vmem>>, vector<169x16xf32>,
    %c0_16 = arith.constant 0 : index
    %c0_17 = arith.constant 0 : index
    %38 = vector.load %arg4[%c0_16, %c0_17] : memref<400x169xbf16, #tpu.memory_space<vmem>>, vector<400x169xbf16>
    %c0_18 = arith.constant 0 : index
    %c0_19 = arith.constant 0 : index
    %39 = vector.load %arg10[%c0_18, %c0_19] : memref<169x32xf32, #tpu.memory_space<vmem>>, vector<169x32xf32>
    %40 = arith.truncf %39 : vector<169x32xf32> to vector<169x32xbf16>
    %cst_20 = arith.constant dense<0.000000e+00> : vector<400x32xf32>
    %41 = tpu.matmul %38, %40, %cst_20 {dimension_numbers = #tpu.dot_dimension_numbers<[1], [0], [0], [1], [0, 0, 1, 1], [], []>} : vector<400x169xbf16>, vector<169x32xbf16>, vector<400x32xf32> -> vector<400x32xf32>
    %42 = vector.extract_strided_slice %41 {offsets = [0, 0], sizes = [25, 16], strides = [1, 1]} : vector<400x32xf32> to vector<25x16xf32>
    %c0_21 = arith.constant 0 : index
    %c0_22 = arith.constant 0 : index
    %43 = vector.load %arg11[%c0_21, %c0_22] : memref<50x256xf32, #tpu.memory_space<vmem>>, vector<25x16xf32>
    tpu.vector_store %arg11[%c0_21, %c0_22], %42 {strides = array<i32>} : memref<50x256xf32, #tpu.memory_space<vmem>>, vector<25x16xf32>,
    %44 = vector.extract_strided_slice %41 {offsets = [25, 0], sizes = [25, 16], strides = [1, 1]} : vector<400x32xf32> to vector<25x16xf32>
    %c0_23 = arith.constant 0 : index
    %c16_24 = arith.constant 16 : index
    %45 = vector.load %arg11[%c0_23, %c16_24] : memref<50x256xf32, #tpu.memory_space<vmem>>, vector<25x16xf32>
    tpu.vector_store %arg11[%c0_23, %c16_24], %44 {strides = array<i32>} : memref<50x256xf32, #tpu.memory_space<vmem>>, vector<25x16xf32>,
    %46 = vector.extract_strided_slice %41 {offsets = [50, 0], sizes = [25, 16], strides = [1, 1]} : vector<400x32xf32> to vector<25x16xf32>
    %c0_25 = arith.constant 0 : index
    %c32 = arith.constant 32 : index
    %47 = vector.load %arg11[%c0_25, %c32] : memref<50x256xf32, #tpu.memory_space<vmem>>, vector<25x16xf32>
    tpu.vector_store %arg11[%c0_25, %c32], %46 {strides = array<i32>} : memref<50x256xf32, #tpu.memory_space<vmem>>, vector<25x16xf32>,
    %48 = vector.extract_strided_slice %41 {offsets = [75, 0], sizes = [25, 16], strides = [1, 1]} : vector<400x32xf32> to vector<25x16xf32>
    %c0_26 = arith.constant 0 : index
    %c48 = arith.constant 48 : index
    %49 = vector.load %arg11[%c0_26, %c48] : memref<50x256xf32, #tpu.memory_space<vmem>>, vector<25x16xf32>
    tpu.vector_store %arg11[%c0_26, %c48], %48 {strides = array<i32>} : memref<50x256xf32, #tpu.memory_space<vmem>>, vector<25x16xf32>,
    %50 = vector.extract_strided_slice %41 {offsets = [100, 0], sizes = [25, 16], strides = [1, 1]} : vector<400x32xf32> to vector<25x16xf32>
    %c0_27 = arith.constant 0 : index
    %c64 = arith.constant 64 : index
    %51 = vector.load %arg11[%c0_27, %c64] : memref<50x256xf32, #tpu.memory_space<vmem>>, vector<25x16xf32>
    tpu.vector_store %arg11[%c0_27, %c64], %50 {strides = array<i32>} : memref<50x256xf32, #tpu.memory_space<vmem>>, vector<25x16xf32>,
    %52 = vector.extract_strided_slice %41 {offsets = [125, 0], sizes = [25, 16], strides = [1, 1]} : vector<400x32xf32> to vector<25x16xf32>
    %c0_28 = arith.constant 0 : index
    %c80 = arith.constant 80 : index
    %53 = vector.load %arg11[%c0_28, %c80] : memref<50x256xf32, #tpu.memory_space<vmem>>, vector<25x16xf32>
    tpu.vector_store %arg11[%c0_28, %c80], %52 {strides = array<i32>} : memref<50x256xf32, #tpu.memory_space<vmem>>, vector<25x16xf32>,
    %54 = vector.extract_strided_slice %41 {offsets = [150, 0], sizes = [25, 16], strides = [1, 1]} : vector<400x32xf32> to vector<25x16xf32>
    %c0_29 = arith.constant 0 : index
    %c96 = arith.constant 96 : index
    %55 = vector.load %arg11[%c0_29, %c96] : memref<50x256xf32, #tpu.memory_space<vmem>>, vector<25x16xf32>
    tpu.vector_store %arg11[%c0_29, %c96], %54 {strides = array<i32>} : memref<50x256xf32, #tpu.memory_space<vmem>>, vector<25x16xf32>,
    %56 = vector.extract_strided_slice %41 {offsets = [175, 0], sizes = [25, 16], strides = [1, 1]} : vector<400x32xf32> to vector<25x16xf32>
    %c0_30 = arith.constant 0 : index
    %c112 = arith.constant 112 : index
    %57 = vector.load %arg11[%c0_30, %c112] : memref<50x256xf32, #tpu.memory_space<vmem>>, vector<25x16xf32>
    tpu.vector_store %arg11[%c0_30, %c112], %56 {strides = array<i32>} : memref<50x256xf32, #tpu.memory_space<vmem>>, vector<25x16xf32>,
    %58 = vector.extract_strided_slice %41 {offsets = [200, 0], sizes = [25, 16], strides = [1, 1]} : vector<400x32xf32> to vector<25x16xf32>
    %c0_31 = arith.constant 0 : index
    %c128 = arith.constant 128 : index
    %59 = vector.load %arg11[%c0_31, %c128] : memref<50x256xf32, #tpu.memory_space<vmem>>, vector<25x16xf32>
    tpu.vector_store %arg11[%c0_31, %c128], %58 {strides = array<i32>} : memref<50x256xf32, #tpu.memory_space<vmem>>, vector<25x16xf32>,
    %60 = vector.extract_strided_slice %41 {offsets = [225, 0], sizes = [25, 16], strides = [1, 1]} : vector<400x32xf32> to vector<25x16xf32>
    %c0_32 = arith.constant 0 : index
    %c144 = arith.constant 144 : index
    %61 = vector.load %arg11[%c0_32, %c144] : memref<50x256xf32, #tpu.memory_space<vmem>>, vector<25x16xf32>
    tpu.vector_store %arg11[%c0_32, %c144], %60 {strides = array<i32>} : memref<50x256xf32, #tpu.memory_space<vmem>>, vector<25x16xf32>,
    %62 = vector.extract_strided_slice %41 {offsets = [250, 0], sizes = [25, 16], strides = [1, 1]} : vector<400x32xf32> to vector<25x16xf32>
    %c0_33 = arith.constant 0 : index
    %c160 = arith.constant 160 : index
    %63 = vector.load %arg11[%c0_33, %c160] : memref<50x256xf32, #tpu.memory_space<vmem>>, vector<25x16xf32>
    tpu.vector_store %arg11[%c0_33, %c160], %62 {strides = array<i32>} : memref<50x256xf32, #tpu.memory_space<vmem>>, vector<25x16xf32>,
    %64 = vector.extract_strided_slice %41 {offsets = [275, 0], sizes = [25, 16], strides = [1, 1]} : vector<400x32xf32> to vector<25x16xf32>
    %c0_34 = arith.constant 0 : index
    %c176 = arith.constant 176 : index
    %65 = vector.load %arg11[%c0_34, %c176] : memref<50x256xf32, #tpu.memory_space<vmem>>, vector<25x16xf32>
    tpu.vector_store %arg11[%c0_34, %c176], %64 {strides = array<i32>} : memref<50x256xf32, #tpu.memory_space<vmem>>, vector<25x16xf32>,
    %66 = vector.extract_strided_slice %41 {offsets = [300, 0], sizes = [25, 16], strides = [1, 1]} : vector<400x32xf32> to vector<25x16xf32>
    %c0_35 = arith.constant 0 : index
    %c192 = arith.constant 192 : index
    %67 = vector.load %arg11[%c0_35, %c192] : memref<50x256xf32, #tpu.memory_space<vmem>>, vector<25x16xf32>
    tpu.vector_store %arg11[%c0_35, %c192], %66 {strides = array<i32>} : memref<50x256xf32, #tpu.memory_space<vmem>>, vector<25x16xf32>,
    %68 = vector.extract_strided_slice %41 {offsets = [325, 0], sizes = [25, 16], strides = [1, 1]} : vector<400x32xf32> to vector<25x16xf32>
    %c0_36 = arith.constant 0 : index
    %c208 = arith.constant 208 : index
    %69 = vector.load %arg11[%c0_36, %c208] : memref<50x256xf32, #tpu.memory_space<vmem>>, vector<25x16xf32>
    tpu.vector_store %arg11[%c0_36, %c208], %68 {strides = array<i32>} : memref<50x256xf32, #tpu.memory_space<vmem>>, vector<25x16xf32>,
    %70 = vector.extract_strided_slice %41 {offsets = [350, 0], sizes = [25, 16], strides = [1, 1]} : vector<400x32xf32> to vector<25x16xf32>
    %c0_37 = arith.constant 0 : index
    %c224 = arith.constant 224 : index
    %71 = vector.load %arg11[%c0_37, %c224] : memref<50x256xf32, #tpu.memory_space<vmem>>, vector<25x16xf32>
    tpu.vector_store %arg11[%c0_37, %c224], %70 {strides = array<i32>} : memref<50x256xf32, #tpu.memory_space<vmem>>, vector<25x16xf32>,
    %72 = vector.extract_strided_slice %41 {offsets = [375, 0], sizes = [25, 16], strides = [1, 1]} : vector<400x32xf32> to vector<25x16xf32>
    %c0_38 = arith.constant 0 : index
    %c240 = arith.constant 240 : index
    %73 = vector.load %arg11[%c0_38, %c240] : memref<50x256xf32, #tpu.memory_space<vmem>>, vector<25x16xf32>
    tpu.vector_store %arg11[%c0_38, %c240], %72 {strides = array<i32>} : memref<50x256xf32, #tpu.memory_space<vmem>>, vector<25x16xf32>,
    %74 = vector.extract_strided_slice %41 {offsets = [0, 16], sizes = [25, 16], strides = [1, 1]} : vector<400x32xf32> to vector<25x16xf32>
    %c25 = arith.constant 25 : index
    %c0_39 = arith.constant 0 : index
    %75 = vector.load %arg11[%c25, %c0_39] : memref<50x256xf32, #tpu.memory_space<vmem>>, vector<25x16xf32>
    tpu.vector_store %arg11[%c25, %c0_39], %74 {strides = array<i32>} : memref<50x256xf32, #tpu.memory_space<vmem>>, vector<25x16xf32>,
    %76 = vector.extract_strided_slice %41 {offsets = [25, 16], sizes = [25, 16], strides = [1, 1]} : vector<400x32xf32> to vector<25x16xf32>
    %c25_40 = arith.constant 25 : index
    %c16_41 = arith.constant 16 : index
    %77 = vector.load %arg11[%c25_40, %c16_41] : memref<50x256xf32, #tpu.memory_space<vmem>>, vector<25x16xf32>
    tpu.vector_store %arg11[%c25_40, %c16_41], %76 {strides = array<i32>} : memref<50x256xf32, #tpu.memory_space<vmem>>, vector<25x16xf32>,
    %78 = vector.extract_strided_slice %41 {offsets = [50, 16], sizes = [25, 16], strides = [1, 1]} : vector<400x32xf32> to vector<25x16xf32>
    %c25_42 = arith.constant 25 : index
    %c32_43 = arith.constant 32 : index
    %79 = vector.load %arg11[%c25_42, %c32_43] : memref<50x256xf32, #tpu.memory_space<vmem>>, vector<25x16xf32>
    tpu.vector_store %arg11[%c25_42, %c32_43], %78 {strides = array<i32>} : memref<50x256xf32, #tpu.memory_space<vmem>>, vector<25x16xf32>,
    %80 = vector.extract_strided_slice %41 {offsets = [75, 16], sizes = [25, 16], strides = [1, 1]} : vector<400x32xf32> to vector<25x16xf32>
    %c25_44 = arith.constant 25 : index
    %c48_45 = arith.constant 48 : index
    %81 = vector.load %arg11[%c25_44, %c48_45] : memref<50x256xf32, #tpu.memory_space<vmem>>, vector<25x16xf32>
    tpu.vector_store %arg11[%c25_44, %c48_45], %80 {strides = array<i32>} : memref<50x256xf32, #tpu.memory_space<vmem>>, vector<25x16xf32>,
    %82 = vector.extract_strided_slice %41 {offsets = [100, 16], sizes = [25, 16], strides = [1, 1]} : vector<400x32xf32> to vector<25x16xf32>
    %c25_46 = arith.constant 25 : index
    %c64_47 = arith.constant 64 : index
    %83 = vector.load %arg11[%c25_46, %c64_47] : memref<50x256xf32, #tpu.memory_space<vmem>>, vector<25x16xf32>
    tpu.vector_store %arg11[%c25_46, %c64_47], %82 {strides = array<i32>} : memref<50x256xf32, #tpu.memory_space<vmem>>, vector<25x16xf32>,
    %84 = vector.extract_strided_slice %41 {offsets = [125, 16], sizes = [25, 16], strides = [1, 1]} : vector<400x32xf32> to vector<25x16xf32>
    %c25_48 = arith.constant 25 : index
    %c80_49 = arith.constant 80 : index
    %85 = vector.load %arg11[%c25_48, %c80_49] : memref<50x256xf32, #tpu.memory_space<vmem>>, vector<25x16xf32>
    tpu.vector_store %arg11[%c25_48, %c80_49], %84 {strides = array<i32>} : memref<50x256xf32, #tpu.memory_space<vmem>>, vector<25x16xf32>,
    %86 = vector.extract_strided_slice %41 {offsets = [150, 16], sizes = [25, 16], strides = [1, 1]} : vector<400x32xf32> to vector<25x16xf32>
    %c25_50 = arith.constant 25 : index
    %c96_51 = arith.constant 96 : index
    %87 = vector.load %arg11[%c25_50, %c96_51] : memref<50x256xf32, #tpu.memory_space<vmem>>, vector<25x16xf32>
    tpu.vector_store %arg11[%c25_50, %c96_51], %86 {strides = array<i32>} : memref<50x256xf32, #tpu.memory_space<vmem>>, vector<25x16xf32>,
    %88 = vector.extract_strided_slice %41 {offsets = [175, 16], sizes = [25, 16], strides = [1, 1]} : vector<400x32xf32> to vector<25x16xf32>
    %c25_52 = arith.constant 25 : index
    %c112_53 = arith.constant 112 : index
    %89 = vector.load %arg11[%c25_52, %c112_53] : memref<50x256xf32, #tpu.memory_space<vmem>>, vector<25x16xf32>
    tpu.vector_store %arg11[%c25_52, %c112_53], %88 {strides = array<i32>} : memref<50x256xf32, #tpu.memory_space<vmem>>, vector<25x16xf32>,
    %90 = vector.extract_strided_slice %41 {offsets = [200, 16], sizes = [25, 16], strides = [1, 1]} : vector<400x32xf32> to vector<25x16xf32>
    %c25_54 = arith.constant 25 : index
    %c128_55 = arith.constant 128 : index
    %91 = vector.load %arg11[%c25_54, %c128_55] : memref<50x256xf32, #tpu.memory_space<vmem>>, vector<25x16xf32>
    tpu.vector_store %arg11[%c25_54, %c128_55], %90 {strides = array<i32>} : memref<50x256xf32, #tpu.memory_space<vmem>>, vector<25x16xf32>,
    %92 = vector.extract_strided_slice %41 {offsets = [225, 16], sizes = [25, 16], strides = [1, 1]} : vector<400x32xf32> to vector<25x16xf32>
    %c25_56 = arith.constant 25 : index
    %c144_57 = arith.constant 144 : index
    %93 = vector.load %arg11[%c25_56, %c144_57] : memref<50x256xf32, #tpu.memory_space<vmem>>, vector<25x16xf32>
    tpu.vector_store %arg11[%c25_56, %c144_57], %92 {strides = array<i32>} : memref<50x256xf32, #tpu.memory_space<vmem>>, vector<25x16xf32>,
    %94 = vector.extract_strided_slice %41 {offsets = [250, 16], sizes = [25, 16], strides = [1, 1]} : vector<400x32xf32> to vector<25x16xf32>
    %c25_58 = arith.constant 25 : index
    %c160_59 = arith.constant 160 : index
    %95 = vector.load %arg11[%c25_58, %c160_59] : memref<50x256xf32, #tpu.memory_space<vmem>>, vector<25x16xf32>
    tpu.vector_store %arg11[%c25_58, %c160_59], %94 {strides = array<i32>} : memref<50x256xf32, #tpu.memory_space<vmem>>, vector<25x16xf32>,
    %96 = vector.extract_strided_slice %41 {offsets = [275, 16], sizes = [25, 16], strides = [1, 1]} : vector<400x32xf32> to vector<25x16xf32>
    %c25_60 = arith.constant 25 : index
    %c176_61 = arith.constant 176 : index
    %97 = vector.load %arg11[%c25_60, %c176_61] : memref<50x256xf32, #tpu.memory_space<vmem>>, vector<25x16xf32>
    tpu.vector_store %arg11[%c25_60, %c176_61], %96 {strides = array<i32>} : memref<50x256xf32, #tpu.memory_space<vmem>>, vector<25x16xf32>,
    %98 = vector.extract_strided_slice %41 {offsets = [300, 16], sizes = [25, 16], strides = [1, 1]} : vector<400x32xf32> to vector<25x16xf32>
    %c25_62 = arith.constant 25 : index
    %c192_63 = arith.constant 192 : index
    %99 = vector.load %arg11[%c25_62, %c192_63] : memref<50x256xf32, #tpu.memory_space<vmem>>, vector<25x16xf32>
    tpu.vector_store %arg11[%c25_62, %c192_63], %98 {strides = array<i32>} : memref<50x256xf32, #tpu.memory_space<vmem>>, vector<25x16xf32>,
    %100 = vector.extract_strided_slice %41 {offsets = [325, 16], sizes = [25, 16], strides = [1, 1]} : vector<400x32xf32> to vector<25x16xf32>
    %c25_64 = arith.constant 25 : index
    %c208_65 = arith.constant 208 : index
    %101 = vector.load %arg11[%c25_64, %c208_65] : memref<50x256xf32, #tpu.memory_space<vmem>>, vector<25x16xf32>
    tpu.vector_store %arg11[%c25_64, %c208_65], %100 {strides = array<i32>} : memref<50x256xf32, #tpu.memory_space<vmem>>, vector<25x16xf32>,
    %102 = vector.extract_strided_slice %41 {offsets = [350, 16], sizes = [25, 16], strides = [1, 1]} : vector<400x32xf32> to vector<25x16xf32>
    %c25_66 = arith.constant 25 : index
    %c224_67 = arith.constant 224 : index
    %103 = vector.load %arg11[%c25_66, %c224_67] : memref<50x256xf32, #tpu.memory_space<vmem>>, vector<25x16xf32>
    tpu.vector_store %arg11[%c25_66, %c224_67], %102 {strides = array<i32>} : memref<50x256xf32, #tpu.memory_space<vmem>>, vector<25x16xf32>,
    %104 = vector.extract_strided_slice %41 {offsets = [375, 16], sizes = [25, 16], strides = [1, 1]} : vector<400x32xf32> to vector<25x16xf32>
    %c25_68 = arith.constant 25 : index
    %c240_69 = arith.constant 240 : index
    %105 = vector.load %arg11[%c25_68, %c240_69] : memref<50x256xf32, #tpu.memory_space<vmem>>, vector<25x16xf32>
    tpu.vector_store %arg11[%c25_68, %c240_69], %104 {strides = array<i32>} : memref<50x256xf32, #tpu.memory_space<vmem>>, vector<25x16xf32>,
    %c0_70 = arith.constant 0 : index
    %c0_71 = arith.constant 0 : index
    %106 = vector.load %arg11[%c0_70, %c0_71] : memref<50x256xf32, #tpu.memory_space<vmem>>, vector<50x256xf32>
    %107 = arith.truncf %106 : vector<50x256xf32> to vector<50x256xbf16>
    %c0_72 = arith.constant 0 : index
    %c0_73 = arith.constant 0 : index
    %108 = vector.load %arg5[%c0_72, %c0_73] : memref<256x32xbf16, #tpu.memory_space<vmem>>, vector<256x32xbf16>
    %cst_74 = arith.constant dense<0.000000e+00> : vector<50x32xf32>
    %109 = tpu.matmul %107, %108, %cst_74 {dimension_numbers = #tpu.dot_dimension_numbers<[1], [0], [0], [1], [0, 0, 1, 1], [], []>} : vector<50x256xbf16>, vector<256x32xbf16>, vector<50x32xf32> -> vector<50x32xf32>
    %c0_75 = arith.constant 0 : index
    %c0_76 = arith.constant 0 : index
    %110 = vector.load %arg6[%c0_75, %c0_76] : memref<2x32xf32, #tpu.memory_space<vmem>>, vector<2x32xf32>
    %cst_77 = arith.constant dense<0.000000e+00> : vector<32xf32>
    %111 = vector.multi_reduction <add>, %109, %cst_77 [0] : vector<50x32xf32> to vector<32xf32>
    %112 = vector.shape_cast %111 : vector<32xf32> to vector<1x32xf32>
    %cst_78 = arith.constant 2.000000e-02 : f32
    %113 = vector.broadcast %cst_78 : f32 to vector<1x32xf32>
    %114 = arith.mulf %112, %113 : vector<1x32xf32>
    %115 = arith.mulf %109, %109 : vector<50x32xf32>
    %cst_79 = arith.constant dense<0.000000e+00> : vector<32xf32>
    %116 = vector.multi_reduction <add>, %115, %cst_79 [0] : vector<50x32xf32> to vector<32xf32>
    %117 = vector.shape_cast %116 : vector<32xf32> to vector<1x32xf32>
    %cst_80 = arith.constant 2.000000e-02 : f32
    %118 = vector.broadcast %cst_80 : f32 to vector<1x32xf32>
    %119 = arith.mulf %117, %118 : vector<1x32xf32>
    %120 = arith.mulf %114, %114 : vector<1x32xf32>
    %121 = arith.subf %119, %120 : vector<1x32xf32>
    %cst_81 = arith.constant 0.000000e+00 : f32
    %122 = vector.broadcast %cst_81 : f32 to vector<1x32xf32>
    %123 = arith.maximumf %121, %122 : vector<1x32xf32>
    %124 = vector.extract_strided_slice %110 {offsets = [0, 0], sizes = [1, 32], strides = [1, 1]} : vector<2x32xf32> to vector<1x32xf32>
    %cst_82 = arith.constant 9.99999974E-6 : f32
    %125 = vector.broadcast %cst_82 : f32 to vector<1x32xf32>
    %126 = arith.addf %123, %125 : vector<1x32xf32>
    %127 = math.rsqrt %126 : vector<1x32xf32>
    %128 = arith.mulf %124, %127 : vector<1x32xf32>
    %129 = vector.broadcast %114 : vector<1x32xf32> to vector<50x32xf32>
    %130 = arith.subf %109, %129 : vector<50x32xf32>
    %131 = vector.broadcast %128 : vector<1x32xf32> to vector<50x32xf32>
    %132 = arith.mulf %130, %131 : vector<50x32xf32>
    %133 = vector.extract_strided_slice %110 {offsets = [1, 0], sizes = [1, 32], strides = [1, 1]} : vector<2x32xf32> to vector<1x32xf32>
    %134 = vector.broadcast %133 : vector<1x32xf32> to vector<50x32xf32>
    %135 = arith.addf %132, %134 : vector<50x32xf32>
    %cst_83 = arith.constant 0.000000e+00 : f32
    %136 = vector.broadcast %cst_83 : f32 to vector<50x32xf32>
    %137 = arith.cmpf oge, %135, %136 : vector<50x32xf32>
    %cst_84 = arith.constant 2.000000e-01 : f32
    %138 = vector.broadcast %cst_84 : f32 to vector<50x32xf32>
    %139 = arith.mulf %138, %135 : vector<50x32xf32>
    %140 = arith.select %137, %135, %139 : vector<50x32xi1>, vector<50x32xf32>
    %141 = vector.extract_strided_slice %140 {offsets = [0, 0], sizes = [25, 32], strides = [1, 1]} : vector<50x32xf32> to vector<25x32xf32>
    %c0_85 = arith.constant 0 : index
    %c0_86 = arith.constant 0 : index
    %c0_87 = arith.constant 0 : index
    %142 = vector.load %arg7[%c0_85, %c0_86, %c0_87] : memref<1x25x32xf32, #tpu.memory_space<vmem>>, vector<1x25x32xf32>
    %143 = vector.shape_cast %142 : vector<1x25x32xf32> to vector<25x32xf32>
    %144 = arith.mulf %141, %143 : vector<25x32xf32>
    %cst_88 = arith.constant dense<0.000000e+00> : vector<32xf32>
    %145 = vector.multi_reduction <add>, %144, %cst_88 [0] : vector<25x32xf32> to vector<32xf32>
    %146 = vector.shape_cast %145 : vector<32xf32> to vector<1x32xf32>
    %cst_89 = arith.constant dense<0.000000e+00> : vector<1xf32>
    %147 = vector.multi_reduction <add>, %146, %cst_89 [1] : vector<1x32xf32> to vector<1xf32>
    %148 = vector.shape_cast %147 : vector<1xf32> to vector<1x1xf32>
    %c0_90 = arith.constant 0 : index
    %c0_91 = arith.constant 0 : index
    %149 = vector.load %arg8[%c0_90, %c0_91] : memref<1x1xf32, #tpu.memory_space<vmem>>, vector<1x1xf32>
    %150 = arith.addf %148, %149 : vector<1x1xf32>
    %151 = vector.shape_cast %150 : vector<1x1xf32> to vector<1x1xf32>
    %152 = vector.broadcast %151 : vector<1x1xf32> to vector<1x128xf32>
    %c0_92 = arith.constant 0 : index
    %c0_93 = arith.constant 0 : index
    %153 = vector.load %arg9[%c0_92, %c0_93] : memref<2x128xf32, #tpu.memory_space<vmem>>, vector<1x128xf32>
    tpu.vector_store %arg9[%c0_92, %c0_93], %152 {strides = array<i32>} : memref<2x128xf32, #tpu.memory_space<vmem>>, vector<1x128xf32>,
    %154 = vector.extract_strided_slice %140 {offsets = [25, 0], sizes = [25, 32], strides = [1, 1]} : vector<50x32xf32> to vector<25x32xf32>
    %c0_94 = arith.constant 0 : index
    %c0_95 = arith.constant 0 : index
    %c0_96 = arith.constant 0 : index
    %155 = vector.load %arg7[%c0_94, %c0_95, %c0_96] : memref<1x25x32xf32, #tpu.memory_space<vmem>>, vector<1x25x32xf32>
    %156 = vector.shape_cast %155 : vector<1x25x32xf32> to vector<25x32xf32>
    %157 = arith.mulf %154, %156 : vector<25x32xf32>
    %cst_97 = arith.constant dense<0.000000e+00> : vector<32xf32>
    %158 = vector.multi_reduction <add>, %157, %cst_97 [0] : vector<25x32xf32> to vector<32xf32>
    %159 = vector.shape_cast %158 : vector<32xf32> to vector<1x32xf32>
    %cst_98 = arith.constant dense<0.000000e+00> : vector<1xf32>
    %160 = vector.multi_reduction <add>, %159, %cst_98 [1] : vector<1x32xf32> to vector<1xf32>
    %161 = vector.shape_cast %160 : vector<1xf32> to vector<1x1xf32>
    %c0_99 = arith.constant 0 : index
    %c0_100 = arith.constant 0 : index
    %162 = vector.load %arg8[%c0_99, %c0_100] : memref<1x1xf32, #tpu.memory_space<vmem>>, vector<1x1xf32>
    %163 = arith.addf %161, %162 : vector<1x1xf32>
    %164 = vector.shape_cast %163 : vector<1x1xf32> to vector<1x1xf32>
    %165 = vector.broadcast %164 : vector<1x1xf32> to vector<1x128xf32>
    %c1 = arith.constant 1 : index
    %c0_101 = arith.constant 0 : index
    %166 = vector.load %arg9[%c1, %c0_101] : memref<2x128xf32, #tpu.memory_space<vmem>>, vector<1x128xf32>
    tpu.vector_store %arg9[%c1, %c0_101], %165 {strides = array<i32>} : memref<2x128xf32, #tpu.memory_space<vmem>>, vector<1x128xf32>,
    return
  }
  func.func @transform_0(%arg0: i32) -> (i32, i32) {
    %c0_i32 = arith.constant 0 : i32
    %c0_i32_0 = arith.constant 0 : i32
    %c0_i32_1 = arith.constant 0 : i32
    return %c0_i32, %c0_i32_0 : i32, i32
  }
  func.func @transform_1(%arg0: i32) -> (i32, i32) {
    %c0_i32 = arith.constant 0 : i32
    %c0_i32_0 = arith.constant 0 : i32
    %c0_i32_1 = arith.constant 0 : i32
    return %c0_i32, %c0_i32_0 : i32, i32
  }
  func.func @transform_2(%arg0: i32) -> (i32, i32) {
    %c0_i32 = arith.constant 0 : i32
    %c0_i32_0 = arith.constant 0 : i32
    %c0_i32_1 = arith.constant 0 : i32
    return %c0_i32, %c0_i32_0 : i32, i32
  }
  func.func @transform_3(%arg0: i32) -> (i32, i32) {
    %c0_i32 = arith.constant 0 : i32
    %c0_i32_0 = arith.constant 0 : i32
    %c0_i32_1 = arith.constant 0 : i32
    return %c0_i32, %c0_i32_0 : i32, i32
  }
  func.func @transform_4(%arg0: i32) -> (i32, i32) {
    %c0_i32 = arith.constant 0 : i32
    %c0_i32_0 = arith.constant 0 : i32
    %c0_i32_1 = arith.constant 0 : i32
    return %c0_i32, %c0_i32_0 : i32, i32
  }
  func.func @transform_5(%arg0: i32) -> (i32, i32) {
    %c0_i32 = arith.constant 0 : i32
    %c0_i32_0 = arith.constant 0 : i32
    %c0_i32_1 = arith.constant 0 : i32
    return %c0_i32, %c0_i32_0 : i32, i32
  }
  func.func @transform_6(%arg0: i32) -> (i32, i32, i32) {
    %c0_i32 = arith.constant 0 : i32
    %c0_i32_0 = arith.constant 0 : i32
    %c0_i32_1 = arith.constant 0 : i32
    %c0_i32_2 = arith.constant 0 : i32
    return %c0_i32, %c0_i32_0, %c0_i32_1 : i32, i32, i32
  }
  func.func @transform_7(%arg0: i32) -> (i32, i32) {
    %c0_i32 = arith.constant 0 : i32
    %c0_i32_0 = arith.constant 0 : i32
    %c0_i32_1 = arith.constant 0 : i32
    return %c0_i32, %c0_i32_0 : i32, i32
  }
  func.func @transform_8(%arg0: i32) -> (i32, i32) {
    %c0_i32 = arith.constant 0 : i32
    %c0_i32_0 = arith.constant 0 : i32
    %c0_i32_1 = arith.constant 0 : i32
    return %c0_i32, %c0_i32_0 : i32, i32
  }
}

</mosaic_0001>

<llo_original>
// kernel: spectral_norm_discriminator.1
$region0: #{spectral_norm_discriminator.1}
  #allocation0 [shape = 'u32[]', space=smem, size = 0x4, offset = 0x4, fixed_abs, tag = 'smem constant byte address 0x4 - core index']
  #allocation1 [shape = 'u32[144,128]{1,0:T(1,128)}', space=vmem, size = 0x12000, scoped, tag = 'internal scratch']
  #allocation2 [shape = 'f32[169,32]{1,0:T(8,128)}', space=vmem, size = 0x16000, scoped, tag = 'scratch operand']
  #allocation3 [shape = 'f32[50,256]{1,0:T(8,128)}', space=vmem, size = 0xe000, scoped, tag = 'scratch operand']
  #allocation4 [shape = 'f32[1,1]{1,0:T(1,128)S(1)}', space=vmem, size = 0x200, scoped, tag = 'scoped memory for spectral_norm_discriminator.1']
  %s0 = inlined_call_operand.vmem [shape: bf16[338,16], index: 0, kind: input, shape index: {}]
  %s1 = inlined_call_operand.vmem [shape: bf16[16,16], index: 1, kind: input, shape index: {}]
  %s2 = inlined_call_operand.vmem [shape: f32[2,16], index: 2, kind: input, shape index: {}]
  %s3 = inlined_call_operand.vmem [shape: bf16[400,169], index: 3, kind: input, shape index: {}]
  %s4 = inlined_call_operand.vmem [shape: bf16[256,32], index: 4, kind: input, shape index: {}]
  %s5 = inlined_call_operand.vmem [shape: f32[2,32], index: 5, kind: input, shape index: {}]
  %s6 = inlined_call_operand.vmem [shape: f32[1,25,32], index: 6, kind: input, shape index: {}]
  %s7 = inlined_call_operand.<no memory space> [shape: f32[1,1], index: 7, kind: input, shape index: {}]
  %s8 = inlined_call_operand.vmem [shape: f32[2,128], index: 8, kind: output, shape index: {}]
  %s9 = sld [smem:[#allocation0]]
  $region42: #{spectral_norm_discriminator.1} parent=0
    _
  %s11 = ssub.s32 1, %s9
  %s12 = scalar_select 0, %s11, %s9
  %v13 = vstv %s7
  %14 = vst [vmem:[#allocation4] sm:$0x1] %v13
  // Predicated region
  $region2: #{spectral_norm_discriminator.1} parent=0 // pred_check
    _
  $region3: #{spectral_norm_discriminator.1} parent=0 // pred_check_branch
    %16 = sbr.rel (0) target = $region5
  $region4: #{spectral_norm_discriminator.1} parent=0 // pred_region
    _
  $region5: #{spectral_norm_discriminator.1} parent=0 // pred_fallthru
    _
  // Predicated region
  $region6: #{spectral_norm_discriminator.1} parent=0 // pred_check
    _
  $region7: #{spectral_norm_discriminator.1} parent=0 // pred_check_branch
    %18 = sbr.rel (0) target = $region9
  $region8: #{spectral_norm_discriminator.1} parent=0 // pred_region
    _
  $region9: #{spectral_norm_discriminator.1} parent=0 // pred_fallthru
    _
  // Predicated region
  $region10: #{spectral_norm_discriminator.1} parent=0 // pred_check
    _
  $region11: #{spectral_norm_discriminator.1} parent=0 // pred_check_branch
    %20 = sbr.rel (0) target = $region13
  $region12: #{spectral_norm_discriminator.1} parent=0 // pred_region
    _
  $region13: #{spectral_norm_discriminator.1} parent=0 // pred_fallthru
    _
  // Predicated region
  $region14: #{spectral_norm_discriminator.1} parent=0 // pred_check
    _
  $region15: #{spectral_norm_discriminator.1} parent=0 // pred_check_branch
    %22 = sbr.rel (0) target = $region17
  $region16: #{spectral_norm_discriminator.1} parent=0 // pred_region
    _
  $region17: #{spectral_norm_discriminator.1} parent=0 // pred_fallthru
    _
  // Predicated region
  $region18: #{spectral_norm_discriminator.1} parent=0 // pred_check
    _
  $region19: #{spectral_norm_discriminator.1} parent=0 // pred_check_branch
    %24 = sbr.rel (0) target = $region21
  $region20: #{spectral_norm_discriminator.1} parent=0 // pred_region
    _
  $region21: #{spectral_norm_discriminator.1} parent=0 // pred_fallthru
    _
  // Predicated region
  $region22: #{spectral_norm_discriminator.1} parent=0 // pred_check
    _
  $region23: #{spectral_norm_discriminator.1} parent=0 // pred_check_branch
    %26 = sbr.rel (0) target = $region25
  $region24: #{spectral_norm_discriminator.1} parent=0 // pred_region
    _
  $region25: #{spectral_norm_discriminator.1} parent=0 // pred_fallthru
    _
  // Predicated region
  $region26: #{spectral_norm_discriminator.1} parent=0 // pred_check
    _
  $region27: #{spectral_norm_discriminator.1} parent=0 // pred_check_branch
    %28 = sbr.rel (0) target = $region29
  $region28: #{spectral_norm_discriminator.1} parent=0 // pred_region
    _
  $region29: #{spectral_norm_discriminator.1} parent=0 // pred_fallthru
    _
  // Predicated region
  $region30: #{spectral_norm_discriminator.1} parent=0 // pred_check
    _
  $region31: #{spectral_norm_discriminator.1} parent=0 // pred_check_branch
    %30 = sbr.rel (0) target = $region33
  $region32: #{spectral_norm_discriminator.1} parent=0 // pred_region
    _
  $region33: #{spectral_norm_discriminator.1} parent=0 // pred_fallthru
    _
  %v32 = vld [vmem:[%s0] sm:$0xf]
  %v33 = vld [vmem:[%s0 + $0x4] sm:$0xf]
  %v34 = vld [vmem:[%s0 + $0x8] sm:$0xf]
  %v35 = vld [vmem:[%s0 + $0xc] sm:$0xf]
  %v36 = vld [vmem:[%s0 + $0x10] sm:$0xf]
  %v37 = vld [vmem:[%s0 + $0x14] sm:$0xf]
  %v38 = vld [vmem:[%s0 + $0x18] sm:$0xf]
  %v39 = vld [vmem:[%s0 + $0x1c] sm:$0xf]
  %v40 = vld [vmem:[%s0 + $0x20] sm:$0xf]
  %v41 = vld [vmem:[%s0 + $0x24] sm:$0xf]
  %v42 = vld [vmem:[%s0 + $0x28] sm:$0xf]
  %v43 = vld [vmem:[%s0 + $0x2c] sm:$0xf]
  %v44 = vld [vmem:[%s0 + $0x30] sm:$0xf]
  %v45 = vld [vmem:[%s0 + $0x34] sm:$0xf]
  %v46 = vld [vmem:[%s0 + $0x38] sm:$0xf]
  %v47 = vld [vmem:[%s0 + $0x3c] sm:$0xf]
  %v48 = vld [vmem:[%s0 + $0x40] sm:$0xf]
  %v49 = vld [vmem:[%s0 + $0x44] sm:$0xf]
  %v50 = vld [vmem:[%s0 + $0x48] sm:$0xf]
  %v51 = vld [vmem:[%s0 + $0x4c] sm:$0xf]
  %v52 = vld [vmem:[%s0 + $0x50] sm:$0xf]
  %v53 = vld [vmem:[%s0 + $0x54] sm:$0xf]
  %v54 = vld [vmem:[%s0 + $0x58] sm:$0xf]
  %v55 = vld [vmem:[%s0 + $0x5c] sm:$0xf]
  %v56 = vld [vmem:[%s0 + $0x60] sm:$0xf]
  %v57 = vld [vmem:[%s0 + $0x64] sm:$0xf]
  %v58 = vld [vmem:[%s0 + $0x68] sm:$0xf]
  %v59 = vld [vmem:[%s0 + $0x6c] sm:$0xf]
  %v60 = vld [vmem:[%s0 + $0x70] sm:$0xf]
  %v61 = vld [vmem:[%s0 + $0x74] sm:$0xf]
  %v62 = vld [vmem:[%s0 + $0x78] sm:$0xf]
  %v63 = vld [vmem:[%s0 + $0x7c] sm:$0xf]
  %v64 = vld [vmem:[%s0 + $0x80] sm:$0xf]
  %v65 = vld [vmem:[%s0 + $0x84] sm:$0xf]
  %v66 = vld [vmem:[%s0 + $0x88] sm:$0xf]
  %v67 = vld [vmem:[%s0 + $0x8c] sm:$0xf]
  %v68 = vld [vmem:[%s0 + $0x90] sm:$0xf]
  %v69 = vld [vmem:[%s0 + $0x94] sm:$0xf]
  %v70 = vld [vmem:[%s0 + $0x98] sm:$0xf]
  %v71 = vld [vmem:[%s0 + $0x9c] sm:$0xf]
  %v72 = vld [vmem:[%s0 + $0xa0] sm:$0xf]
  %v73 = vld [vmem:[%s0 + $0xa4] sm:$0xf]
  %v74 = vld [vmem:[%s0 + $0xa8] sm:$0x1]
  %v75 = vld [vmem:[%s1] sm:$0xf]
  %v76 = vld [vmem:[%s1 + $0x4] sm:$0xf]
  %v120 = vunpack.c.l.b16 %v32
  %v121 = vunpack.c.l.b16 %v33
  %v122 = vunpack.c.l.b16 %v34
  %v123 = vunpack.c.l.b16 %v35
  %v124 = vunpack.c.l.b16 %v36
  %v125 = vunpack.c.l.b16 %v37
  %v126 = vunpack.c.l.b16 %v38
  %v127 = vunpack.c.l.b16 %v39
  %v128 = vunpack.c.l.b16 %v40
  %v129 = vunpack.c.l.b16 %v41
  %v130 = vunpack.c.l.b16 %v42
  %v131 = vunpack.c.l.b16 %v43
  %v132 = vunpack.c.l.b16 %v44
  %v133 = vunpack.c.l.b16 %v45
  %v134 = vunpack.c.l.b16 %v46
  %v135 = vunpack.c.l.b16 %v47
  %v136 = vunpack.c.l.b16 %v48
  %v137 = vunpack.c.l.b16 %v49
  %v138 = vunpack.c.l.b16 %v50
  %v139 = vunpack.c.l.b16 %v51
  %v140 = vunpack.c.l.b16 %v52
  %v141 = vunpack.c.l.b16 %v53
  %v142 = vunpack.c.l.b16 %v54
  %v143 = vunpack.c.l.b16 %v55
  %v144 = vunpack.c.l.b16 %v56
  %v145 = vunpack.c.l.b16 %v57
  %v146 = vunpack.c.l.b16 %v58
  %v147 = vunpack.c.l.b16 %v59
  %v148 = vunpack.c.l.b16 %v60
  %v149 = vunpack.c.l.b16 %v61
  %v150 = vunpack.c.l.b16 %v62
  %v151 = vunpack.c.l.b16 %v63
  %v152 = vunpack.c.l.b16 %v64
  %v153 = vunpack.c.l.b16 %v65
  %v154 = vunpack.c.l.b16 %v66
  %v155 = vunpack.c.l.b16 %v67
  %v156 = vunpack.c.l.b16 %v68
  %v157 = vunpack.c.l.b16 %v69
  %v158 = vunpack.c.l.b16 %v70
  %v159 = vunpack.c.l.b16 %v71
  %v160 = vunpack.c.l.b16 %v72
  %v161 = vunpack.c.l.b16 %v73
  %v162 = vunpack.c.l.b16 %v74
  %v163 = vpack.c.b16 %v121, %v120
  %v164 = vpack.c.b16 %v123, %v122
  %v165 = vpack.c.b16 %v125, %v124
  %v166 = vpack.c.b16 %v127, %v126
  %v167 = vpack.c.b16 %v129, %v128
  %v168 = vpack.c.b16 %v131, %v130
  %v169 = vpack.c.b16 %v133, %v132
  %v170 = vpack.c.b16 %v135, %v134
  %v171 = vpack.c.b16 %v137, %v136
  %v172 = vpack.c.b16 %v139, %v138
  %v173 = vpack.c.b16 %v141, %v140
  %v174 = vpack.c.b16 %v143, %v142
  %v175 = vpack.c.b16 %v145, %v144
  %v176 = vpack.c.b16 %v147, %v146
  %v177 = vpack.c.b16 %v149, %v148
  %v178 = vpack.c.b16 %v151, %v150
  %v179 = vpack.c.b16 %v153, %v152
  %v180 = vpack.c.b16 %v155, %v154
  %v181 = vpack.c.b16 %v157, %v156
  %v182 = vpack.c.b16 %v159, %v158
  %v183 = vpack.c.b16 %v161, %v160
  %v184 = vpack.c.b16 %v162, %v162
  %v187 = vunpack.c.l.b16 %v75
  %v188 = vunpack.c.l.b16 %v76
  %v189 = vpack.c.b16 %v188, %v187
  %vm191 = vcmask 130048
  %v193 = vsel %vm191, %v163, 0
  %v196 = vsel %vm191, %v164, 0
  %v199 = vsel %vm191, %v165, 0
  %v202 = vsel %vm191, %v166, 0
  %v205 = vsel %vm191, %v167, 0
  %v208 = vsel %vm191, %v168, 0
  %v211 = vsel %vm191, %v169, 0
  %v214 = vsel %vm191, %v170, 0
  %v217 = vsel %vm191, %v171, 0
  %v220 = vsel %vm191, %v172, 0
  %v223 = vsel %vm191, %v173, 0
  %v226 = vsel %vm191, %v174, 0
  %v229 = vsel %vm191, %v175, 0
  %v232 = vsel %vm191, %v176, 0
  %v235 = vsel %vm191, %v177, 0
  %v238 = vsel %vm191, %v178, 0
  %v241 = vsel %vm191, %v179, 0
  %v244 = vsel %vm191, %v180, 0
  %v247 = vsel %vm191, %v181, 0
  %v250 = vsel %vm191, %v182, 0
  %v253 = vsel %vm191, %v183, 0
  %v256 = vsel %vm191, %v184, 0
  %258 = vmatprep.subr.bf16.mxu0 0
  %259 = vmatpush1.bf16.msra.mxu0 %v189
  %260 = vmatprep.subr.bf16.mxu0 0
  %261 = vmatpush1.bf16.msra.mxu0 0
  %262 = vmatprep.subr.bf16.mxu0 0
  %263 = vmatpush1.bf16.msra.mxu0 0
  %264 = vmatprep.subr.bf16.mxu0 0
  %265 = vmatpush1.bf16.msra.mxu0 0
  %266 = vmatprep.subr.bf16.mxu0 0
  %267 = vmatpush1.bf16.msra.mxu0 0
  %268 = vmatprep.subr.bf16.mxu0 0
  %269 = vmatpush1.bf16.msra.mxu0 0
  %270 = vmatprep.subr.bf16.mxu0 0
  %271 = vmatpush1.bf16.msra.mxu0 0
  %272 = vmatprep.subr.bf16.mxu0 0
  %273 = vmatpush1.bf16.msra.mxu0 0
  %274 = vmatprep.subr.bf16.mxu0 0
  %275 = vmatpush1.bf16.msra.mxu0 0
  %276 = vmatprep.subr.bf16.mxu0 0
  %277 = vmatpush1.bf16.msra.mxu0 0
  %278 = vmatprep.subr.bf16.mxu0 0
  %279 = vmatpush1.bf16.msra.mxu0 0
  %280 = vmatprep.subr.bf16.mxu0 0
  %281 = vmatpush1.bf16.msra.mxu0 0
  %282 = vmatprep.subr.bf16.mxu0 0
  %283 = vmatpush1.bf16.msra.mxu0 0
  %284 = vmatprep.subr.bf16.mxu0 0
  %285 = vmatpush1.bf16.msra.mxu0 0
  %286 = vmatprep.subr.bf16.mxu0 0
  %287 = vmatpush1.bf16.msra.mxu0 0
  %288 = vmatprep.subr.bf16.mxu0 0
  %289 = vmatpush1.bf16.msra.mxu0 0
  %290 = vmatprep.mubr.bf16.mxu0 0
  %291 = vmatmul.mubr.bf16.gmra.mrb[0].mxu0 %v193
  %v292 = vpop.f32.mrb[0].mxu0
  %v293 = vadd.f32 0.0, %v292
  %v294 = vpop.f32.mrb[0].mxu0
  %v295 = vpop.f32.mrb[0].mxu0
  %v296 = vadd.f32 0.0, %v295
  %v297 = vpop.f32.mrb[0].mxu0
  %298 = vmatprep.mubr.bf16.mxu0 0
  %299 = vmatmul.mubr.bf16.gmra.mrb[0].mxu0 %v196
  %v300 = vpop.f32.mrb[0].mxu0
  %v301 = vadd.f32 0.0, %v300
  %v302 = vpop.f32.mrb[0].mxu0
  %v303 = vpop.f32.mrb[0].mxu0
  %v304 = vadd.f32 0.0, %v303
  %v305 = vpop.f32.mrb[0].mxu0
  %306 = vmatprep.mubr.bf16.mxu0 0
  %307 = vmatmul.mubr.bf16.gmra.mrb[0].mxu0 %v199
  %v308 = vpop.f32.mrb[0].mxu0
  %v309 = vadd.f32 0.0, %v308
  %v310 = vpop.f32.mrb[0].mxu0
  %v311 = vpop.f32.mrb[0].mxu0
  %v312 = vadd.f32 0.0, %v311
  %v313 = vpop.f32.mrb[0].mxu0
  %314 = vmatprep.mubr.bf16.mxu0 0
  %315 = vmatmul.mubr.bf16.gmra.mrb[0].mxu0 %v202
  %v316 = vpop.f32.mrb[0].mxu0
  %v317 = vadd.f32 0.0, %v316
  %v318 = vpop.f32.mrb[0].mxu0
  %v319 = vpop.f32.mrb[0].mxu0
  %v320 = vadd.f32 0.0, %v319
  %v321 = vpop.f32.mrb[0].mxu0
  %322 = vmatprep.mubr.bf16.mxu0 0
  %323 = vmatmul.mubr.bf16.gmra.mrb[0].mxu0 %v205
  %v324 = vpop.f32.mrb[0].mxu0
  %v325 = vadd.f32 0.0, %v324
  %v326 = vpop.f32.mrb[0].mxu0
  %v327 = vpop.f32.mrb[0].mxu0
  %v328 = vadd.f32 0.0, %v327
  %v329 = vpop.f32.mrb[0].mxu0
  %330 = vmatprep.mubr.bf16.mxu0 0
  %331 = vmatmul.mubr.bf16.gmra.mrb[0].mxu0 %v208
  %v332 = vpop.f32.mrb[0].mxu0
  %v333 = vadd.f32 0.0, %v332
  %v334 = vpop.f32.mrb[0].mxu0
  %v335 = vpop.f32.mrb[0].mxu0
  %v336 = vadd.f32 0.0, %v335
  %v337 = vpop.f32.mrb[0].mxu0
  %338 = vmatprep.mubr.bf16.mxu0 0
  %339 = vmatmul.mubr.bf16.gmra.mrb[0].mxu0 %v211
  %v340 = vpop.f32.mrb[0].mxu0
  %v341 = vadd.f32 0.0, %v340
  %v342 = vpop.f32.mrb[0].mxu0
  %v343 = vpop.f32.mrb[0].mxu0
  %v344 = vadd.f32 0.0, %v343
  %v345 = vpop.f32.mrb[0].mxu0
  %346 = vmatprep.mubr.bf16.mxu0 0
  %347 = vmatmul.mubr.bf16.gmra.mrb[0].mxu0 %v214
  %v348 = vpop.f32.mrb[0].mxu0
  %v349 = vadd.f32 0.0, %v348
  %v350 = vpop.f32.mrb[0].mxu0
  %v351 = vpop.f32.mrb[0].mxu0
  %v352 = vadd.f32 0.0, %v351
  %v353 = vpop.f32.mrb[0].mxu0
  %354 = vmatprep.mubr.bf16.mxu0 0
  %355 = vmatmul.mubr.bf16.gmra.mrb[0].mxu0 %v217
  %v356 = vpop.f32.mrb[0].mxu0
  %v357 = vadd.f32 0.0, %v356
  %v358 = vpop.f32.mrb[0].mxu0
  %v359 = vpop.f32.mrb[0].mxu0
  %v360 = vadd.f32 0.0, %v359
  %v361 = vpop.f32.mrb[0].mxu0
  %362 = vmatprep.mubr.bf16.mxu0 0
  %363 = vmatmul.mubr.bf16.gmra.mrb[0].mxu0 %v220
  %v364 = vpop.f32.mrb[0].mxu0
  %v365 = vadd.f32 0.0, %v364
  %v366 = vpop.f32.mrb[0].mxu0
  %v367 = vpop.f32.mrb[0].mxu0
  %v368 = vadd.f32 0.0, %v367
  %v369 = vpop.f32.mrb[0].mxu0
  %370 = vmatprep.mubr.bf16.mxu0 0
  %371 = vmatmul.mubr.bf16.gmra.mrb[0].mxu0 %v223
  %v372 = vpop.f32.mrb[0].mxu0
  %v373 = vadd.f32 0.0, %v372
  %v374 = vpop.f32.mrb[0].mxu0
  %v375 = vpop.f32.mrb[0].mxu0
  %v376 = vadd.f32 0.0, %v375
  %v377 = vpop.f32.mrb[0].mxu0
  %378 = vmatprep.mubr.bf16.mxu0 0
  %379 = vmatmul.mubr.bf16.gmra.mrb[0].mxu0 %v226
  %v380 = vpop.f32.mrb[0].mxu0
  %v381 = vadd.f32 0.0, %v380
  %v382 = vpop.f32.mrb[0].mxu0
  %v383 = vpop.f32.mrb[0].mxu0
  %v384 = vadd.f32 0.0, %v383
  %v385 = vpop.f32.mrb[0].mxu0
  %386 = vmatprep.mubr.bf16.mxu0 0
  %387 = vmatmul.mubr.bf16.gmra.mrb[0].mxu0 %v229
  %v388 = vpop.f32.mrb[0].mxu0
  %v389 = vadd.f32 0.0, %v388
  %v390 = vpop.f32.mrb[0].mxu0
  %v391 = vpop.f32.mrb[0].mxu0
  %v392 = vadd.f32 0.0, %v391
  %v393 = vpop.f32.mrb[0].mxu0
  %394 = vmatprep.mubr.bf16.mxu0 0
  %395 = vmatmul.mubr.bf16.gmra.mrb[0].mxu0 %v232
  %v396 = vpop.f32.mrb[0].mxu0
  %v397 = vadd.f32 0.0, %v396
  %v398 = vpop.f32.mrb[0].mxu0
  %v399 = vpop.f32.mrb[0].mxu0
  %v400 = vadd.f32 0.0, %v399
  %v401 = vpop.f32.mrb[0].mxu0
  %402 = vmatprep.mubr.bf16.mxu0 0
  %403 = vmatmul.mubr.bf16.gmra.mrb[0].mxu0 %v235
  %v404 = vpop.f32.mrb[0].mxu0
  %v405 = vadd.f32 0.0, %v404
  %v406 = vpop.f32.mrb[0].mxu0
  %v407 = vpop.f32.mrb[0].mxu0
  %v408 = vadd.f32 0.0, %v407
  %v409 = vpop.f32.mrb[0].mxu0
  %410 = vmatprep.mubr.bf16.mxu0 0
  %411 = vmatmul.mubr.bf16.gmra.mrb[0].mxu0 %v238
  %v412 = vpop.f32.mrb[0].mxu0
  %v413 = vadd.f32 0.0, %v412
  %v414 = vpop.f32.mrb[0].mxu0
  %v415 = vpop.f32.mrb[0].mxu0
  %v416 = vadd.f32 0.0, %v415
  %v417 = vpop.f32.mrb[0].mxu0
  %418 = vmatprep.mubr.bf16.mxu0 0
  %419 = vmatmul.mubr.bf16.gmra.mrb[0].mxu0 %v241
  %v420 = vpop.f32.mrb[0].mxu0
  %v421 = vadd.f32 0.0, %v420
  %v422 = vpop.f32.mrb[0].mxu0
  %v423 = vpop.f32.mrb[0].mxu0
  %v424 = vadd.f32 0.0, %v423
  %v425 = vpop.f32.mrb[0].mxu0
  %426 = vmatprep.mubr.bf16.mxu0 0
  %427 = vmatmul.mubr.bf16.gmra.mrb[0].mxu0 %v244
  %v428 = vpop.f32.mrb[0].mxu0
  %v429 = vadd.f32 0.0, %v428
  %v430 = vpop.f32.mrb[0].mxu0
  %v431 = vpop.f32.mrb[0].mxu0
  %v432 = vadd.f32 0.0, %v431
  %v433 = vpop.f32.mrb[0].mxu0
  %434 = vmatprep.mubr.bf16.mxu0 0
  %435 = vmatmul.mubr.bf16.gmra.mrb[0].mxu0 %v247
  %v436 = vpop.f32.mrb[0].mxu0
  %v437 = vadd.f32 0.0, %v436
  %v438 = vpop.f32.mrb[0].mxu0
  %v439 = vpop.f32.mrb[0].mxu0
  %v440 = vadd.f32 0.0, %v439
  %v441 = vpop.f32.mrb[0].mxu0
  %442 = vmatprep.mubr.bf16.mxu0 0
  %443 = vmatmul.mubr.bf16.gmra.mrb[0].mxu0 %v250
  %v444 = vpop.f32.mrb[0].mxu0
  %v445 = vadd.f32 0.0, %v444
  %v446 = vpop.f32.mrb[0].mxu0
  %v447 = vpop.f32.mrb[0].mxu0
  %v448 = vadd.f32 0.0, %v447
  %v449 = vpop.f32.mrb[0].mxu0
  %450 = vmatprep.mubr.bf16.mxu0 0
  %451 = vmatmul.mubr.bf16.gmra.mrb[0].mxu0 %v253
  %v452 = vpop.f32.mrb[0].mxu0
  %v453 = vadd.f32 0.0, %v452
  %v454 = vpop.f32.mrb[0].mxu0
  %v455 = vpop.f32.mrb[0].mxu0
  %v456 = vadd.f32 0.0, %v455
  %v457 = vpop.f32.mrb[0].mxu0
  %458 = vmatprep.mubr.bf16.mxu0 0
  %459 = vmatmul.mubr.bf16.gmra.mrb[0].mxu0 %v256
  %v460 = vpop.f32.mrb[0].mxu0
  %v461 = vadd.f32 0.0, %v460
  %v462 = vpop.f32.mrb[0].mxu0
  %v463 = vpop.f32.mrb[0].mxu0
  %v464 = vpop.f32.mrb[0].mxu0
  %465 = vdwg.mxu0
  %v466 = vld [vmem:[%s2] sm:$0x3]
  %v467 = vsel %vm191, %v293, 0.0
  %v468 = vsel %vm191, %v296, 0.0
  %v469 = vadd.f32 %v467, %v468
  %v470 = vsel %vm191, %v301, 0.0
  %v471 = vadd.f32 %v469, %v470
  %v472 = vsel %vm191, %v304, 0.0
  %v473 = vadd.f32 %v471, %v472
  %v474 = vsel %vm191, %v309, 0.0
  %v475 = vadd.f32 %v473, %v474
  %v476 = vsel %vm191, %v312, 0.0
  %v477 = vadd.f32 %v475, %v476
  %v478 = vsel %vm191, %v317, 0.0
  %v479 = vadd.f32 %v477, %v478
  %v480 = vsel %vm191, %v320, 0.0
  %v481 = vadd.f32 %v479, %v480
  %v482 = vsel %vm191, %v325, 0.0
  %v483 = vadd.f32 %v481, %v482
  %v484 = vsel %vm191, %v328, 0.0
  %v485 = vadd.f32 %v483, %v484
  %v486 = vsel %vm191, %v333, 0.0
  %v487 = vadd.f32 %v485, %v486
  %v488 = vsel %vm191, %v336, 0.0
  %v489 = vadd.f32 %v487, %v488
  %v490 = vsel %vm191, %v341, 0.0
  %v491 = vadd.f32 %v489, %v490
  %v492 = vsel %vm191, %v344, 0.0
  %v493 = vadd.f32 %v491, %v492
  %v494 = vsel %vm191, %v349, 0.0
  %v495 = vadd.f32 %v493, %v494
  %v496 = vsel %vm191, %v352, 0.0
  %v497 = vadd.f32 %v495, %v496
  %v498 = vsel %vm191, %v357, 0.0
  %v499 = vadd.f32 %v497, %v498
  %v500 = vsel %vm191, %v360, 0.0
  %v501 = vadd.f32 %v499, %v500
  %v502 = vsel %vm191, %v365, 0.0
  %v503 = vadd.f32 %v501, %v502
  %v504 = vsel %vm191, %v368, 0.0
  %v505 = vadd.f32 %v503, %v504
  %v506 = vsel %vm191, %v373, 0.0
  %v507 = vadd.f32 %v505, %v506
  %v508 = vsel %vm191, %v376, 0.0
  %v509 = vadd.f32 %v507, %v508
  %v510 = vsel %vm191, %v381, 0.0
  %v511 = vadd.f32 %v509, %v510
  %v512 = vsel %vm191, %v384, 0.0
  %v513 = vadd.f32 %v511, %v512
  %v514 = vsel %vm191, %v389, 0.0
  %v515 = vadd.f32 %v513, %v514
  %v516 = vsel %vm191, %v392, 0.0
  %v517 = vadd.f32 %v515, %v516
  %v518 = vsel %vm191, %v397, 0.0
  %v519 = vadd.f32 %v517, %v518
  %v520 = vsel %vm191, %v400, 0.0
  %v521 = vadd.f32 %v519, %v520
  %v522 = vsel %vm191, %v405, 0.0
  %v523 = vadd.f32 %v521, %v522
  %v524 = vsel %vm191, %v408, 0.0
  %v525 = vadd.f32 %v523, %v524
  %v526 = vsel %vm191, %v413, 0.0
  %v527 = vadd.f32 %v525, %v526
  %v528 = vsel %vm191, %v416, 0.0
  %v529 = vadd.f32 %v527, %v528
  %v530 = vsel %vm191, %v421, 0.0
  %v531 = vadd.f32 %v529, %v530
  %v532 = vsel %vm191, %v424, 0.0
  %v533 = vadd.f32 %v531, %v532
  %v534 = vsel %vm191, %v429, 0.0
  %v535 = vadd.f32 %v533, %v534
  %v536 = vsel %vm191, %v432, 0.0
  %v537 = vadd.f32 %v535, %v536
  %v538 = vsel %vm191, %v437, 0.0
  %v539 = vadd.f32 %v537, %v538
  %v540 = vsel %vm191, %v440, 0.0
  %v541 = vadd.f32 %v539, %v540
  %v542 = vsel %vm191, %v445, 0.0
  %v543 = vadd.f32 %v541, %v542
  %v544 = vsel %vm191, %v448, 0.0
  %v545 = vadd.f32 %v543, %v544
  %v546 = vsel %vm191, %v453, 0.0
  %v547 = vadd.f32 %v545, %v546
  %v548 = vsel %vm191, %v456, 0.0
  %v549 = vadd.f32 %v547, %v548
  %vm550 = vcmask 123904
  %v551 = vsel %vm550, %v461, 0.0
  %v552 = vadd.f32 %v549, %v551
  %v553 = vrot.slane %v552, 4
  %v554 = vadd.f32 %v552, %v553
  %v555 = vrot.slane %v554, 2
  %v556 = vadd.f32 %v554, %v555
  %v557 = vrot.slane %v556, 1
  %v558 = vadd.f32 %v556, %v557
  %v559 = vmul.f32 %v558, 0.00295858
  %v560 = vmul.f32 %v293, %v293
  %v561 = vmul.f32 %v296, %v296
  %v562 = vmul.f32 %v301, %v301
  %v563 = vmul.f32 %v304, %v304
  %v564 = vmul.f32 %v309, %v309
  %v565 = vmul.f32 %v312, %v312
  %v566 = vmul.f32 %v317, %v317
  %v567 = vmul.f32 %v320, %v320
  %v568 = vmul.f32 %v325, %v325
  %v569 = vmul.f32 %v328, %v328
  %v570 = vmul.f32 %v333, %v333
  %v571 = vmul.f32 %v336, %v336
  %v572 = vmul.f32 %v341, %v341
  %v573 = vmul.f32 %v344, %v344
  %v574 = vmul.f32 %v349, %v349
  %v575 = vmul.f32 %v352, %v352
  %v576 = vmul.f32 %v357, %v357
  %v577 = vmul.f32 %v360, %v360
  %v578 = vmul.f32 %v365, %v365
  %v579 = vmul.f32 %v368, %v368
  %v580 = vmul.f32 %v373, %v373
  %v581 = vmul.f32 %v376, %v376
  %v582 = vmul.f32 %v381, %v381
  %v583 = vmul.f32 %v384, %v384
  %v584 = vmul.f32 %v389, %v389
  %v585 = vmul.f32 %v392, %v392
  %v586 = vmul.f32 %v397, %v397
  %v587 = vmul.f32 %v400, %v400
  %v588 = vmul.f32 %v405, %v405
  %v589 = vmul.f32 %v408, %v408
  %v590 = vmul.f32 %v413, %v413
  %v591 = vmul.f32 %v416, %v416
  %v592 = vmul.f32 %v421, %v421
  %v593 = vmul.f32 %v424, %v424
  %v594 = vmul.f32 %v429, %v429
  %v595 = vmul.f32 %v432, %v432
  %v596 = vmul.f32 %v437, %v437
  %v597 = vmul.f32 %v440, %v440
  %v598 = vmul.f32 %v445, %v445
  %v599 = vmul.f32 %v448, %v448
  %v600 = vmul.f32 %v453, %v453
  %v601 = vmul.f32 %v456, %v456
  %v602 = vmul.f32 %v461, %v461
  %v603 = vsel %vm191, %v560, 0.0
  %v604 = vsel %vm191, %v561, 0.0
  %v605 = vadd.f32 %v603, %v604
  %v606 = vsel %vm191, %v562, 0.0
  %v607 = vadd.f32 %v605, %v606
  %v608 = vsel %vm191, %v563, 0.0
  %v609 = vadd.f32 %v607, %v608
  %v610 = vsel %vm191, %v564, 0.0
  %v611 = vadd.f32 %v609, %v610
  %v612 = vsel %vm191, %v565, 0.0
  %v613 = vadd.f32 %v611, %v612
  %v614 = vsel %vm191, %v566, 0.0
  %v615 = vadd.f32 %v613, %v614
  %v616 = vsel %vm191, %v567, 0.0
  %v617 = vadd.f32 %v615, %v616
  %v618 = vsel %vm191, %v568, 0.0
  %v619 = vadd.f32 %v617, %v618
  %v620 = vsel %vm191, %v569, 0.0
  %v621 = vadd.f32 %v619, %v620
  %v622 = vsel %vm191, %v570, 0.0
  %v623 = vadd.f32 %v621, %v622
  %v624 = vsel %vm191, %v571, 0.0
  %v625 = vadd.f32 %v623, %v624
  %v626 = vsel %vm191, %v572, 0.0
  %v627 = vadd.f32 %v625, %v626
  %v628 = vsel %vm191, %v573, 0.0
  %v629 = vadd.f32 %v627, %v628
  %v630 = vsel %vm191, %v574, 0.0
  %v631 = vadd.f32 %v629, %v630
  %v632 = vsel %vm191, %v575, 0.0
  %v633 = vadd.f32 %v631, %v632
  %v634 = vsel %vm191, %v576, 0.0
  %v635 = vadd.f32 %v633, %v634
  %v636 = vsel %vm191, %v577, 0.0
  %v637 = vadd.f32 %v635, %v636
  %v638 = vsel %vm191, %v578, 0.0
  %v639 = vadd.f32 %v637, %v638
  %v640 = vsel %vm191, %v579, 0.0
  %v641 = vadd.f32 %v639, %v640
  %v642 = vsel %vm191, %v580, 0.0
  %v643 = vadd.f32 %v641, %v642
  %v644 = vsel %vm191, %v581, 0.0
  %v645 = vadd.f32 %v643, %v644
  %v646 = vsel %vm191, %v582, 0.0
  %v647 = vadd.f32 %v645, %v646
  %v648 = vsel %vm191, %v583, 0.0
  %v649 = vadd.f32 %v647, %v648
  %v650 = vsel %vm191, %v584, 0.0
  %v651 = vadd.f32 %v649, %v650
  %v652 = vsel %vm191, %v585, 0.0
  %v653 = vadd.f32 %v651, %v652
  %v654 = vsel %vm191, %v586, 0.0
  %v655 = vadd.f32 %v653, %v654
  %v656 = vsel %vm191, %v587, 0.0
  %v657 = vadd.f32 %v655, %v656
  %v658 = vsel %vm191, %v588, 0.0
  %v659 = vadd.f32 %v657, %v658
  %v660 = vsel %vm191, %v589, 0.0
  %v661 = vadd.f32 %v659, %v660
  %v662 = vsel %vm191, %v590, 0.0
  %v663 = vadd.f32 %v661, %v662
  %v664 = vsel %vm191, %v591, 0.0
  %v665 = vadd.f32 %v663, %v664
  %v666 = vsel %vm191, %v592, 0.0
  %v667 = vadd.f32 %v665, %v666
  %v668 = vsel %vm191, %v593, 0.0
  %v669 = vadd.f32 %v667, %v668
  %v670 = vsel %vm191, %v594, 0.0
  %v671 = vadd.f32 %v669, %v670
  %v672 = vsel %vm191, %v595, 0.0
  %v673 = vadd.f32 %v671, %v672
  %v674 = vsel %vm191, %v596, 0.0
  %v675 = vadd.f32 %v673, %v674
  %v676 = vsel %vm191, %v597, 0.0
  %v677 = vadd.f32 %v675, %v676
  %v678 = vsel %vm191, %v598, 0.0
  %v679 = vadd.f32 %v677, %v678
  %v680 = vsel %vm191, %v599, 0.0
  %v681 = vadd.f32 %v679, %v680
  %v682 = vsel %vm191, %v600, 0.0
  %v683 = vadd.f32 %v681, %v682
  %v684 = vsel %vm191, %v601, 0.0
  %v685 = vadd.f32 %v683, %v684
  %v686 = vsel %vm550, %v602, 0.0
  %v687 = vadd.f32 %v685, %v686
  %v688 = vrot.slane %v687, 4
  %v689 = vadd.f32 %v687, %v688
  %v690 = vrot.slane %v689, 2
  %v691 = vadd.f32 %v689, %v690
  %v692 = vrot.slane %v691, 1
  %v693 = vadd.f32 %v691, %v692
  %v694 = vmul.f32 %v693, 0.00295858
  %v695 = vmul.f32 %v559, %v559
  %v696 = vsub.f32 %v694, %v695
  %v697 = vmax.f32 %v696, 0.0
  %v698 = vadd.f32 %v697, 1e-05
  %v699 = vrsqrt.pop %v698
  %v700 = vmul.f32 %v466, %v699
  %v701 = vsub.f32 %v293, %v559
  %v702 = vsub.f32 %v296, %v559
  %v703 = vsub.f32 %v301, %v559
  %v704 = vsub.f32 %v304, %v559
  %v705 = vsub.f32 %v309, %v559
  %v706 = vsub.f32 %v312, %v559
  %v707 = vsub.f32 %v317, %v559
  %v708 = vsub.f32 %v320, %v559
  %v709 = vsub.f32 %v325, %v559
  %v710 = vsub.f32 %v328, %v559
  %v711 = vsub.f32 %v333, %v559
  %v712 = vsub.f32 %v336, %v559
  %v713 = vsub.f32 %v341, %v559
  %v714 = vsub.f32 %v344, %v559
  %v715 = vsub.f32 %v349, %v559
  %v716 = vsub.f32 %v352, %v559
  %v717 = vsub.f32 %v357, %v559
  %v718 = vsub.f32 %v360, %v559
  %v719 = vsub.f32 %v365, %v559
  %v720 = vsub.f32 %v368, %v559
  %v721 = vsub.f32 %v373, %v559
  %v722 = vsub.f32 %v376, %v559
  %v723 = vsub.f32 %v381, %v559
  %v724 = vsub.f32 %v384, %v559
  %v725 = vsub.f32 %v389, %v559
  %v726 = vsub.f32 %v392, %v559
  %v727 = vsub.f32 %v397, %v559
  %v728 = vsub.f32 %v400, %v559
  %v729 = vsub.f32 %v405, %v559
  %v730 = vsub.f32 %v408, %v559
  %v731 = vsub.f32 %v413, %v559
  %v732 = vsub.f32 %v416, %v559
  %v733 = vsub.f32 %v421, %v559
  %v734 = vsub.f32 %v424, %v559
  %v735 = vsub.f32 %v429, %v559
  %v736 = vsub.f32 %v432, %v559
  %v737 = vsub.f32 %v437, %v559
  %v738 = vsub.f32 %v440, %v559
  %v739 = vsub.f32 %v445, %v559
  %v740 = vsub.f32 %v448, %v559
  %v741 = vsub.f32 %v453, %v559
  %v742 = vsub.f32 %v456, %v559
  %v743 = vsub.f32 %v461, %v559
  %v744 = vlaneseq
  %v745 = vshrl.u32 %v744, 7
  %v746 = vsub.s32 0, %v745
  %v747 = vrot.slane %v700, %v746
  %v748 = vmul.f32 %v701, %v747
  %v749 = vmul.f32 %v702, %v747
  %v750 = vmul.f32 %v703, %v747
  %v751 = vmul.f32 %v704, %v747
  %v752 = vmul.f32 %v705, %v747
  %v753 = vmul.f32 %v706, %v747
  %v754 = vmul.f32 %v707, %v747
  %v755 = vmul.f32 %v708, %v747
  %v756 = vmul.f32 %v709, %v747
  %v757 = vmul.f32 %v710, %v747
  %v758 = vmul.f32 %v711, %v747
  %v759 = vmul.f32 %v712, %v747
  %v760 = vmul.f32 %v713, %v747
  %v761 = vmul.f32 %v714, %v747
  %v762 = vmul.f32 %v715, %v747
  %v763 = vmul.f32 %v716, %v747
  %v764 = vmul.f32 %v717, %v747
  %v765 = vmul.f32 %v718, %v747
  %v766 = vmul.f32 %v719, %v747
  %v767 = vmul.f32 %v720, %v747
  %v768 = vmul.f32 %v721, %v747
  %v769 = vmul.f32 %v722, %v747
  %v770 = vmul.f32 %v723, %v747
  %v771 = vmul.f32 %v724, %v747
  %v772 = vmul.f32 %v725, %v747
  %v773 = vmul.f32 %v726, %v747
  %v774 = vmul.f32 %v727, %v747
  %v775 = vmul.f32 %v728, %v747
  %v776 = vmul.f32 %v729, %v747
  %v777 = vmul.f32 %v730, %v747
  %v778 = vmul.f32 %v731, %v747
  %v779 = vmul.f32 %v732, %v747
  %v780 = vmul.f32 %v733, %v747
  %v781 = vmul.f32 %v734, %v747
  %v782 = vmul.f32 %v735, %v747
  %v783 = vmul.f32 %v736, %v747
  %v784 = vmul.f32 %v737, %v747
  %v785 = vmul.f32 %v738, %v747
  %v786 = vmul.f32 %v739, %v747
  %v787 = vmul.f32 %v740, %v747
  %v788 = vmul.f32 %v741, %v747
  %v789 = vmul.f32 %v742, %v747
  %v790 = vmul.f32 %v743, %v747
  %v791 = vlaneseq
  %v792 = vshrl.u32 %v791, 7
  %v793 = vsub.s32 1, %v792
  %v794 = vrot.slane %v466, %v793
  %v795 = vadd.f32 %v748, %v794
  %v796 = vadd.f32 %v749, %v794
  %v797 = vadd.f32 %v750, %v794
  %v798 = vadd.f32 %v751, %v794
  %v799 = vadd.f32 %v752, %v794
  %v800 = vadd.f32 %v753, %v794
  %v801 = vadd.f32 %v754, %v794
  %v802 = vadd.f32 %v755, %v794
  %v803 = vadd.f32 %v756, %v794
  %v804 = vadd.f32 %v757, %v794
  %v805 = vadd.f32 %v758, %v794
  %v806 = vadd.f32 %v759, %v794
  %v807 = vadd.f32 %v760, %v794
  %v808 = vadd.f32 %v761, %v794
  %v809 = vadd.f32 %v762, %v794
  %v810 = vadd.f32 %v763, %v794
  %v811 = vadd.f32 %v764, %v794
  %v812 = vadd.f32 %v765, %v794
  %v813 = vadd.f32 %v766, %v794
  %v814 = vadd.f32 %v767, %v794
  %v815 = vadd.f32 %v768, %v794
  %v816 = vadd.f32 %v769, %v794
  %v817 = vadd.f32 %v770, %v794
  %v818 = vadd.f32 %v771, %v794
  %v819 = vadd.f32 %v772, %v794
  %v820 = vadd.f32 %v773, %v794
  %v821 = vadd.f32 %v774, %v794
  %v822 = vadd.f32 %v775, %v794
  %v823 = vadd.f32 %v776, %v794
  %v824 = vadd.f32 %v777, %v794
  %v825 = vadd.f32 %v778, %v794
  %v826 = vadd.f32 %v779, %v794
  %v827 = vadd.f32 %v780, %v794
  %v828 = vadd.f32 %v781, %v794
  %v829 = vadd.f32 %v782, %v794
  %v830 = vadd.f32 %v783, %v794
  %v831 = vadd.f32 %v784, %v794
  %v832 = vadd.f32 %v785, %v794
  %v833 = vadd.f32 %v786, %v794
  %v834 = vadd.f32 %v787, %v794
  %v835 = vadd.f32 %v788, %v794
  %v836 = vadd.f32 %v789, %v794
  %v837 = vadd.f32 %v790, %v794
  %vm838 = vcmp.ge.f32.partialorder %v795, 0.0
  %vm839 = vcmp.ge.f32.partialorder %v796, 0.0
  %vm840 = vcmp.ge.f32.partialorder %v797, 0.0
  %vm841 = vcmp.ge.f32.partialorder %v798, 0.0
  %vm842 = vcmp.ge.f32.partialorder %v799, 0.0
  %vm843 = vcmp.ge.f32.partialorder %v800, 0.0
  %vm844 = vcmp.ge.f32.partialorder %v801, 0.0
  %vm845 = vcmp.ge.f32.partialorder %v802, 0.0
  %vm846 = vcmp.ge.f32.partialorder %v803, 0.0
  %vm847 = vcmp.ge.f32.partialorder %v804, 0.0
  %vm848 = vcmp.ge.f32.partialorder %v805, 0.0
  %vm849 = vcmp.ge.f32.partialorder %v806, 0.0
  %vm850 = vcmp.ge.f32.partialorder %v807, 0.0
  %vm851 = vcmp.ge.f32.partialorder %v808, 0.0
  %vm852 = vcmp.ge.f32.partialorder %v809, 0.0
  %vm853 = vcmp.ge.f32.partialorder %v810, 0.0
  %vm854 = vcmp.ge.f32.partialorder %v811, 0.0
  %vm855 = vcmp.ge.f32.partialorder %v812, 0.0
  %vm856 = vcmp.ge.f32.partialorder %v813, 0.0
  %vm857 = vcmp.ge.f32.partialorder %v814, 0.0
  %vm858 = vcmp.ge.f32.partialorder %v815, 0.0
  %vm859 = vcmp.ge.f32.partialorder %v816, 0.0
  %vm860 = vcmp.ge.f32.partialorder %v817, 0.0
  %vm861 = vcmp.ge.f32.partialorder %v818, 0.0
  %vm862 = vcmp.ge.f32.partialorder %v819, 0.0
  %vm863 = vcmp.ge.f32.partialorder %v820, 0.0
  %vm864 = vcmp.ge.f32.partialorder %v821, 0.0
  %vm865 = vcmp.ge.f32.partialorder %v822, 0.0
  %vm866 = vcmp.ge.f32.partialorder %v823, 0.0
  %vm867 = vcmp.ge.f32.partialorder %v824, 0.0
  %vm868 = vcmp.ge.f32.partialorder %v825, 0.0
  %vm869 = vcmp.ge.f32.partialorder %v826, 0.0
  %vm870 = vcmp.ge.f32.partialorder %v827, 0.0
  %vm871 = vcmp.ge.f32.partialorder %v828, 0.0
  %vm872 = vcmp.ge.f32.partialorder %v829, 0.0
  %vm873 = vcmp.ge.f32.partialorder %v830, 0.0
  %vm874 = vcmp.ge.f32.partialorder %v831, 0.0
  %vm875 = vcmp.ge.f32.partialorder %v832, 0.0
  %vm876 = vcmp.ge.f32.partialorder %v833, 0.0
  %vm877 = vcmp.ge.f32.partialorder %v834, 0.0
  %vm878 = vcmp.ge.f32.partialorder %v835, 0.0
  %vm879 = vcmp.ge.f32.partialorder %v836, 0.0
  %vm880 = vcmp.ge.f32.partialorder %v837, 0.0
  %v881 = vmul.f32 %v795, 0.2
  %v882 = vmul.f32 %v796, 0.2
  %v883 = vmul.f32 %v797, 0.2
  %v884 = vmul.f32 %v798, 0.2
  %v885 = vmul.f32 %v799, 0.2
  %v886 = vmul.f32 %v800, 0.2
  %v887 = vmul.f32 %v801, 0.2
  %v888 = vmul.f32 %v802, 0.2
  %v889 = vmul.f32 %v803, 0.2
  %v890 = vmul.f32 %v804, 0.2
  %v891 = vmul.f32 %v805, 0.2
  %v892 = vmul.f32 %v806, 0.2
  %v893 = vmul.f32 %v807, 0.2
  %v894 = vmul.f32 %v808, 0.2
  %v895 = vmul.f32 %v809, 0.2
  %v896 = vmul.f32 %v810, 0.2
  %v897 = vmul.f32 %v811, 0.2
  %v898 = vmul.f32 %v812, 0.2
  %v899 = vmul.f32 %v813, 0.2
  %v900 = vmul.f32 %v814, 0.2
  %v901 = vmul.f32 %v815, 0.2
  %v902 = vmul.f32 %v816, 0.2
  %v903 = vmul.f32 %v817, 0.2
  %v904 = vmul.f32 %v818, 0.2
  %v905 = vmul.f32 %v819, 0.2
  %v906 = vmul.f32 %v820, 0.2
  %v907 = vmul.f32 %v821, 0.2
  %v908 = vmul.f32 %v822, 0.2
  %v909 = vmul.f32 %v823, 0.2
  %v910 = vmul.f32 %v824, 0.2
  %v911 = vmul.f32 %v825, 0.2
  %v912 = vmul.f32 %v826, 0.2
  %v913 = vmul.f32 %v827, 0.2
  %v914 = vmul.f32 %v828, 0.2
  %v915 = vmul.f32 %v829, 0.2
  %v916 = vmul.f32 %v830, 0.2
  %v917 = vmul.f32 %v831, 0.2
  %v918 = vmul.f32 %v832, 0.2
  %v919 = vmul.f32 %v833, 0.2
  %v920 = vmul.f32 %v834, 0.2
  %v921 = vmul.f32 %v835, 0.2
  %v922 = vmul.f32 %v836, 0.2
  %v923 = vmul.f32 %v837, 0.2
  %v924 = vsel %vm838, %v795, %v881
  %v925 = vsel %vm839, %v796, %v882
  %v926 = vsel %vm840, %v797, %v883
  %v927 = vsel %vm841, %v798, %v884
  %v928 = vsel %vm842, %v799, %v885
  %v929 = vsel %vm843, %v800, %v886
  %v930 = vsel %vm844, %v801, %v887
  %v931 = vsel %vm845, %v802, %v888
  %v932 = vsel %vm846, %v803, %v889
  %v933 = vsel %vm847, %v804, %v890
  %v934 = vsel %vm848, %v805, %v891
  %v935 = vsel %vm849, %v806, %v892
  %v936 = vsel %vm850, %v807, %v893
  %v937 = vsel %vm851, %v808, %v894
  %v938 = vsel %vm852, %v809, %v895
  %v939 = vsel %vm853, %v810, %v896
  %v940 = vsel %vm854, %v811, %v897
  %v941 = vsel %vm855, %v812, %v898
  %v942 = vsel %vm856, %v813, %v899
  %v943 = vsel %vm857, %v814, %v900
  %v944 = vsel %vm858, %v815, %v901
  %v945 = vsel %vm859, %v816, %v902
  %v946 = vsel %vm860, %v817, %v903
  %v947 = vsel %vm861, %v818, %v904
  %v948 = vsel %vm862, %v819, %v905
  %v949 = vsel %vm863, %v820, %v906
  %v950 = vsel %vm864, %v821, %v907
  %v951 = vsel %vm865, %v822, %v908
  %v952 = vsel %vm866, %v823, %v909
  %v953 = vsel %vm867, %v824, %v910
  %v954 = vsel %vm868, %v825, %v911
  %v955 = vsel %vm869, %v826, %v912
  %v956 = vsel %vm870, %v827, %v913
  %v957 = vsel %vm871, %v828, %v914
  %v958 = vsel %vm872, %v829, %v915
  %v959 = vsel %vm873, %v830, %v916
  %v960 = vsel %vm874, %v831, %v917
  %v961 = vsel %vm875, %v832, %v918
  %v962 = vsel %vm876, %v833, %v919
  %v963 = vsel %vm877, %v834, %v920
  %v964 = vsel %vm878, %v835, %v921
  %v965 = vsel %vm879, %v836, %v922
  %v966 = vsel %vm880, %v837, %v923
  %967 = vst.msk [vmem:[#allocation2] sm:$0xff] %vm191, %v924
  %968 = vst.msk [vmem:[#allocation2 + $0x8] sm:$0xff] %vm191, %v925
  %969 = vst.msk [vmem:[#allocation2 + $0x10] sm:$0xff] %vm191, %v926
  %970 = vst.msk [vmem:[#allocation2 + $0x18] sm:$0xff] %vm191, %v927
  %971 = vst.msk [vmem:[#allocation2 + $0x20] sm:$0xff] %vm191, %v928
  %972 = vst.msk [vmem:[#allocation2 + $0x28] sm:$0xff] %vm191, %v929
  %973 = vst.msk [vmem:[#allocation2 + $0x30] sm:$0xff] %vm191, %v930
  %974 = vst.msk [vmem:[#allocation2 + $0x38] sm:$0xff] %vm191, %v931
  %975 = vst.msk [vmem:[#allocation2 + $0x40] sm:$0xff] %vm191, %v932
  %976 = vst.msk [vmem:[#allocation2 + $0x48] sm:$0xff] %vm191, %v933
  %977 = vst.msk [vmem:[#allocation2 + $0x50] sm:$0xff] %vm191, %v934
  %978 = vst.msk [vmem:[#allocation2 + $0x58] sm:$0xff] %vm191, %v935
  %979 = vst.msk [vmem:[#allocation2 + $0x60] sm:$0xff] %vm191, %v936
  %980 = vst.msk [vmem:[#allocation2 + $0x68] sm:$0xff] %vm191, %v937
  %981 = vst.msk [vmem:[#allocation2 + $0x70] sm:$0xff] %vm191, %v938
  %982 = vst.msk [vmem:[#allocation2 + $0x78] sm:$0xff] %vm191, %v939
  %983 = vst.msk [vmem:[#allocation2 + $0x80] sm:$0xff] %vm191, %v940
  %984 = vst.msk [vmem:[#allocation2 + $0x88] sm:$0xff] %vm191, %v941
  %985 = vst.msk [vmem:[#allocation2 + $0x90] sm:$0xff] %vm191, %v942
  %986 = vst.msk [vmem:[#allocation2 + $0x98] sm:$0xff] %vm191, %v943
  %987 = vst.msk [vmem:[#allocation2 + $0xa0] sm:$0xff] %vm191, %v944
  %vm988 = vcmask 122880
  %989 = vst.msk [vmem:[#allocation2 + $0xa8] sm:$0x1] %vm988, %v945
  %1012 = vrot.lane.b32.xlu0 %v945, 16
  %v1013 = vpop.permute.xlu0 %1012
  %1014 = vrot.lane.b32.xlu0 %v946, 16
  %v1015 = vpop.permute.xlu0 %1014
  %1016 = vrot.lane.b32.xlu0 %v947, 16
  %v1017 = vpop.permute.xlu0 %1016
  %1018 = vrot.lane.b32.xlu0 %v948, 16
  %v1019 = vpop.permute.xlu0 %1018
  %1020 = vrot.lane.b32.xlu0 %v949, 16
  %v1021 = vpop.permute.xlu0 %1020
  %1022 = vrot.lane.b32.xlu0 %v950, 16
  %v1023 = vpop.permute.xlu0 %1022
  %1024 = vrot.lane.b32.xlu0 %v951, 16
  %v1025 = vpop.permute.xlu0 %1024
  %1026 = vrot.lane.b32.xlu0 %v952, 16
  %v1027 = vpop.permute.xlu0 %1026
  %1028 = vrot.lane.b32.xlu0 %v953, 16
  %v1029 = vpop.permute.xlu0 %1028
  %1030 = vrot.lane.b32.xlu0 %v954, 16
  %v1031 = vpop.permute.xlu0 %1030
  %1032 = vrot.lane.b32.xlu0 %v955, 16
  %v1033 = vpop.permute.xlu0 %1032
  %1034 = vrot.lane.b32.xlu0 %v956, 16
  %v1035 = vpop.permute.xlu0 %1034
  %1036 = vrot.lane.b32.xlu0 %v957, 16
  %v1037 = vpop.permute.xlu0 %1036
  %1038 = vrot.lane.b32.xlu0 %v958, 16
  %v1039 = vpop.permute.xlu0 %1038
  %1040 = vrot.lane.b32.xlu0 %v959, 16
  %v1041 = vpop.permute.xlu0 %1040
  %1042 = vrot.lane.b32.xlu0 %v960, 16
  %v1043 = vpop.permute.xlu0 %1042
  %1044 = vrot.lane.b32.xlu0 %v961, 16
  %v1045 = vpop.permute.xlu0 %1044
  %1046 = vrot.lane.b32.xlu0 %v962, 16
  %v1047 = vpop.permute.xlu0 %1046
  %1048 = vrot.lane.b32.xlu0 %v963, 16
  %v1049 = vpop.permute.xlu0 %1048
  %1050 = vrot.lane.b32.xlu0 %v964, 16
  %v1051 = vpop.permute.xlu0 %1050
  %1052 = vrot.lane.b32.xlu0 %v965, 16
  %v1053 = vpop.permute.xlu0 %1052
  %1054 = vrot.lane.b32.xlu0 %v966, 16
  %v1055 = vpop.permute.xlu0 %1054
  %vm1078 = vcmask 261249
  %1079 = vst.msk [vmem:[#allocation2 - $0x1] sm:$0xfe] %vm1078, %v1013
  %vm1080 = vcmask 261248
  %1081 = vst.msk [vmem:[#allocation2 + $0x7] sm:$0xff] %vm1080, %v1015
  %1082 = vst.msk [vmem:[#allocation2 + $0xf] sm:$0xff] %vm1080, %v1017
  %1083 = vst.msk [vmem:[#allocation2 + $0x17] sm:$0xff] %vm1080, %v1019
  %1084 = vst.msk [vmem:[#allocation2 + $0x1f] sm:$0xff] %vm1080, %v1021
  %1085 = vst.msk [vmem:[#allocation2 + $0x27] sm:$0xff] %vm1080, %v1023
  %1086 = vst.msk [vmem:[#allocation2 + $0x2f] sm:$0xff] %vm1080, %v1025
  %1087 = vst.msk [vmem:[#allocation2 + $0x37] sm:$0xff] %vm1080, %v1027
  %1088 = vst.msk [vmem:[#allocation2 + $0x3f] sm:$0xff] %vm1080, %v1029
  %1089 = vst.msk [vmem:[#allocation2 + $0x47] sm:$0xff] %vm1080, %v1031
  %1090 = vst.msk [vmem:[#allocation2 + $0x4f] sm:$0xff] %vm1080, %v1033
  %1091 = vst.msk [vmem:[#allocation2 + $0x57] sm:$0xff] %vm1080, %v1035
  %1092 = vst.msk [vmem:[#allocation2 + $0x5f] sm:$0xff] %vm1080, %v1037
  %1093 = vst.msk [vmem:[#allocation2 + $0x67] sm:$0xff] %vm1080, %v1039
  %1094 = vst.msk [vmem:[#allocation2 + $0x6f] sm:$0xff] %vm1080, %v1041
  %1095 = vst.msk [vmem:[#allocation2 + $0x77] sm:$0xff] %vm1080, %v1043
  %1096 = vst.msk [vmem:[#allocation2 + $0x7f] sm:$0xff] %vm1080, %v1045
  %1097 = vst.msk [vmem:[#allocation2 + $0x87] sm:$0xff] %vm1080, %v1047
  %1098 = vst.msk [vmem:[#allocation2 + $0x8f] sm:$0xff] %vm1080, %v1049
  %1099 = vst.msk [vmem:[#allocation2 + $0x97] sm:$0xff] %vm1080, %v1051
  %1100 = vst.msk [vmem:[#allocation2 + $0x9f] sm:$0xff] %vm1080, %v1053
  %vm1101 = vcmask 255104
  %1102 = vst.msk [vmem:[#allocation2 + $0xa7] sm:$0x3] %vm1101, %v1055
  %v1103 = vld [vmem:[%s3] sm:$0xff]
  %v1104 = vld [vmem:[%s3 + $0x8] sm:$0xff]
  %v1105 = vld [vmem:[%s3 + $0x10] sm:$0xff]
  %v1106 = vld [vmem:[%s3 + $0x18] sm:$0xff]
  %v1107 = vld [vmem:[%s3 + $0x20] sm:$0xff]
  %v1108 = vld [vmem:[%s3 + $0x28] sm:$0xff]
  %v1109 = vld [vmem:[%s3 + $0x30] sm:$0xff]
  %v1110 = vld [vmem:[%s3 + $0x38] sm:$0xff]
  %v1111 = vld [vmem:[%s3 + $0x40] sm:$0xff]
  %v1112 = vld [vmem:[%s3 + $0x48] sm:$0xff]
  %v1113 = vld [vmem:[%s3 + $0x50] sm:$0xff]
  %v1114 = vld [vmem:[%s3 + $0x58] sm:$0xff]
  %v1115 = vld [vmem:[%s3 + $0x60] sm:$0xff]
  %v1116 = vld [vmem:[%s3 + $0x68] sm:$0xff]
  %v1117 = vld [vmem:[%s3 + $0x70] sm:$0xff]
  %v1118 = vld [vmem:[%s3 + $0x78] sm:$0xff]
  %v1119 = vld [vmem:[%s3 + $0x80] sm:$0xff]
  %v1120 = vld [vmem:[%s3 + $0x88] sm:$0xff]
  %v1121 = vld [vmem:[%s3 + $0x90] sm:$0xff]
  %v1122 = vld [vmem:[%s3 + $0x98] sm:$0xff]
  %v1123 = vld [vmem:[%s3 + $0xa0] sm:$0xff]
  %v1124 = vld [vmem:[%s3 + $0xa8] sm:$0xff]
  %v1125 = vld [vmem:[%s3 + $0xb0] sm:$0xff]
  %v1126 = vld [vmem:[%s3 + $0xb8] sm:$0xff]
  %v1127 = vld [vmem:[%s3 + $0xc0] sm:$0xff]
  %v1128 = vld [vmem:[%s3 + $0xc8] sm:$0xff]
  %v1129 = vld [vmem:[%s3 + $0xd0] sm:$0xff]
  %v1130 = vld [vmem:[%s3 + $0xd8] sm:$0xff]
  %v1131 = vld [vmem:[%s3 + $0xe0] sm:$0xff]
  %v1132 = vld [vmem:[%s3 + $0xe8] sm:$0xff]
  %v1133 = vld [vmem:[%s3 + $0xf0] sm:$0xff]
  %v1134 = vld [vmem:[%s3 + $0xf8] sm:$0xff]
  %v1135 = vld [vmem:[%s3 + $0x100] sm:$0xff]
  %v1136 = vld [vmem:[%s3 + $0x108] sm:$0xff]
  %v1137 = vld [vmem:[%s3 + $0x110] sm:$0xff]
  %v1138 = vld [vmem:[%s3 + $0x118] sm:$0xff]
  %v1139 = vld [vmem:[%s3 + $0x120] sm:$0xff]
  %v1140 = vld [vmem:[%s3 + $0x128] sm:$0xff]
  %v1141 = vld [vmem:[%s3 + $0x130] sm:$0xff]
  %v1142 = vld [vmem:[%s3 + $0x138] sm:$0xff]
  %v1143 = vld [vmem:[%s3 + $0x140] sm:$0xff]
  %v1144 = vld [vmem:[%s3 + $0x148] sm:$0xff]
  %v1145 = vld [vmem:[%s3 + $0x150] sm:$0xff]
  %v1146 = vld [vmem:[%s3 + $0x158] sm:$0xff]
  %v1147 = vld [vmem:[%s3 + $0x160] sm:$0xff]
  %v1148 = vld [vmem:[%s3 + $0x168] sm:$0xff]
  %v1149 = vld [vmem:[%s3 + $0x170] sm:$0xff]
  %v1150 = vld [vmem:[%s3 + $0x178] sm:$0xff]
  %v1151 = vld [vmem:[%s3 + $0x180] sm:$0xff]
  %v1152 = vld [vmem:[%s3 + $0x188] sm:$0xff]
  %v1153 = vld [vmem:[#allocation2] sm:$0xff]
  %v1154 = vld [vmem:[#allocation2 + $0x8] sm:$0xff]
  %v1155 = vld [vmem:[#allocation2 + $0x10] sm:$0xff]
  %v1156 = vld [vmem:[#allocation2 + $0x18] sm:$0xff]
  %v1157 = vld [vmem:[#allocation2 + $0x20] sm:$0xff]
  %v1158 = vld [vmem:[#allocation2 + $0x28] sm:$0xff]
  %v1159 = vld [vmem:[#allocation2 + $0x30] sm:$0xff]
  %v1160 = vld [vmem:[#allocation2 + $0x38] sm:$0xff]
  %v1161 = vld [vmem:[#allocation2 + $0x40] sm:$0xff]
  %v1162 = vld [vmem:[#allocation2 + $0x48] sm:$0xff]
  %v1163 = vld [vmem:[#allocation2 + $0x50] sm:$0xff]
  %v1164 = vld [vmem:[#allocation2 + $0x58] sm:$0xff]
  %v1165 = vld [vmem:[#allocation2 + $0x60] sm:$0xff]
  %v1166 = vld [vmem:[#allocation2 + $0x68] sm:$0xff]
  %v1167 = vld [vmem:[#allocation2 + $0x70] sm:$0xff]
  %v1168 = vld [vmem:[#allocation2 + $0x78] sm:$0xff]
  %v1169 = vld [vmem:[#allocation2 + $0x80] sm:$0xff]
  %v1170 = vld [vmem:[#allocation2 + $0x88] sm:$0xff]
  %v1171 = vld [vmem:[#allocation2 + $0x90] sm:$0xff]
  %v1172 = vld [vmem:[#allocation2 + $0x98] sm:$0xff]
  %v1173 = vld [vmem:[#allocation2 + $0xa0] sm:$0xff]
  %v1174 = vld [vmem:[#allocation2 + $0xa8] sm:$0x1]
  %v1175 = vpack.c.bf16 %v1154, %v1153
  %v1176 = vpack.c.bf16 %v1156, %v1155
  %v1177 = vpack.c.bf16 %v1158, %v1157
  %v1178 = vpack.c.bf16 %v1160, %v1159
  %v1179 = vpack.c.bf16 %v1162, %v1161
  %v1180 = vpack.c.bf16 %v1164, %v1163
  %v1181 = vpack.c.bf16 %v1166, %v1165
  %v1182 = vpack.c.bf16 %v1168, %v1167
  %v1183 = vpack.c.bf16 %v1170, %v1169
  %v1184 = vpack.c.bf16 %v1172, %v1171
  %v1185 = vpack.c.bf16 %v1174, %v1173
  %v1236 = vunpack.c.l.b16 %v1103
  %v1237 = vunpack.c.h.b16 %v1103
  %v1238 = vunpack.c.l.b16 %v1104
  %v1239 = vunpack.c.h.b16 %v1104
  %v1240 = vunpack.c.l.b16 %v1105
  %v1241 = vunpack.c.h.b16 %v1105
  %v1242 = vunpack.c.l.b16 %v1106
  %v1243 = vunpack.c.h.b16 %v1106
  %v1244 = vunpack.c.l.b16 %v1107
  %v1245 = vunpack.c.h.b16 %v1107
  %v1246 = vunpack.c.l.b16 %v1108
  %v1247 = vunpack.c.h.b16 %v1108
  %v1248 = vunpack.c.l.b16 %v1109
  %v1249 = vunpack.c.h.b16 %v1109
  %v1250 = vunpack.c.l.b16 %v1110
  %v1251 = vunpack.c.h.b16 %v1110
  %v1252 = vunpack.c.l.b16 %v1111
  %v1253 = vunpack.c.h.b16 %v1111
  %v1254 = vunpack.c.l.b16 %v1112
  %v1255 = vunpack.c.h.b16 %v1112
  %v1256 = vunpack.c.l.b16 %v1113
  %v1257 = vunpack.c.h.b16 %v1113
  %v1258 = vunpack.c.l.b16 %v1114
  %v1259 = vunpack.c.h.b16 %v1114
  %v1260 = vunpack.c.l.b16 %v1115
  %v1261 = vunpack.c.h.b16 %v1115
  %v1262 = vunpack.c.l.b16 %v1116
  %v1263 = vunpack.c.h.b16 %v1116
  %v1264 = vunpack.c.l.b16 %v1117
  %v1265 = vunpack.c.h.b16 %v1117
  %v1266 = vunpack.c.l.b16 %v1118
  %v1267 = vunpack.c.h.b16 %v1118
  %v1268 = vunpack.c.l.b16 %v1119
  %v1269 = vunpack.c.h.b16 %v1119
  %v1270 = vunpack.c.l.b16 %v1120
  %v1271 = vunpack.c.h.b16 %v1120
  %v1272 = vunpack.c.l.b16 %v1121
  %v1273 = vunpack.c.h.b16 %v1121
  %v1274 = vunpack.c.l.b16 %v1122
  %v1275 = vunpack.c.h.b16 %v1122
  %v1276 = vunpack.c.l.b16 %v1123
  %v1277 = vunpack.c.h.b16 %v1123
  %v1278 = vunpack.c.l.b16 %v1124
  %v1279 = vunpack.c.h.b16 %v1124
  %v1280 = vunpack.c.l.b16 %v1125
  %v1281 = vunpack.c.h.b16 %v1125
  %v1282 = vunpack.c.l.b16 %v1126
  %v1283 = vunpack.c.h.b16 %v1126
  %v1284 = vunpack.c.l.b16 %v1127
  %v1285 = vunpack.c.h.b16 %v1127
  %v1286 = vunpack.c.l.b16 %v1128
  %v1287 = vunpack.c.h.b16 %v1128
  %v1288 = vunpack.c.l.b16 %v1129
  %v1289 = vunpack.c.h.b16 %v1129
  %v1290 = vunpack.c.l.b16 %v1130
  %v1291 = vunpack.c.h.b16 %v1130
  %v1292 = vunpack.c.l.b16 %v1131
  %v1293 = vunpack.c.h.b16 %v1131
  %v1294 = vunpack.c.l.b16 %v1132
  %v1295 = vunpack.c.h.b16 %v1132
  %v1296 = vunpack.c.l.b16 %v1133
  %v1297 = vunpack.c.h.b16 %v1133
  %v1298 = vunpack.c.l.b16 %v1134
  %v1299 = vunpack.c.h.b16 %v1134
  %v1300 = vunpack.c.l.b16 %v1135
  %v1301 = vunpack.c.h.b16 %v1135
  %v1302 = vunpack.c.l.b16 %v1136
  %v1303 = vunpack.c.h.b16 %v1136
  %v1304 = vunpack.c.l.b16 %v1137
  %v1305 = vunpack.c.h.b16 %v1137
  %v1306 = vunpack.c.l.b16 %v1138
  %v1307 = vunpack.c.h.b16 %v1138
  %v1308 = vunpack.c.l.b16 %v1139
  %v1309 = vunpack.c.h.b16 %v1139
  %v1310 = vunpack.c.l.b16 %v1140
  %v1311 = vunpack.c.h.b16 %v1140
  %v1312 = vunpack.c.l.b16 %v1141
  %v1313 = vunpack.c.h.b16 %v1141
  %v1314 = vunpack.c.l.b16 %v1142
  %v1315 = vunpack.c.h.b16 %v1142
  %v1316 = vunpack.c.l.b16 %v1143
  %v1317 = vunpack.c.h.b16 %v1143
  %v1318 = vunpack.c.l.b16 %v1144
  %v1319 = vunpack.c.h.b16 %v1144
  %v1320 = vunpack.c.l.b16 %v1145
  %v1321 = vunpack.c.h.b16 %v1145
  %v1322 = vunpack.c.l.b16 %v1146
  %v1323 = vunpack.c.h.b16 %v1146
  %v1324 = vunpack.c.l.b16 %v1147
  %v1325 = vunpack.c.h.b16 %v1147
  %v1326 = vunpack.c.l.b16 %v1148
  %v1327 = vunpack.c.h.b16 %v1148
  %v1328 = vunpack.c.l.b16 %v1149
  %v1329 = vunpack.c.h.b16 %v1149
  %v1330 = vunpack.c.l.b16 %v1150
  %v1331 = vunpack.c.h.b16 %v1150
  %v1332 = vunpack.c.l.b16 %v1151
  %v1333 = vunpack.c.h.b16 %v1151
  %v1334 = vunpack.c.l.b16 %v1152
  %v1335 = vunpack.c.h.b16 %v1152
  %v1336 = vpack.c.b16 %v1238, %v1236
  %v1337 = vpack.c.b16 %v1239, %v1237
  %v1338 = vpack.c.b16 %v1242, %v1240
  %v1339 = vpack.c.b16 %v1243, %v1241
  %v1340 = vpack.c.b16 %v1246, %v1244
  %v1341 = vpack.c.b16 %v1247, %v1245
  %v1342 = vpack.c.b16 %v1250, %v1248
  %v1343 = vpack.c.b16 %v1251, %v1249
  %v1344 = vpack.c.b16 %v1254, %v1252
  %v1345 = vpack.c.b16 %v1255, %v1253
  %v1346 = vpack.c.b16 %v1258, %v1256
  %v1347 = vpack.c.b16 %v1259, %v1257
  %v1348 = vpack.c.b16 %v1262, %v1260
  %v1349 = vpack.c.b16 %v1263, %v1261
  %v1350 = vpack.c.b16 %v1266, %v1264
  %v1351 = vpack.c.b16 %v1267, %v1265
  %v1352 = vpack.c.b16 %v1270, %v1268
  %v1353 = vpack.c.b16 %v1271, %v1269
  %v1354 = vpack.c.b16 %v1274, %v1272
  %v1355 = vpack.c.b16 %v1275, %v1273
  %v1356 = vpack.c.b16 %v1278, %v1276
  %v1357 = vpack.c.b16 %v1279, %v1277
  %v1358 = vpack.c.b16 %v1282, %v1280
  %v1359 = vpack.c.b16 %v1283, %v1281
  %v1360 = vpack.c.b16 %v1286, %v1284
  %v1361 = vpack.c.b16 %v1287, %v1285
  %v1362 = vpack.c.b16 %v1290, %v1288
  %v1363 = vpack.c.b16 %v1291, %v1289
  %v1364 = vpack.c.b16 %v1294, %v1292
  %v1365 = vpack.c.b16 %v1295, %v1293
  %v1366 = vpack.c.b16 %v1298, %v1296
  %v1367 = vpack.c.b16 %v1299, %v1297
  %v1368 = vpack.c.b16 %v1302, %v1300
  %v1369 = vpack.c.b16 %v1303, %v1301
  %v1370 = vpack.c.b16 %v1306, %v1304
  %v1371 = vpack.c.b16 %v1307, %v1305
  %v1372 = vpack.c.b16 %v1310, %v1308
  %v1373 = vpack.c.b16 %v1311, %v1309
  %v1374 = vpack.c.b16 %v1314, %v1312
  %v1375 = vpack.c.b16 %v1315, %v1313
  %v1376 = vpack.c.b16 %v1318, %v1316
  %v1377 = vpack.c.b16 %v1319, %v1317
  %v1378 = vpack.c.b16 %v1322, %v1320
  %v1379 = vpack.c.b16 %v1323, %v1321
  %v1380 = vpack.c.b16 %v1326, %v1324
  %v1381 = vpack.c.b16 %v1327, %v1325
  %v1382 = vpack.c.b16 %v1330, %v1328
  %v1383 = vpack.c.b16 %v1331, %v1329
  %v1384 = vpack.c.b16 %v1334, %v1332
  %v1385 = vpack.c.b16 %v1335, %v1333
  %vm1411 = vcmask 334848
  %v1413 = vsel %vm1411, %v1337, 0
  %v1416 = vsel %vm1411, %v1339, 0
  %v1419 = vsel %vm1411, %v1341, 0
  %v1422 = vsel %vm1411, %v1343, 0
  %v1425 = vsel %vm1411, %v1345, 0
  %v1428 = vsel %vm1411, %v1347, 0
  %v1431 = vsel %vm1411, %v1349, 0
  %v1434 = vsel %vm1411, %v1351, 0
  %v1437 = vsel %vm1411, %v1353, 0
  %v1440 = vsel %vm1411, %v1355, 0
  %v1443 = vsel %vm1411, %v1357, 0
  %v1446 = vsel %vm1411, %v1359, 0
  %v1449 = vsel %vm1411, %v1361, 0
  %v1452 = vsel %vm1411, %v1363, 0
  %v1455 = vsel %vm1411, %v1365, 0
  %v1458 = vsel %vm1411, %v1367, 0
  %v1461 = vsel %vm1411, %v1369, 0
  %v1464 = vsel %vm1411, %v1371, 0
  %v1467 = vsel %vm1411, %v1373, 0
  %v1470 = vsel %vm1411, %v1375, 0
  %v1473 = vsel %vm1411, %v1377, 0
  %v1476 = vsel %vm1411, %v1379, 0
  %v1479 = vsel %vm1411, %v1381, 0
  %v1482 = vsel %vm1411, %v1383, 0
  %v1485 = vsel %vm1411, %v1385, 0
  %vm1487 = vcmask 1043456
  %vm1488 = vcmask 1044480
  %v1489 = vsel %vm1487, 4294967295, 65535
  %v1490 = vsel %vm1488, %v1489, 0
  %v1492 = vand.u32 %v1185, %v1490
  %1494 = vmatprep.subr.bf16.mxu0 0
  %1495 = vmatpush1.bf16.msra.mxu0 %v1175
  %1496 = vmatprep.subr.bf16.mxu0 0
  %1497 = vmatpush1.bf16.msra.mxu0 %v1176
  %1498 = vmatprep.subr.bf16.mxu0 0
  %1499 = vmatpush1.bf16.msra.mxu0 %v1177
  %1500 = vmatprep.subr.bf16.mxu0 0
  %1501 = vmatpush1.bf16.msra.mxu0 %v1178
  %1502 = vmatprep.subr.bf16.mxu0 0
  %1503 = vmatpush1.bf16.msra.mxu0 %v1179
  %1504 = vmatprep.subr.bf16.mxu0 0
  %1505 = vmatpush1.bf16.msra.mxu0 %v1180
  %1506 = vmatprep.subr.bf16.mxu0 0
  %1507 = vmatpush1.bf16.msra.mxu0 %v1181
  %1508 = vmatprep.subr.bf16.mxu0 0
  %1509 = vmatpush1.bf16.msra.mxu0 %v1182
  %1510 = vmatprep.subr.bf16.mxu0 0
  %1511 = vmatpush1.bf16.msra.mxu0 %v1183
  %1512 = vmatprep.subr.bf16.mxu0 0
  %1513 = vmatpush1.bf16.msra.mxu0 %v1184
  %1514 = vmatprep.subr.bf16.mxu0 0
  %1515 = vmatpush1.bf16.msra.mxu0 %v1492
  %1516 = vmatprep.subr.bf16.mxu0 0
  %1517 = vmatpush1.bf16.msra.mxu0 0
  %1518 = vmatprep.subr.bf16.mxu0 0
  %1519 = vmatpush1.bf16.msra.mxu0 0
  %1520 = vmatprep.subr.bf16.mxu0 0
  %1521 = vmatpush1.bf16.msra.mxu0 0
  %1522 = vmatprep.subr.bf16.mxu0 0
  %1523 = vmatpush1.bf16.msra.mxu0 0
  %1524 = vmatprep.subr.bf16.mxu0 0
  %1525 = vmatpush1.bf16.msra.mxu0 0
  %1526 = vmatprep.mubr.bf16.mxu0 %v1413
  %1527 = vmatmul.mubr.bf16.gmra.mrb[0].mxu0 %v1336
  %v1528 = vpop.f32.mrb[0].mxu0
  %v1529 = vadd.f32 0.0, %v1528
  %v1530 = vpop.f32.mrb[0].mxu0
  %v1531 = vpop.f32.mrb[0].mxu0
  %v1532 = vadd.f32 0.0, %v1531
  %v1533 = vpop.f32.mrb[0].mxu0
  %1534 = vmatprep.mubr.bf16.mxu0 %v1416
  %1535 = vmatmul.mubr.bf16.gmra.mrb[0].mxu0 %v1338
  %v1536 = vpop.f32.mrb[0].mxu0
  %v1537 = vadd.f32 0.0, %v1536
  %v1538 = vpop.f32.mrb[0].mxu0
  %v1539 = vpop.f32.mrb[0].mxu0
  %v1540 = vadd.f32 0.0, %v1539
  %v1541 = vpop.f32.mrb[0].mxu0
  %1542 = vmatprep.mubr.bf16.mxu0 %v1419
  %1543 = vmatmul.mubr.bf16.gmra.mrb[0].mxu0 %v1340
  %v1544 = vpop.f32.mrb[0].mxu0
  %v1545 = vadd.f32 0.0, %v1544
  %v1546 = vpop.f32.mrb[0].mxu0
  %v1547 = vpop.f32.mrb[0].mxu0
  %v1548 = vadd.f32 0.0, %v1547
  %v1549 = vpop.f32.mrb[0].mxu0
  %1550 = vmatprep.mubr.bf16.mxu0 %v1422
  %1551 = vmatmul.mubr.bf16.gmra.mrb[0].mxu0 %v1342
  %v1552 = vpop.f32.mrb[0].mxu0
  %v1553 = vadd.f32 0.0, %v1552
  %v1554 = vpop.f32.mrb[0].mxu0
  %v1555 = vpop.f32.mrb[0].mxu0
  %v1556 = vadd.f32 0.0, %v1555
  %v1557 = vpop.f32.mrb[0].mxu0
  %1558 = vmatprep.mubr.bf16.mxu0 %v1425
  %1559 = vmatmul.mubr.bf16.gmra.mrb[0].mxu0 %v1344
  %v1560 = vpop.f32.mrb[0].mxu0
  %v1561 = vadd.f32 0.0, %v1560
  %v1562 = vpop.f32.mrb[0].mxu0
  %v1563 = vpop.f32.mrb[0].mxu0
  %v1564 = vadd.f32 0.0, %v1563
  %v1565 = vpop.f32.mrb[0].mxu0
  %1566 = vmatprep.mubr.bf16.mxu0 %v1428
  %1567 = vmatmul.mubr.bf16.gmra.mrb[0].mxu0 %v1346
  %v1568 = vpop.f32.mrb[0].mxu0
  %v1569 = vadd.f32 0.0, %v1568
  %v1570 = vpop.f32.mrb[0].mxu0
  %v1571 = vpop.f32.mrb[0].mxu0
  %v1572 = vadd.f32 0.0, %v1571
  %v1573 = vpop.f32.mrb[0].mxu0
  %1574 = vmatprep.mubr.bf16.mxu0 %v1431
  %1575 = vmatmul.mubr.bf16.gmra.mrb[0].mxu0 %v1348
  %v1576 = vpop.f32.mrb[0].mxu0
  %v1577 = vadd.f32 0.0, %v1576
  %v1578 = vpop.f32.mrb[0].mxu0
  %v1579 = vpop.f32.mrb[0].mxu0
  %v1580 = vadd.f32 0.0, %v1579
  %v1581 = vpop.f32.mrb[0].mxu0
  %1582 = vmatprep.mubr.bf16.mxu0 %v1434
  %1583 = vmatmul.mubr.bf16.gmra.mrb[0].mxu0 %v1350
  %v1584 = vpop.f32.mrb[0].mxu0
  %v1585 = vadd.f32 0.0, %v1584
  %v1586 = vpop.f32.mrb[0].mxu0
  %v1587 = vpop.f32.mrb[0].mxu0
  %v1588 = vadd.f32 0.0, %v1587
  %v1589 = vpop.f32.mrb[0].mxu0
  %1590 = vmatprep.mubr.bf16.mxu0 %v1437
  %1591 = vmatmul.mubr.bf16.gmra.mrb[0].mxu0 %v1352
  %v1592 = vpop.f32.mrb[0].mxu0
  %v1593 = vadd.f32 0.0, %v1592
  %v1594 = vpop.f32.mrb[0].mxu0
  %v1595 = vpop.f32.mrb[0].mxu0
  %v1596 = vadd.f32 0.0, %v1595
  %v1597 = vpop.f32.mrb[0].mxu0
  %1598 = vmatprep.mubr.bf16.mxu0 %v1440
  %1599 = vmatmul.mubr.bf16.gmra.mrb[0].mxu0 %v1354
  %v1600 = vpop.f32.mrb[0].mxu0
  %v1601 = vadd.f32 0.0, %v1600
  %v1602 = vpop.f32.mrb[0].mxu0
  %v1603 = vpop.f32.mrb[0].mxu0
  %v1604 = vadd.f32 0.0, %v1603
  %v1605 = vpop.f32.mrb[0].mxu0
  %1606 = vmatprep.mubr.bf16.mxu0 %v1443
  %1607 = vmatmul.mubr.bf16.gmra.mrb[0].mxu0 %v1356
  %v1608 = vpop.f32.mrb[0].mxu0
  %v1609 = vadd.f32 0.0, %v1608
  %v1610 = vpop.f32.mrb[0].mxu0
  %v1611 = vpop.f32.mrb[0].mxu0
  %v1612 = vadd.f32 0.0, %v1611
  %v1613 = vpop.f32.mrb[0].mxu0
  %1614 = vmatprep.mubr.bf16.mxu0 %v1446
  %1615 = vmatmul.mubr.bf16.gmra.mrb[0].mxu0 %v1358
  %v1616 = vpop.f32.mrb[0].mxu0
  %v1617 = vadd.f32 0.0, %v1616
  %v1618 = vpop.f32.mrb[0].mxu0
  %v1619 = vpop.f32.mrb[0].mxu0
  %v1620 = vadd.f32 0.0, %v1619
  %v1621 = vpop.f32.mrb[0].mxu0
  %1622 = vmatprep.mubr.bf16.mxu0 %v1449
  %1623 = vmatmul.mubr.bf16.gmra.mrb[0].mxu0 %v1360
  %v1624 = vpop.f32.mrb[0].mxu0
  %v1625 = vadd.f32 0.0, %v1624
  %v1626 = vpop.f32.mrb[0].mxu0
  %v1627 = vpop.f32.mrb[0].mxu0
  %v1628 = vadd.f32 0.0, %v1627
  %v1629 = vpop.f32.mrb[0].mxu0
  %1630 = vmatprep.mubr.bf16.mxu0 %v1452
  %1631 = vmatmul.mubr.bf16.gmra.mrb[0].mxu0 %v1362
  %v1632 = vpop.f32.mrb[0].mxu0
  %v1633 = vadd.f32 0.0, %v1632
  %v1634 = vpop.f32.mrb[0].mxu0
  %v1635 = vpop.f32.mrb[0].mxu0
  %v1636 = vadd.f32 0.0, %v1635
  %v1637 = vpop.f32.mrb[0].mxu0
  %1638 = vmatprep.mubr.bf16.mxu0 %v1455
  %1639 = vmatmul.mubr.bf16.gmra.mrb[0].mxu0 %v1364
  %v1640 = vpop.f32.mrb[0].mxu0
  %v1641 = vadd.f32 0.0, %v1640
  %v1642 = vpop.f32.mrb[0].mxu0
  %v1643 = vpop.f32.mrb[0].mxu0
  %v1644 = vadd.f32 0.0, %v1643
  %v1645 = vpop.f32.mrb[0].mxu0
  %1646 = vmatprep.mubr.bf16.mxu0 %v1458
  %1647 = vmatmul.mubr.bf16.gmra.mrb[0].mxu0 %v1366
  %v1648 = vpop.f32.mrb[0].mxu0
  %v1649 = vadd.f32 0.0, %v1648
  %v1650 = vpop.f32.mrb[0].mxu0
  %v1651 = vpop.f32.mrb[0].mxu0
  %v1652 = vadd.f32 0.0, %v1651
  %v1653 = vpop.f32.mrb[0].mxu0
  %1654 = vmatprep.mubr.bf16.mxu0 %v1461
  %1655 = vmatmul.mubr.bf16.gmra.mrb[0].mxu0 %v1368
  %v1656 = vpop.f32.mrb[0].mxu0
  %v1657 = vadd.f32 0.0, %v1656
  %v1658 = vpop.f32.mrb[0].mxu0
  %v1659 = vpop.f32.mrb[0].mxu0
  %v1660 = vadd.f32 0.0, %v1659
  %v1661 = vpop.f32.mrb[0].mxu0
  %1662 = vmatprep.mubr.bf16.mxu0 %v1464
  %1663 = vmatmul.mubr.bf16.gmra.mrb[0].mxu0 %v1370
  %v1664 = vpop.f32.mrb[0].mxu0
  %v1665 = vadd.f32 0.0, %v1664
  %v1666 = vpop.f32.mrb[0].mxu0
  %v1667 = vpop.f32.mrb[0].mxu0
  %v1668 = vadd.f32 0.0, %v1667
  %v1669 = vpop.f32.mrb[0].mxu0
  %1670 = vmatprep.mubr.bf16.mxu0 %v1467
  %1671 = vmatmul.mubr.bf16.gmra.mrb[0].mxu0 %v1372
  %v1672 = vpop.f32.mrb[0].mxu0
  %v1673 = vadd.f32 0.0, %v1672
  %v1674 = vpop.f32.mrb[0].mxu0
  %v1675 = vpop.f32.mrb[0].mxu0
  %v1676 = vadd.f32 0.0, %v1675
  %v1677 = vpop.f32.mrb[0].mxu0
  %1678 = vmatprep.mubr.bf16.mxu0 %v1470
  %1679 = vmatmul.mubr.bf16.gmra.mrb[0].mxu0 %v1374
  %v1680 = vpop.f32.mrb[0].mxu0
  %v1681 = vadd.f32 0.0, %v1680
  %v1682 = vpop.f32.mrb[0].mxu0
  %v1683 = vpop.f32.mrb[0].mxu0
  %v1684 = vadd.f32 0.0, %v1683
  %v1685 = vpop.f32.mrb[0].mxu0
  %1686 = vmatprep.mubr.bf16.mxu0 %v1473
  %1687 = vmatmul.mubr.bf16.gmra.mrb[0].mxu0 %v1376
  %v1688 = vpop.f32.mrb[0].mxu0
  %v1689 = vadd.f32 0.0, %v1688
  %v1690 = vpop.f32.mrb[0].mxu0
  %v1691 = vpop.f32.mrb[0].mxu0
  %v1692 = vadd.f32 0.0, %v1691
  %v1693 = vpop.f32.mrb[0].mxu0
  %1694 = vmatprep.mubr.bf16.mxu0 %v1476
  %1695 = vmatmul.mubr.bf16.gmra.mrb[0].mxu0 %v1378
  %v1696 = vpop.f32.mrb[0].mxu0
  %v1697 = vadd.f32 0.0, %v1696
  %v1698 = vpop.f32.mrb[0].mxu0
  %v1699 = vpop.f32.mrb[0].mxu0
  %v1700 = vadd.f32 0.0, %v1699
  %v1701 = vpop.f32.mrb[0].mxu0
  %1702 = vmatprep.mubr.bf16.mxu0 %v1479
  %1703 = vmatmul.mubr.bf16.gmra.mrb[0].mxu0 %v1380
  %v1704 = vpop.f32.mrb[0].mxu0
  %v1705 = vadd.f32 0.0, %v1704
  %v1706 = vpop.f32.mrb[0].mxu0
  %v1707 = vpop.f32.mrb[0].mxu0
  %v1708 = vadd.f32 0.0, %v1707
  %v1709 = vpop.f32.mrb[0].mxu0
  %1710 = vmatprep.mubr.bf16.mxu0 %v1482
  %1711 = vmatmul.mubr.bf16.gmra.mrb[0].mxu0 %v1382
  %v1712 = vpop.f32.mrb[0].mxu0
  %v1713 = vadd.f32 0.0, %v1712
  %v1714 = vpop.f32.mrb[0].mxu0
  %v1715 = vpop.f32.mrb[0].mxu0
  %v1716 = vadd.f32 0.0, %v1715
  %v1717 = vpop.f32.mrb[0].mxu0
  %1718 = vmatprep.mubr.bf16.mxu0 %v1485
  %1719 = vmatmul.mubr.bf16.gmra.mrb[0].mxu0 %v1384
  %v1720 = vpop.f32.mrb[0].mxu0
  %v1721 = vadd.f32 0.0, %v1720
  %v1722 = vpop.f32.mrb[0].mxu0
  %v1723 = vpop.f32.mrb[0].mxu0
  %v1724 = vadd.f32 0.0, %v1723
  %v1725 = vpop.f32.mrb[0].mxu0
  %1726 = vdwg.mxu0
  %1727 = vst.msk [vmem:[#allocation3] sm:$0xff] %vm191, %v1529
  %1728 = vst.msk [vmem:[#allocation3 + $0x10] sm:$0xff] %vm191, %v1532
  %1729 = vst.msk [vmem:[#allocation3 + $0x20] sm:$0xff] %vm191, %v1537
  %1730 = vst.msk [vmem:[#allocation3 + $0x30] sm:$0x1] %vm988, %v1540
  %vm1735 = vcmask 1046528
  %v1736 = vrot.slane %v1540, 1
  %v1737 = vrot.slane %v1545, 1
  %v1738 = vsel %vm1735, %v1736, %v1737
  %v1739 = vrot.slane %v1548, 1
  %v1740 = vsel %vm1735, %v1737, %v1739
  %v1741 = vrot.slane %v1553, 1
  %v1742 = vsel %vm1735, %v1739, %v1741
  %1743 = vrot.lane.b32.xlu0 %v1738, 16
  %v1744 = vpop.permute.xlu0 %1743
  %1745 = vrot.lane.b32.xlu0 %v1740, 16
  %v1746 = vpop.permute.xlu0 %1745
  %1747 = vrot.lane.b32.xlu0 %v1742, 16
  %v1748 = vpop.permute.xlu0 %1747
  %1749 = vrot.lane.b32.xlu0 %v1741, 16
  %v1750 = vpop.permute.xlu0 %1749
  %1755 = vst.msk [vmem:[#allocation3] sm:$0xff] %vm1080, %v1744
  %1756 = vst.msk [vmem:[#allocation3 + $0x10] sm:$0xff] %vm1080, %v1746
  %1757 = vst.msk [vmem:[#allocation3 + $0x20] sm:$0xff] %vm1080, %v1748
  %vm1758 = vcmask 254080
  %1759 = vst.msk [vmem:[#allocation3 + $0x30] sm:$0x1] %vm1758, %v1750
  %vm1763 = vcmask 1045504
  %v1764 = vrot.slane %v1553, 2
  %v1765 = vrot.slane %v1556, 2
  %v1766 = vsel %vm1763, %v1764, %v1765
  %v1767 = vrot.slane %v1561, 2
  %v1768 = vsel %vm1763, %v1765, %v1767
  %v1769 = vrot.slane %v1564, 2
  %v1770 = vsel %vm1763, %v1767, %v1769
  %1771 = vrot.lane.b32.xlu0 %v1766, 32
  %v1772 = vpop.permute.xlu0 %1771
  %1773 = vrot.lane.b32.xlu0 %v1768, 32
  %v1774 = vpop.permute.xlu0 %1773
  %1775 = vrot.lane.b32.xlu0 %v1770, 32
  %v1776 = vpop.permute.xlu0 %1775
  %1777 = vrot.lane.b32.xlu0 %v1769, 32
  %v1778 = vpop.permute.xlu0 %1777
  %vm1783 = vcmask 392448
  %1784 = vst.msk [vmem:[#allocation3] sm:$0xff] %vm1783, %v1772
  %1785 = vst.msk [vmem:[#allocation3 + $0x10] sm:$0xff] %vm1783, %v1774
  %1786 = vst.msk [vmem:[#allocation3 + $0x20] sm:$0xff] %vm1783, %v1776
  %vm1787 = vcmask 385280
  %1788 = vst.msk [vmem:[#allocation3 + $0x30] sm:$0x1] %vm1787, %v1778
  %v1792 = vrot.slane %v1564, 3
  %v1793 = vrot.slane %v1569, 3
  %v1794 = vsel %vm1488, %v1792, %v1793
  %v1795 = vrot.slane %v1572, 3
  %v1796 = vsel %vm1488, %v1793, %v1795
  %v1797 = vrot.slane %v1577, 3
  %v1798 = vsel %vm1488, %v1795, %v1797
  %1799 = vrot.lane.b32.xlu0 %v1794, 48
  %v1800 = vpop.permute.xlu0 %1799
  %1801 = vrot.lane.b32.xlu0 %v1796, 48
  %v1802 = vpop.permute.xlu0 %1801
  %1803 = vrot.lane.b32.xlu0 %v1798, 48
  %v1804 = vpop.permute.xlu0 %1803
  %1805 = vrot.lane.b32.xlu0 %v1797, 48
  %v1806 = vpop.permute.xlu0 %1805
  %vm1811 = vcmask 523648
  %1812 = vst.msk [vmem:[#allocation3] sm:$0xff] %vm1811, %v1800
  %1813 = vst.msk [vmem:[#allocation3 + $0x10] sm:$0xff] %vm1811, %v1802
  %1814 = vst.msk [vmem:[#allocation3 + $0x20] sm:$0xff] %vm1811, %v1804
  %vm1815 = vcmask 516480
  %1816 = vst.msk [vmem:[#allocation3 + $0x30] sm:$0x1] %vm1815, %v1806
  %v1820 = vrot.slane %v1577, 4
  %v1821 = vrot.slane %v1580, 4
  %v1822 = vsel %vm1487, %v1820, %v1821
  %v1823 = vrot.slane %v1585, 4
  %v1824 = vsel %vm1487, %v1821, %v1823
  %v1825 = vrot.slane %v1588, 4
  %v1826 = vsel %vm1487, %v1823, %v1825
  %1827 = vrot.lane.b32.xlu0 %v1822, 64
  %v1828 = vpop.permute.xlu0 %1827
  %1829 = vrot.lane.b32.xlu0 %v1824, 64
  %v1830 = vpop.permute.xlu0 %1829
  %1831 = vrot.lane.b32.xlu0 %v1826, 64
  %v1832 = vpop.permute.xlu0 %1831
  %1833 = vrot.lane.b32.xlu0 %v1825, 64
  %v1834 = vpop.permute.xlu0 %1833
  %vm1839 = vcmask 654848
  %1840 = vst.msk [vmem:[#allocation3] sm:$0xff] %vm1839, %v1828
  %1841 = vst.msk [vmem:[#allocation3 + $0x10] sm:$0xff] %vm1839, %v1830
  %1842 = vst.msk [vmem:[#allocation3 + $0x20] sm:$0xff] %vm1839, %v1832
  %vm1843 = vcmask 647680
  %1844 = vst.msk [vmem:[#allocation3 + $0x30] sm:$0x1] %vm1843, %v1834
  %vm1848 = vcmask 1042432
  %v1849 = vrot.slane %v1588, 5
  %v1850 = vrot.slane %v1593, 5
  %v1851 = vsel %vm1848, %v1849, %v1850
  %v1852 = vrot.slane %v1596, 5
  %v1853 = vsel %vm1848, %v1850, %v1852
  %v1854 = vrot.slane %v1601, 5
  %v1855 = vsel %vm1848, %v1852, %v1854
  %1856 = vrot.lane.b32.xlu0 %v1851, 80
  %v1857 = vpop.permute.xlu0 %1856
  %1858 = vrot.lane.b32.xlu0 %v1853, 80
  %v1859 = vpop.permute.xlu0 %1858
  %1860 = vrot.lane.b32.xlu0 %v1855, 80
  %v1861 = vpop.permute.xlu0 %1860
  %1862 = vrot.lane.b32.xlu0 %v1854, 80
  %v1863 = vpop.permute.xlu0 %1862
  %vm1868 = vcmask 786048
  %1869 = vst.msk [vmem:[#allocation3] sm:$0xff] %vm1868, %v1857
  %1870 = vst.msk [vmem:[#allocation3 + $0x10] sm:$0xff] %vm1868, %v1859
  %1871 = vst.msk [vmem:[#allocation3 + $0x20] sm:$0xff] %vm1868, %v1861
  %vm1872 = vcmask 778880
  %1873 = vst.msk [vmem:[#allocation3 + $0x30] sm:$0x1] %vm1872, %v1863
  %vm1877 = vcmask 1041408
  %v1878 = vrot.slane %v1601, 6
  %v1879 = vrot.slane %v1604, 6
  %v1880 = vsel %vm1877, %v1878, %v1879
  %v1881 = vrot.slane %v1609, 6
  %v1882 = vsel %vm1877, %v1879, %v1881
  %v1883 = vrot.slane %v1612, 6
  %v1884 = vsel %vm1877, %v1881, %v1883
  %1885 = vrot.lane.b32.xlu0 %v1880, 96
  %v1886 = vpop.permute.xlu0 %1885
  %1887 = vrot.lane.b32.xlu0 %v1882, 96
  %v1888 = vpop.permute.xlu0 %1887
  %1889 = vrot.lane.b32.xlu0 %v1884, 96
  %v1890 = vpop.permute.xlu0 %1889
  %1891 = vrot.lane.b32.xlu0 %v1883, 96
  %v1892 = vpop.permute.xlu0 %1891
  %vm1897 = vcmask 917248
  %1898 = vst.msk [vmem:[#allocation3] sm:$0xff] %vm1897, %v1886
  %1899 = vst.msk [vmem:[#allocation3 + $0x10] sm:$0xff] %vm1897, %v1888
  %1900 = vst.msk [vmem:[#allocation3 + $0x20] sm:$0xff] %vm1897, %v1890
  %vm1901 = vcmask 910080
  %1902 = vst.msk [vmem:[#allocation3 + $0x30] sm:$0x1] %vm1901, %v1892
  %vm1906 = vcmask 1040384
  %v1907 = vrot.slane %v1612, 7
  %v1908 = vrot.slane %v1617, 7
  %v1909 = vsel %vm1906, %v1907, %v1908
  %v1910 = vrot.slane %v1620, 7
  %v1911 = vsel %vm1906, %v1908, %v1910
  %v1912 = vrot.slane %v1625, 7
  %v1913 = vsel %vm1906, %v1910, %v1912
  %1914 = vrot.lane.b32.xlu0 %v1909, 112
  %v1915 = vpop.permute.xlu0 %1914
  %1916 = vrot.lane.b32.xlu0 %v1911, 112
  %v1917 = vpop.permute.xlu0 %1916
  %1918 = vrot.lane.b32.xlu0 %v1913, 112
  %v1919 = vpop.permute.xlu0 %1918
  %1920 = vrot.lane.b32.xlu0 %v1912, 112
  %v1921 = vpop.permute.xlu0 %1920
  %vm1926 = vcmask 1048448
  %1927 = vst.msk [vmem:[#allocation3] sm:$0xff] %vm1926, %v1915
  %1928 = vst.msk [vmem:[#allocation3 + $0x10] sm:$0xff] %vm1926, %v1917
  %1929 = vst.msk [vmem:[#allocation3 + $0x20] sm:$0xff] %vm1926, %v1919
  %vm1930 = vcmask 1041280
  %1931 = vst.msk [vmem:[#allocation3 + $0x30] sm:$0x1] %vm1930, %v1921
  %1932 = vst.msk [vmem:[#allocation3 + $0x8] sm:$0xff] %vm191, %v1628
  %1933 = vst.msk [vmem:[#allocation3 + $0x18] sm:$0xff] %vm191, %v1633
  %1934 = vst.msk [vmem:[#allocation3 + $0x28] sm:$0xff] %vm191, %v1636
  %1935 = vst.msk [vmem:[#allocation3 + $0x38] sm:$0x1] %vm988, %v1641
  %v1940 = vrot.slane %v1641, 1
  %v1941 = vrot.slane %v1644, 1
  %v1942 = vsel %vm1735, %v1940, %v1941
  %v1943 = vrot.slane %v1649, 1
  %v1944 = vsel %vm1735, %v1941, %v1943
  %v1945 = vrot.slane %v1652, 1
  %v1946 = vsel %vm1735, %v1943, %v1945
  %1947 = vrot.lane.b32.xlu0 %v1942, 16
  %v1948 = vpop.permute.xlu0 %1947
  %1949 = vrot.lane.b32.xlu0 %v1944, 16
  %v1950 = vpop.permute.xlu0 %1949
  %1951 = vrot.lane.b32.xlu0 %v1946, 16
  %v1952 = vpop.permute.xlu0 %1951
  %1953 = vrot.lane.b32.xlu0 %v1945, 16
  %v1954 = vpop.permute.xlu0 %1953
  %1959 = vst.msk [vmem:[#allocation3 + $0x8] sm:$0xff] %vm1080, %v1948
  %1960 = vst.msk [vmem:[#allocation3 + $0x18] sm:$0xff] %vm1080, %v1950
  %1961 = vst.msk [vmem:[#allocation3 + $0x28] sm:$0xff] %vm1080, %v1952
  %1962 = vst.msk [vmem:[#allocation3 + $0x38] sm:$0x1] %vm1758, %v1954
  %v1966 = vrot.slane %v1652, 2
  %v1967 = vrot.slane %v1657, 2
  %v1968 = vsel %vm1763, %v1966, %v1967
  %v1969 = vrot.slane %v1660, 2
  %v1970 = vsel %vm1763, %v1967, %v1969
  %v1971 = vrot.slane %v1665, 2
  %v1972 = vsel %vm1763, %v1969, %v1971
  %1973 = vrot.lane.b32.xlu0 %v1968, 32
  %v1974 = vpop.permute.xlu0 %1973
  %1975 = vrot.lane.b32.xlu0 %v1970, 32
  %v1976 = vpop.permute.xlu0 %1975
  %1977 = vrot.lane.b32.xlu0 %v1972, 32
  %v1978 = vpop.permute.xlu0 %1977
  %1979 = vrot.lane.b32.xlu0 %v1971, 32
  %v1980 = vpop.permute.xlu0 %1979
  %1985 = vst.msk [vmem:[#allocation3 + $0x8] sm:$0xff] %vm1783, %v1974
  %1986 = vst.msk [vmem:[#allocation3 + $0x18] sm:$0xff] %vm1783, %v1976
  %1987 = vst.msk [vmem:[#allocation3 + $0x28] sm:$0xff] %vm1783, %v1978
  %1988 = vst.msk [vmem:[#allocation3 + $0x38] sm:$0x1] %vm1787, %v1980
  %v1992 = vrot.slane %v1665, 3
  %v1993 = vrot.slane %v1668, 3
  %v1994 = vsel %vm1488, %v1992, %v1993
  %v1995 = vrot.slane %v1673, 3
  %v1996 = vsel %vm1488, %v1993, %v1995
  %v1997 = vrot.slane %v1676, 3
  %v1998 = vsel %vm1488, %v1995, %v1997
  %1999 = vrot.lane.b32.xlu0 %v1994, 48
  %v2000 = vpop.permute.xlu0 %1999
  %2001 = vrot.lane.b32.xlu0 %v1996, 48
  %v2002 = vpop.permute.xlu0 %2001
  %2003 = vrot.lane.b32.xlu0 %v1998, 48
  %v2004 = vpop.permute.xlu0 %2003
  %2005 = vrot.lane.b32.xlu0 %v1997, 48
  %v2006 = vpop.permute.xlu0 %2005
  %2011 = vst.msk [vmem:[#allocation3 + $0x8] sm:$0xff] %vm1811, %v2000
  %2012 = vst.msk [vmem:[#allocation3 + $0x18] sm:$0xff] %vm1811, %v2002
  %2013 = vst.msk [vmem:[#allocation3 + $0x28] sm:$0xff] %vm1811, %v2004
  %2014 = vst.msk [vmem:[#allocation3 + $0x38] sm:$0x1] %vm1815, %v2006
  %v2018 = vrot.slane %v1676, 4
  %v2019 = vrot.slane %v1681, 4
  %v2020 = vsel %vm1487, %v2018, %v2019
  %v2021 = vrot.slane %v1684, 4
  %v2022 = vsel %vm1487, %v2019, %v2021
  %v2023 = vrot.slane %v1689, 4
  %v2024 = vsel %vm1487, %v2021, %v2023
  %2025 = vrot.lane.b32.xlu0 %v2020, 64
  %v2026 = vpop.permute.xlu0 %2025
  %2027 = vrot.lane.b32.xlu0 %v2022, 64
  %v2028 = vpop.permute.xlu0 %2027
  %2029 = vrot.lane.b32.xlu0 %v2024, 64
  %v2030 = vpop.permute.xlu0 %2029
  %2031 = vrot.lane.b32.xlu0 %v2023, 64
  %v2032 = vpop.permute.xlu0 %2031
  %2037 = vst.msk [vmem:[#allocation3 + $0x8] sm:$0xff] %vm1839, %v2026
  %2038 = vst.msk [vmem:[#allocation3 + $0x18] sm:$0xff] %vm1839, %v2028
  %2039 = vst.msk [vmem:[#allocation3 + $0x28] sm:$0xff] %vm1839, %v2030
  %2040 = vst.msk [vmem:[#allocation3 + $0x38] sm:$0x1] %vm1843, %v2032
  %v2044 = vrot.slane %v1689, 5
  %v2045 = vrot.slane %v1692, 5
  %v2046 = vsel %vm1848, %v2044, %v2045
  %v2047 = vrot.slane %v1697, 5
  %v2048 = vsel %vm1848, %v2045, %v2047
  %v2049 = vrot.slane %v1700, 5
  %v2050 = vsel %vm1848, %v2047, %v2049
  %2051 = vrot.lane.b32.xlu0 %v2046, 80
  %v2052 = vpop.permute.xlu0 %2051
  %2053 = vrot.lane.b32.xlu0 %v2048, 80
  %v2054 = vpop.permute.xlu0 %2053
  %2055 = vrot.lane.b32.xlu0 %v2050, 80
  %v2056 = vpop.permute.xlu0 %2055
  %2057 = vrot.lane.b32.xlu0 %v2049, 80
  %v2058 = vpop.permute.xlu0 %2057
  %2063 = vst.msk [vmem:[#allocation3 + $0x8] sm:$0xff] %vm1868, %v2052
  %2064 = vst.msk [vmem:[#allocation3 + $0x18] sm:$0xff] %vm1868, %v2054
  %2065 = vst.msk [vmem:[#allocation3 + $0x28] sm:$0xff] %vm1868, %v2056
  %2066 = vst.msk [vmem:[#allocation3 + $0x38] sm:$0x1] %vm1872, %v2058
  %v2070 = vrot.slane %v1700, 6
  %v2071 = vrot.slane %v1705, 6
  %v2072 = vsel %vm1877, %v2070, %v2071
  %v2073 = vrot.slane %v1708, 6
  %v2074 = vsel %vm1877, %v2071, %v2073
  %v2075 = vrot.slane %v1713, 6
  %v2076 = vsel %vm1877, %v2073, %v2075
  %2077 = vrot.lane.b32.xlu0 %v2072, 96
  %v2078 = vpop.permute.xlu0 %2077
  %2079 = vrot.lane.b32.xlu0 %v2074, 96
  %v2080 = vpop.permute.xlu0 %2079
  %2081 = vrot.lane.b32.xlu0 %v2076, 96
  %v2082 = vpop.permute.xlu0 %2081
  %2083 = vrot.lane.b32.xlu0 %v2075, 96
  %v2084 = vpop.permute.xlu0 %2083
  %2089 = vst.msk [vmem:[#allocation3 + $0x8] sm:$0xff] %vm1897, %v2078
  %2090 = vst.msk [vmem:[#allocation3 + $0x18] sm:$0xff] %vm1897, %v2080
  %2091 = vst.msk [vmem:[#allocation3 + $0x28] sm:$0xff] %vm1897, %v2082
  %2092 = vst.msk [vmem:[#allocation3 + $0x38] sm:$0x1] %vm1901, %v2084
  %v2096 = vrot.slane %v1713, 7
  %v2097 = vrot.slane %v1716, 7
  %v2098 = vsel %vm1906, %v2096, %v2097
  %v2099 = vrot.slane %v1721, 7
  %v2100 = vsel %vm1906, %v2097, %v2099
  %v2101 = vrot.slane %v1724, 7
  %v2102 = vsel %vm1906, %v2099, %v2101
  %2103 = vrot.lane.b32.xlu0 %v2098, 112
  %v2104 = vpop.permute.xlu0 %2103
  %2105 = vrot.lane.b32.xlu0 %v2100, 112
  %v2106 = vpop.permute.xlu0 %2105
  %2107 = vrot.lane.b32.xlu0 %v2102, 112
  %v2108 = vpop.permute.xlu0 %2107
  %2109 = vrot.lane.b32.xlu0 %v2101, 112
  %v2110 = vpop.permute.xlu0 %2109
  %2115 = vst.msk [vmem:[#allocation3 + $0x8] sm:$0xff] %vm1926, %v2104
  %2116 = vst.msk [vmem:[#allocation3 + $0x18] sm:$0xff] %vm1926, %v2106
  %2117 = vst.msk [vmem:[#allocation3 + $0x28] sm:$0xff] %vm1926, %v2108
  %2118 = vst.msk [vmem:[#allocation3 + $0x38] sm:$0x1] %vm1930, %v2110
  %v2122 = vrot.slane %v1529, 7
  %v2123 = vrot.slane %v1532, 7
  %v2124 = vsel %vm1906, %v2122, %v2123
  %v2125 = vrot.slane %v1537, 7
  %v2126 = vsel %vm1906, %v2123, %v2125
  %v2127 = vrot.slane %v1540, 7
  %v2128 = vsel %vm1906, %v2125, %v2127
  %2129 = vrot.lane.b32.xlu0 %v2122, 112
  %v2130 = vpop.permute.xlu0 %2129
  %2131 = vrot.lane.b32.xlu0 %v2124, 112
  %v2132 = vpop.permute.xlu0 %2131
  %2133 = vrot.lane.b32.xlu0 %v2126, 112
  %v2134 = vpop.permute.xlu0 %2133
  %2135 = vrot.lane.b32.xlu0 %v2128, 112
  %v2136 = vpop.permute.xlu0 %2135
  %vm2141 = vcmask 130049
  %2142 = vst.msk [vmem:[#allocation3 + $0x30] sm:$0xfe] %vm2141, %v2130
  %2143 = vst.msk [vmem:[#allocation3 + $0x40] sm:$0xff] %vm191, %v2132
  %2144 = vst.msk [vmem:[#allocation3 + $0x50] sm:$0xff] %vm191, %v2134
  %2145 = vst.msk [vmem:[#allocation3 + $0x60] sm:$0x3] %vm550, %v2136
  %2146 = vst.msk [vmem:[#allocation3 + $0x30] sm:$0xfe] %vm1078, %v1540
  %2147 = vst.msk [vmem:[#allocation3 + $0x40] sm:$0xff] %vm1080, %v1545
  %2148 = vst.msk [vmem:[#allocation3 + $0x50] sm:$0xff] %vm1080, %v1548
  %2149 = vst.msk [vmem:[#allocation3 + $0x60] sm:$0x3] %vm1101, %v1553
  %v2150 = vrot.slane %v1556, 1
  %v2151 = vsel %vm1735, %v1741, %v2150
  %v2152 = vrot.slane %v1561, 1
  %v2153 = vsel %vm1735, %v2150, %v2152
  %v2154 = vrot.slane %v1564, 1
  %v2155 = vsel %vm1735, %v2152, %v2154
  %2156 = vrot.lane.b32.xlu0 %v2151, 16
  %v2157 = vpop.permute.xlu0 %2156
  %2158 = vrot.lane.b32.xlu0 %v2153, 16
  %v2159 = vpop.permute.xlu0 %2158
  %2160 = vrot.lane.b32.xlu0 %v2155, 16
  %v2161 = vpop.permute.xlu0 %2160
  %2162 = vrot.lane.b32.xlu0 %v2154, 16
  %v2163 = vpop.permute.xlu0 %2162
  %vm2168 = vcmask 392449
  %2169 = vst.msk [vmem:[#allocation3 + $0x30] sm:$0xfe] %vm2168, %v2157
  %2170 = vst.msk [vmem:[#allocation3 + $0x40] sm:$0xff] %vm1783, %v2159
  %2171 = vst.msk [vmem:[#allocation3 + $0x50] sm:$0xff] %vm1783, %v2161
  %vm2172 = vcmask 386304
  %2173 = vst.msk [vmem:[#allocation3 + $0x60] sm:$0x3] %vm2172, %v2163
  %v2174 = vrot.slane %v1569, 2
  %v2175 = vsel %vm1763, %v1769, %v2174
  %v2176 = vrot.slane %v1572, 2
  %v2177 = vsel %vm1763, %v2174, %v2176
  %v2178 = vrot.slane %v1577, 2
  %v2179 = vsel %vm1763, %v2176, %v2178
  %2180 = vrot.lane.b32.xlu0 %v2175, 32
  %v2181 = vpop.permute.xlu0 %2180
  %2182 = vrot.lane.b32.xlu0 %v2177, 32
  %v2183 = vpop.permute.xlu0 %2182
  %2184 = vrot.lane.b32.xlu0 %v2179, 32
  %v2185 = vpop.permute.xlu0 %2184
  %2186 = vrot.lane.b32.xlu0 %v2178, 32
  %v2187 = vpop.permute.xlu0 %2186
  %vm2192 = vcmask 523649
  %2193 = vst.msk [vmem:[#allocation3 + $0x30] sm:$0xfe] %vm2192, %v2181
  %2194 = vst.msk [vmem:[#allocation3 + $0x40] sm:$0xff] %vm1811, %v2183
  %2195 = vst.msk [vmem:[#allocation3 + $0x50] sm:$0xff] %vm1811, %v2185
  %vm2196 = vcmask 517504
  %2197 = vst.msk [vmem:[#allocation3 + $0x60] sm:$0x3] %vm2196, %v2187
  %v2198 = vrot.slane %v1580, 3
  %v2199 = vsel %vm1488, %v1797, %v2198
  %v2200 = vrot.slane %v1585, 3
  %v2201 = vsel %vm1488, %v2198, %v2200
  %v2202 = vrot.slane %v1588, 3
  %v2203 = vsel %vm1488, %v2200, %v2202
  %2204 = vrot.lane.b32.xlu0 %v2199, 48
  %v2205 = vpop.permute.xlu0 %2204
  %2206 = vrot.lane.b32.xlu0 %v2201, 48
  %v2207 = vpop.permute.xlu0 %2206
  %2208 = vrot.lane.b32.xlu0 %v2203, 48
  %v2209 = vpop.permute.xlu0 %2208
  %2210 = vrot.lane.b32.xlu0 %v2202, 48
  %v2211 = vpop.permute.xlu0 %2210
  %vm2216 = vcmask 654849
  %2217 = vst.msk [vmem:[#allocation3 + $0x30] sm:$0xfe] %vm2216, %v2205
  %2218 = vst.msk [vmem:[#allocation3 + $0x40] sm:$0xff] %vm1839, %v2207
  %2219 = vst.msk [vmem:[#allocation3 + $0x50] sm:$0xff] %vm1839, %v2209
  %vm2220 = vcmask 648704
  %2221 = vst.msk [vmem:[#allocation3 + $0x60] sm:$0x3] %vm2220, %v2211
  %v2222 = vrot.slane %v1593, 4
  %v2223 = vsel %vm1487, %v1825, %v2222
  %v2224 = vrot.slane %v1596, 4
  %v2225 = vsel %vm1487, %v2222, %v2224
  %v2226 = vrot.slane %v1601, 4
  %v2227 = vsel %vm1487, %v2224, %v2226
  %2228 = vrot.lane.b32.xlu0 %v2223, 64
  %v2229 = vpop.permute.xlu0 %2228
  %2230 = vrot.lane.b32.xlu0 %v2225, 64
  %v2231 = vpop.permute.xlu0 %2230
  %2232 = vrot.lane.b32.xlu0 %v2227, 64
  %v2233 = vpop.permute.xlu0 %2232
  %2234 = vrot.lane.b32.xlu0 %v2226, 64
  %v2235 = vpop.permute.xlu0 %2234
  %vm2240 = vcmask 786049
  %2241 = vst.msk [vmem:[#allocation3 + $0x30] sm:$0xfe] %vm2240, %v2229
  %2242 = vst.msk [vmem:[#allocation3 + $0x40] sm:$0xff] %vm1868, %v2231
  %2243 = vst.msk [vmem:[#allocation3 + $0x50] sm:$0xff] %vm1868, %v2233
  %vm2244 = vcmask 779904
  %2245 = vst.msk [vmem:[#allocation3 + $0x60] sm:$0x3] %vm2244, %v2235
  %v2246 = vrot.slane %v1604, 5
  %v2247 = vsel %vm1848, %v1854, %v2246
  %v2248 = vrot.slane %v1609, 5
  %v2249 = vsel %vm1848, %v2246, %v2248
  %v2250 = vrot.slane %v1612, 5
  %v2251 = vsel %vm1848, %v2248, %v2250
  %2252 = vrot.lane.b32.xlu0 %v2247, 80
  %v2253 = vpop.permute.xlu0 %2252
  %2254 = vrot.lane.b32.xlu0 %v2249, 80
  %v2255 = vpop.permute.xlu0 %2254
  %2256 = vrot.lane.b32.xlu0 %v2251, 80
  %v2257 = vpop.permute.xlu0 %2256
  %2258 = vrot.lane.b32.xlu0 %v2250, 80
  %v2259 = vpop.permute.xlu0 %2258
  %vm2264 = vcmask 917249
  %2265 = vst.msk [vmem:[#allocation3 + $0x30] sm:$0xfe] %vm2264, %v2253
  %2266 = vst.msk [vmem:[#allocation3 + $0x40] sm:$0xff] %vm1897, %v2255
  %2267 = vst.msk [vmem:[#allocation3 + $0x50] sm:$0xff] %vm1897, %v2257
  %vm2268 = vcmask 911104
  %2269 = vst.msk [vmem:[#allocation3 + $0x60] sm:$0x3] %vm2268, %v2259
  %v2270 = vrot.slane %v1617, 6
  %v2271 = vsel %vm1877, %v1883, %v2270
  %v2272 = vrot.slane %v1620, 6
  %v2273 = vsel %vm1877, %v2270, %v2272
  %v2274 = vrot.slane %v1625, 6
  %v2275 = vsel %vm1877, %v2272, %v2274
  %2276 = vrot.lane.b32.xlu0 %v2271, 96
  %v2277 = vpop.permute.xlu0 %2276
  %2278 = vrot.lane.b32.xlu0 %v2273, 96
  %v2279 = vpop.permute.xlu0 %2278
  %2280 = vrot.lane.b32.xlu0 %v2275, 96
  %v2281 = vpop.permute.xlu0 %2280
  %2282 = vrot.lane.b32.xlu0 %v2274, 96
  %v2283 = vpop.permute.xlu0 %2282
  %vm2288 = vcmask 1048449
  %2289 = vst.msk [vmem:[#allocation3 + $0x30] sm:$0xfe] %vm2288, %v2277
  %2290 = vst.msk [vmem:[#allocation3 + $0x40] sm:$0xff] %vm1926, %v2279
  %2291 = vst.msk [vmem:[#allocation3 + $0x50] sm:$0xff] %vm1926, %v2281
  %vm2292 = vcmask 1042304
  %2293 = vst.msk [vmem:[#allocation3 + $0x60] sm:$0x3] %vm2292, %v2283
  %v2297 = vrot.slane %v1628, 7
  %v2298 = vrot.slane %v1633, 7
  %v2299 = vsel %vm1906, %v2297, %v2298
  %v2300 = vrot.slane %v1636, 7
  %v2301 = vsel %vm1906, %v2298, %v2300
  %v2302 = vrot.slane %v1641, 7
  %v2303 = vsel %vm1906, %v2300, %v2302
  %2304 = vrot.lane.b32.xlu0 %v2297, 112
  %v2305 = vpop.permute.xlu0 %2304
  %2306 = vrot.lane.b32.xlu0 %v2299, 112
  %v2307 = vpop.permute.xlu0 %2306
  %2308 = vrot.lane.b32.xlu0 %v2301, 112
  %v2309 = vpop.permute.xlu0 %2308
  %2310 = vrot.lane.b32.xlu0 %v2303, 112
  %v2311 = vpop.permute.xlu0 %2310
  %2316 = vst.msk [vmem:[#allocation3 + $0x38] sm:$0xfe] %vm2141, %v2305
  %2317 = vst.msk [vmem:[#allocation3 + $0x48] sm:$0xff] %vm191, %v2307
  %2318 = vst.msk [vmem:[#allocation3 + $0x58] sm:$0xff] %vm191, %v2309
  %2319 = vst.msk [vmem:[#allocation3 + $0x68] sm:$0x3] %vm550, %v2311
  %2320 = vst.msk [vmem:[#allocation3 + $0x38] sm:$0xfe] %vm1078, %v1641
  %2321 = vst.msk [vmem:[#allocation3 + $0x48] sm:$0xff] %vm1080, %v1644
  %2322 = vst.msk [vmem:[#allocation3 + $0x58] sm:$0xff] %vm1080, %v1649
  %2323 = vst.msk [vmem:[#allocation3 + $0x68] sm:$0x3] %vm1101, %v1652
  %v2324 = vrot.slane %v1657, 1
  %v2325 = vsel %vm1735, %v1945, %v2324
  %v2326 = vrot.slane %v1660, 1
  %v2327 = vsel %vm1735, %v2324, %v2326
  %v2328 = vrot.slane %v1665, 1
  %v2329 = vsel %vm1735, %v2326, %v2328
  %2330 = vrot.lane.b32.xlu0 %v2325, 16
  %v2331 = vpop.permute.xlu0 %2330
  %2332 = vrot.lane.b32.xlu0 %v2327, 16
  %v2333 = vpop.permute.xlu0 %2332
  %2334 = vrot.lane.b32.xlu0 %v2329, 16
  %v2335 = vpop.permute.xlu0 %2334
  %2336 = vrot.lane.b32.xlu0 %v2328, 16
  %v2337 = vpop.permute.xlu0 %2336
  %2342 = vst.msk [vmem:[#allocation3 + $0x38] sm:$0xfe] %vm2168, %v2331
  %2343 = vst.msk [vmem:[#allocation3 + $0x48] sm:$0xff] %vm1783, %v2333
  %2344 = vst.msk [vmem:[#allocation3 + $0x58] sm:$0xff] %vm1783, %v2335
  %2345 = vst.msk [vmem:[#allocation3 + $0x68] sm:$0x3] %vm2172, %v2337
  %v2346 = vrot.slane %v1668, 2
  %v2347 = vsel %vm1763, %v1971, %v2346
  %v2348 = vrot.slane %v1673, 2
  %v2349 = vsel %vm1763, %v2346, %v2348
  %v2350 = vrot.slane %v1676, 2
  %v2351 = vsel %vm1763, %v2348, %v2350
  %2352 = vrot.lane.b32.xlu0 %v2347, 32
  %v2353 = vpop.permute.xlu0 %2352
  %2354 = vrot.lane.b32.xlu0 %v2349, 32
  %v2355 = vpop.permute.xlu0 %2354
  %2356 = vrot.lane.b32.xlu0 %v2351, 32
  %v2357 = vpop.permute.xlu0 %2356
  %2358 = vrot.lane.b32.xlu0 %v2350, 32
  %v2359 = vpop.permute.xlu0 %2358
  %2364 = vst.msk [vmem:[#allocation3 + $0x38] sm:$0xfe] %vm2192, %v2353
  %2365 = vst.msk [vmem:[#allocation3 + $0x48] sm:$0xff] %vm1811, %v2355
  %2366 = vst.msk [vmem:[#allocation3 + $0x58] sm:$0xff] %vm1811, %v2357
  %2367 = vst.msk [vmem:[#allocation3 + $0x68] sm:$0x3] %vm2196, %v2359
  %v2368 = vrot.slane %v1681, 3
  %v2369 = vsel %vm1488, %v1997, %v2368
  %v2370 = vrot.slane %v1684, 3
  %v2371 = vsel %vm1488, %v2368, %v2370
  %v2372 = vrot.slane %v1689, 3
  %v2373 = vsel %vm1488, %v2370, %v2372
  %2374 = vrot.lane.b32.xlu0 %v2369, 48
  %v2375 = vpop.permute.xlu0 %2374
  %2376 = vrot.lane.b32.xlu0 %v2371, 48
  %v2377 = vpop.permute.xlu0 %2376
  %2378 = vrot.lane.b32.xlu0 %v2373, 48
  %v2379 = vpop.permute.xlu0 %2378
  %2380 = vrot.lane.b32.xlu0 %v2372, 48
  %v2381 = vpop.permute.xlu0 %2380
  %2386 = vst.msk [vmem:[#allocation3 + $0x38] sm:$0xfe] %vm2216, %v2375
  %2387 = vst.msk [vmem:[#allocation3 + $0x48] sm:$0xff] %vm1839, %v2377
  %2388 = vst.msk [vmem:[#allocation3 + $0x58] sm:$0xff] %vm1839, %v2379
  %2389 = vst.msk [vmem:[#allocation3 + $0x68] sm:$0x3] %vm2220, %v2381
  %v2390 = vrot.slane %v1692, 4
  %v2391 = vsel %vm1487, %v2023, %v2390
  %v2392 = vrot.slane %v1697, 4
  %v2393 = vsel %vm1487, %v2390, %v2392
  %v2394 = vrot.slane %v1700, 4
  %v2395 = vsel %vm1487, %v2392, %v2394
  %2396 = vrot.lane.b32.xlu0 %v2391, 64
  %v2397 = vpop.permute.xlu0 %2396
  %2398 = vrot.lane.b32.xlu0 %v2393, 64
  %v2399 = vpop.permute.xlu0 %2398
  %2400 = vrot.lane.b32.xlu0 %v2395, 64
  %v2401 = vpop.permute.xlu0 %2400
  %2402 = vrot.lane.b32.xlu0 %v2394, 64
  %v2403 = vpop.permute.xlu0 %2402
  %2408 = vst.msk [vmem:[#allocation3 + $0x38] sm:$0xfe] %vm2240, %v2397
  %2409 = vst.msk [vmem:[#allocation3 + $0x48] sm:$0xff] %vm1868, %v2399
  %2410 = vst.msk [vmem:[#allocation3 + $0x58] sm:$0xff] %vm1868, %v2401
  %2411 = vst.msk [vmem:[#allocation3 + $0x68] sm:$0x3] %vm2244, %v2403
  %v2412 = vrot.slane %v1705, 5
  %v2413 = vsel %vm1848, %v2049, %v2412
  %v2414 = vrot.slane %v1708, 5
  %v2415 = vsel %vm1848, %v2412, %v2414
  %v2416 = vrot.slane %v1713, 5
  %v2417 = vsel %vm1848, %v2414, %v2416
  %2418 = vrot.lane.b32.xlu0 %v2413, 80
  %v2419 = vpop.permute.xlu0 %2418
  %2420 = vrot.lane.b32.xlu0 %v2415, 80
  %v2421 = vpop.permute.xlu0 %2420
  %2422 = vrot.lane.b32.xlu0 %v2417, 80
  %v2423 = vpop.permute.xlu0 %2422
  %2424 = vrot.lane.b32.xlu0 %v2416, 80
  %v2425 = vpop.permute.xlu0 %2424
  %2430 = vst.msk [vmem:[#allocation3 + $0x38] sm:$0xfe] %vm2264, %v2419
  %2431 = vst.msk [vmem:[#allocation3 + $0x48] sm:$0xff] %vm1897, %v2421
  %2432 = vst.msk [vmem:[#allocation3 + $0x58] sm:$0xff] %vm1897, %v2423
  %2433 = vst.msk [vmem:[#allocation3 + $0x68] sm:$0x3] %vm2268, %v2425
  %v2434 = vrot.slane %v1716, 6
  %v2435 = vsel %vm1877, %v2075, %v2434
  %v2436 = vrot.slane %v1721, 6
  %v2437 = vsel %vm1877, %v2434, %v2436
  %v2438 = vrot.slane %v1724, 6
  %v2439 = vsel %vm1877, %v2436, %v2438
  %2440 = vrot.lane.b32.xlu0 %v2435, 96
  %v2441 = vpop.permute.xlu0 %2440
  %2442 = vrot.lane.b32.xlu0 %v2437, 96
  %v2443 = vpop.permute.xlu0 %2442
  %2444 = vrot.lane.b32.xlu0 %v2439, 96
  %v2445 = vpop.permute.xlu0 %2444
  %2446 = vrot.lane.b32.xlu0 %v2438, 96
  %v2447 = vpop.permute.xlu0 %2446
  %2452 = vst.msk [vmem:[#allocation3 + $0x38] sm:$0xfe] %vm2288, %v2441
  %2453 = vst.msk [vmem:[#allocation3 + $0x48] sm:$0xff] %vm1926, %v2443
  %2454 = vst.msk [vmem:[#allocation3 + $0x58] sm:$0xff] %vm1926, %v2445
  %2455 = vst.msk [vmem:[#allocation3 + $0x68] sm:$0x3] %vm2292, %v2447
  %v2456 = vld [vmem:[#allocation3] sm:$0xff]
  %v2457 = vld [vmem:[#allocation3 + $0x8] sm:$0xff]
  %v2458 = vld [vmem:[#allocation3 + $0x10] sm:$0xff]
  %v2459 = vld [vmem:[#allocation3 + $0x18] sm:$0xff]
  %v2460 = vld [vmem:[#allocation3 + $0x20] sm:$0xff]
  %v2461 = vld [vmem:[#allocation3 + $0x28] sm:$0xff]
  %v2462 = vld [vmem:[#allocation3 + $0x30] sm:$0xff]
  %v2463 = vld [vmem:[#allocation3 + $0x38] sm:$0xff]
  %v2464 = vld [vmem:[#allocation3 + $0x40] sm:$0xff]
  %v2465 = vld [vmem:[#allocation3 + $0x48] sm:$0xff]
  %v2466 = vld [vmem:[#allocation3 + $0x50] sm:$0xff]
  %v2467 = vld [vmem:[#allocation3 + $0x58] sm:$0xff]
  %v2468 = vld [vmem:[#allocation3 + $0x60] sm:$0x3]
  %v2469 = vld [vmem:[#allocation3 + $0x68] sm:$0x3]
  %v2470 = vpack.c.bf16 %v2458, %v2456
  %v2471 = vpack.c.bf16 %v2459, %v2457
  %v2472 = vpack.c.bf16 %v2462, %v2460
  %v2473 = vpack.c.bf16 %v2463, %v2461
  %v2474 = vpack.c.bf16 %v2466, %v2464
  %v2475 = vpack.c.bf16 %v2467, %v2465
  %v2476 = vpack.c.bf16 %v2468, %v2468
  %v2477 = vpack.c.bf16 %v2469, %v2469
  %v2478 = vld [vmem:[%s4] sm:$0xf]
  %v2479 = vld [vmem:[%s4 + $0x4] sm:$0xf]
  %v2480 = vld [vmem:[%s4 + $0x8] sm:$0xf]
  %v2481 = vld [vmem:[%s4 + $0xc] sm:$0xf]
  %v2482 = vld [vmem:[%s4 + $0x10] sm:$0xf]
  %v2483 = vld [vmem:[%s4 + $0x14] sm:$0xf]
  %v2484 = vld [vmem:[%s4 + $0x18] sm:$0xf]
  %v2485 = vld [vmem:[%s4 + $0x1c] sm:$0xf]
  %v2486 = vld [vmem:[%s4 + $0x20] sm:$0xf]
  %v2487 = vld [vmem:[%s4 + $0x24] sm:$0xf]
  %v2488 = vld [vmem:[%s4 + $0x28] sm:$0xf]
  %v2489 = vld [vmem:[%s4 + $0x2c] sm:$0xf]
  %v2490 = vld [vmem:[%s4 + $0x30] sm:$0xf]
  %v2491 = vld [vmem:[%s4 + $0x34] sm:$0xf]
  %v2492 = vld [vmem:[%s4 + $0x38] sm:$0xf]
  %v2493 = vld [vmem:[%s4 + $0x3c] sm:$0xf]
  %v2494 = vld [vmem:[%s4 + $0x40] sm:$0xf]
  %v2495 = vld [vmem:[%s4 + $0x44] sm:$0xf]
  %v2496 = vld [vmem:[%s4 + $0x48] sm:$0xf]
  %v2497 = vld [vmem:[%s4 + $0x4c] sm:$0xf]
  %v2498 = vld [vmem:[%s4 + $0x50] sm:$0xf]
  %v2499 = vld [vmem:[%s4 + $0x54] sm:$0xf]
  %v2500 = vld [vmem:[%s4 + $0x58] sm:$0xf]
  %v2501 = vld [vmem:[%s4 + $0x5c] sm:$0xf]
  %v2502 = vld [vmem:[%s4 + $0x60] sm:$0xf]
  %v2503 = vld [vmem:[%s4 + $0x64] sm:$0xf]
  %v2504 = vld [vmem:[%s4 + $0x68] sm:$0xf]
  %v2505 = vld [vmem:[%s4 + $0x6c] sm:$0xf]
  %v2506 = vld [vmem:[%s4 + $0x70] sm:$0xf]
  %v2507 = vld [vmem:[%s4 + $0x74] sm:$0xf]
  %v2508 = vld [vmem:[%s4 + $0x78] sm:$0xf]
  %v2509 = vld [vmem:[%s4 + $0x7c] sm:$0xf]
  %v2542 = vunpack.c.l.b16 %v2478
  %v2543 = vunpack.c.l.b16 %v2479
  %v2544 = vunpack.c.l.b16 %v2480
  %v2545 = vunpack.c.l.b16 %v2481
  %v2546 = vunpack.c.l.b16 %v2482
  %v2547 = vunpack.c.l.b16 %v2483
  %v2548 = vunpack.c.l.b16 %v2484
  %v2549 = vunpack.c.l.b16 %v2485
  %v2550 = vunpack.c.l.b16 %v2486
  %v2551 = vunpack.c.l.b16 %v2487
  %v2552 = vunpack.c.l.b16 %v2488
  %v2553 = vunpack.c.l.b16 %v2489
  %v2554 = vunpack.c.l.b16 %v2490
  %v2555 = vunpack.c.l.b16 %v2491
  %v2556 = vunpack.c.l.b16 %v2492
  %v2557 = vunpack.c.l.b16 %v2493
  %v2558 = vunpack.c.l.b16 %v2494
  %v2559 = vunpack.c.l.b16 %v2495
  %v2560 = vunpack.c.l.b16 %v2496
  %v2561 = vunpack.c.l.b16 %v2497
  %v2562 = vunpack.c.l.b16 %v2498
  %v2563 = vunpack.c.l.b16 %v2499
  %v2564 = vunpack.c.l.b16 %v2500
  %v2565 = vunpack.c.l.b16 %v2501
  %v2566 = vunpack.c.l.b16 %v2502
  %v2567 = vunpack.c.l.b16 %v2503
  %v2568 = vunpack.c.l.b16 %v2504
  %v2569 = vunpack.c.l.b16 %v2505
  %v2570 = vunpack.c.l.b16 %v2506
  %v2571 = vunpack.c.l.b16 %v2507
  %v2572 = vunpack.c.l.b16 %v2508
  %v2573 = vunpack.c.l.b16 %v2509
  %v2574 = vpack.c.b16 %v2543, %v2542
  %v2575 = vpack.c.b16 %v2545, %v2544
  %v2576 = vpack.c.b16 %v2547, %v2546
  %v2577 = vpack.c.b16 %v2549, %v2548
  %v2578 = vpack.c.b16 %v2551, %v2550
  %v2579 = vpack.c.b16 %v2553, %v2552
  %v2580 = vpack.c.b16 %v2555, %v2554
  %v2581 = vpack.c.b16 %v2557, %v2556
  %v2582 = vpack.c.b16 %v2559, %v2558
  %v2583 = vpack.c.b16 %v2561, %v2560
  %v2584 = vpack.c.b16 %v2563, %v2562
  %v2585 = vpack.c.b16 %v2565, %v2564
  %v2586 = vpack.c.b16 %v2567, %v2566
  %v2587 = vpack.c.b16 %v2569, %v2568
  %v2588 = vpack.c.b16 %v2571, %v2570
  %v2589 = vpack.c.b16 %v2573, %v2572
  %2606 = vmatprep.subr.bf16.mxu0 0
  %2607 = vmatpush1.bf16.msra.mxu0 %v2574
  %2608 = vmatprep.subr.bf16.mxu0 0
  %2609 = vmatpush1.bf16.msra.mxu0 %v2575
  %2610 = vmatprep.subr.bf16.mxu0 0
  %2611 = vmatpush1.bf16.msra.mxu0 %v2576
  %2612 = vmatprep.subr.bf16.mxu0 0
  %2613 = vmatpush1.bf16.msra.mxu0 %v2577
  %2614 = vmatprep.subr.bf16.mxu0 0
  %2615 = vmatpush1.bf16.msra.mxu0 %v2578
  %2616 = vmatprep.subr.bf16.mxu0 0
  %2617 = vmatpush1.bf16.msra.mxu0 %v2579
  %2618 = vmatprep.subr.bf16.mxu0 0
  %2619 = vmatpush1.bf16.msra.mxu0 %v2580
  %2620 = vmatprep.subr.bf16.mxu0 0
  %2621 = vmatpush1.bf16.msra.mxu0 %v2581
  %2622 = vmatprep.subr.bf16.mxu0 0
  %2623 = vmatpush1.bf16.msra.mxu0 %v2582
  %2624 = vmatprep.subr.bf16.mxu0 0
  %2625 = vmatpush1.bf16.msra.mxu0 %v2583
  %2626 = vmatprep.subr.bf16.mxu0 0
  %2627 = vmatpush1.bf16.msra.mxu0 %v2584
  %2628 = vmatprep.subr.bf16.mxu0 0
  %2629 = vmatpush1.bf16.msra.mxu0 %v2585
  %2630 = vmatprep.subr.bf16.mxu0 0
  %2631 = vmatpush1.bf16.msra.mxu0 %v2586
  %2632 = vmatprep.subr.bf16.mxu0 0
  %2633 = vmatpush1.bf16.msra.mxu0 %v2587
  %2634 = vmatprep.subr.bf16.mxu0 0
  %2635 = vmatpush1.bf16.msra.mxu0 %v2588
  %2636 = vmatprep.subr.bf16.mxu0 0
  %2637 = vmatpush1.bf16.msra.mxu0 %v2589
  %2638 = vmatprep.mubr.bf16.mxu0 %v2471
  %2639 = vmatmul.mubr.bf16.gmra.mrb[0].mxu0 %v2470
  %v2640 = vpop.f32.mrb[0].mxu0
  %v2641 = vadd.f32 0.0, %v2640
  %v2642 = vpop.f32.mrb[0].mxu0
  %v2643 = vpop.f32.mrb[0].mxu0
  %v2644 = vadd.f32 0.0, %v2643
  %v2645 = vpop.f32.mrb[0].mxu0
  %2646 = vmatprep.mubr.bf16.mxu0 %v2473
  %2647 = vmatmul.mubr.bf16.gmra.mrb[0].mxu0 %v2472
  %v2648 = vpop.f32.mrb[0].mxu0
  %v2649 = vadd.f32 0.0, %v2648
  %v2650 = vpop.f32.mrb[0].mxu0
  %v2651 = vpop.f32.mrb[0].mxu0
  %v2652 = vadd.f32 0.0, %v2651
  %v2653 = vpop.f32.mrb[0].mxu0
  %2654 = vmatprep.mubr.bf16.mxu0 %v2475
  %2655 = vmatmul.mubr.bf16.gmra.mrb[0].mxu0 %v2474
  %v2656 = vpop.f32.mrb[0].mxu0
  %v2657 = vadd.f32 0.0, %v2656
  %v2658 = vpop.f32.mrb[0].mxu0
  %v2659 = vpop.f32.mrb[0].mxu0
  %v2660 = vadd.f32 0.0, %v2659
  %v2661 = vpop.f32.mrb[0].mxu0
  %2662 = vmatprep.mubr.bf16.mxu0 %v2477
  %2663 = vmatmul.mubr.bf16.gmra.mrb[0].mxu0 %v2476
  %v2664 = vpop.f32.mrb[0].mxu0
  %v2665 = vadd.f32 0.0, %v2664
  %v2666 = vpop.f32.mrb[0].mxu0
  %v2667 = vpop.f32.mrb[0].mxu0
  %v2668 = vpop.f32.mrb[0].mxu0
  %2669 = vdwg.mxu0
  %v2670 = vld [vmem:[%s5] sm:$0x3]
  %vm2671 = vcmask 261120
  %v2672 = vsel %vm2671, %v2641, 0.0
  %v2673 = vsel %vm2671, %v2644, 0.0
  %v2674 = vadd.f32 %v2672, %v2673
  %v2675 = vsel %vm2671, %v2649, 0.0
  %v2676 = vadd.f32 %v2674, %v2675
  %v2677 = vsel %vm2671, %v2652, 0.0
  %v2678 = vadd.f32 %v2676, %v2677
  %v2679 = vsel %vm2671, %v2657, 0.0
  %v2680 = vadd.f32 %v2678, %v2679
  %v2681 = vsel %vm2671, %v2660, 0.0
  %v2682 = vadd.f32 %v2680, %v2681
  %vm2683 = vcmask 254976
  %v2684 = vsel %vm2683, %v2665, 0.0
  %v2685 = vadd.f32 %v2682, %v2684
  %v2686 = vrot.slane %v2685, 4
  %v2687 = vadd.f32 %v2685, %v2686
  %v2688 = vrot.slane %v2687, 2
  %v2689 = vadd.f32 %v2687, %v2688
  %v2690 = vrot.slane %v2689, 1
  %v2691 = vadd.f32 %v2689, %v2690
  %v2692 = vmul.f32 %v2691, 0.02
  %v2693 = vmul.f32 %v2641, %v2641
  %v2694 = vmul.f32 %v2644, %v2644
  %v2695 = vmul.f32 %v2649, %v2649
  %v2696 = vmul.f32 %v2652, %v2652
  %v2697 = vmul.f32 %v2657, %v2657
  %v2698 = vmul.f32 %v2660, %v2660
  %v2699 = vmul.f32 %v2665, %v2665
  %v2700 = vsel %vm2671, %v2693, 0.0
  %v2701 = vsel %vm2671, %v2694, 0.0
  %v2702 = vadd.f32 %v2700, %v2701
  %v2703 = vsel %vm2671, %v2695, 0.0
  %v2704 = vadd.f32 %v2702, %v2703
  %v2705 = vsel %vm2671, %v2696, 0.0
  %v2706 = vadd.f32 %v2704, %v2705
  %v2707 = vsel %vm2671, %v2697, 0.0
  %v2708 = vadd.f32 %v2706, %v2707
  %v2709 = vsel %vm2671, %v2698, 0.0
  %v2710 = vadd.f32 %v2708, %v2709
  %v2711 = vsel %vm2683, %v2699, 0.0
  %v2712 = vadd.f32 %v2710, %v2711
  %v2713 = vrot.slane %v2712, 4
  %v2714 = vadd.f32 %v2712, %v2713
  %v2715 = vrot.slane %v2714, 2
  %v2716 = vadd.f32 %v2714, %v2715
  %v2717 = vrot.slane %v2716, 1
  %v2718 = vadd.f32 %v2716, %v2717
  %v2719 = vmul.f32 %v2718, 0.02
  %v2720 = vmul.f32 %v2692, %v2692
  %v2721 = vsub.f32 %v2719, %v2720
  %v2722 = vmax.f32 %v2721, 0.0
  %v2723 = vadd.f32 %v2722, 1e-05
  %v2724 = vrsqrt.pop %v2723
  %v2725 = vmul.f32 %v2670, %v2724
  %v2726 = vsub.f32 %v2641, %v2692
  %v2727 = vsub.f32 %v2644, %v2692
  %v2728 = vsub.f32 %v2649, %v2692
  %v2729 = vsub.f32 %v2652, %v2692
  %v2730 = vsub.f32 %v2657, %v2692
  %v2731 = vsub.f32 %v2660, %v2692
  %v2732 = vsub.f32 %v2665, %v2692
  %v2733 = vlaneseq
  %v2734 = vshrl.u32 %v2733, 7
  %v2735 = vsub.s32 0, %v2734
  %v2736 = vrot.slane %v2725, %v2735
  %v2737 = vmul.f32 %v2726, %v2736
  %v2738 = vmul.f32 %v2727, %v2736
  %v2739 = vmul.f32 %v2728, %v2736
  %v2740 = vmul.f32 %v2729, %v2736
  %v2741 = vmul.f32 %v2730, %v2736
  %v2742 = vmul.f32 %v2731, %v2736
  %v2743 = vmul.f32 %v2732, %v2736
  %v2744 = vlaneseq
  %v2745 = vshrl.u32 %v2744, 7
  %v2746 = vsub.s32 1, %v2745
  %v2747 = vrot.slane %v2670, %v2746
  %v2748 = vadd.f32 %v2737, %v2747
  %v2749 = vadd.f32 %v2738, %v2747
  %v2750 = vadd.f32 %v2739, %v2747
  %v2751 = vadd.f32 %v2740, %v2747
  %v2752 = vadd.f32 %v2741, %v2747
  %v2753 = vadd.f32 %v2742, %v2747
  %v2754 = vadd.f32 %v2743, %v2747
  %vm2755 = vcmp.ge.f32.partialorder %v2748, 0.0
  %vm2756 = vcmp.ge.f32.partialorder %v2749, 0.0
  %vm2757 = vcmp.ge.f32.partialorder %v2750, 0.0
  %vm2758 = vcmp.ge.f32.partialorder %v2751, 0.0
  %vm2759 = vcmp.ge.f32.partialorder %v2752, 0.0
  %vm2760 = vcmp.ge.f32.partialorder %v2753, 0.0
  %vm2761 = vcmp.ge.f32.partialorder %v2754, 0.0
  %v2762 = vmul.f32 %v2748, 0.2
  %v2763 = vmul.f32 %v2749, 0.2
  %v2764 = vmul.f32 %v2750, 0.2
  %v2765 = vmul.f32 %v2751, 0.2
  %v2766 = vmul.f32 %v2752, 0.2
  %v2767 = vmul.f32 %v2753, 0.2
  %v2768 = vmul.f32 %v2754, 0.2
  %v2769 = vsel %vm2755, %v2748, %v2762
  %v2770 = vsel %vm2756, %v2749, %v2763
  %v2771 = vsel %vm2757, %v2750, %v2764
  %v2772 = vsel %vm2758, %v2751, %v2765
  %v2773 = vsel %vm2759, %v2752, %v2766
  %v2774 = vsel %vm2760, %v2753, %v2767
  %v2775 = vsel %vm2761, %v2754, %v2768
  %v2776 = vld [vmem:[%s6] sm:$0xff]
  %v2777 = vld [vmem:[%s6 + $0x8] sm:$0xff]
  %v2778 = vld [vmem:[%s6 + $0x10] sm:$0xff]
  %v2779 = vld [vmem:[%s6 + $0x18] sm:$0x1]
  %v2780 = vmul.f32 %v2769, %v2776
  %v2781 = vmul.f32 %v2770, %v2777
  %v2782 = vmul.f32 %v2771, %v2778
  %v2783 = vmul.f32 %v2772, %v2779
  %v2784 = vsel %vm2671, %v2780, 0.0
  %v2785 = vsel %vm2671, %v2781, 0.0
  %v2786 = vadd.f32 %v2784, %v2785
  %v2787 = vsel %vm2671, %v2782, 0.0
  %v2788 = vadd.f32 %v2786, %v2787
  %vm2789 = vcmask 253952
  %v2790 = vsel %vm2789, %v2783, 0.0
  %v2791 = vadd.f32 %v2788, %v2790
  %v2792 = vrot.slane %v2791, 4
  %v2793 = vadd.f32 %v2791, %v2792
  %v2794 = vrot.slane %v2793, 2
  %v2795 = vadd.f32 %v2793, %v2794
  %v2796 = vrot.slane %v2795, 1
  %v2797 = vadd.f32 %v2795, %v2796
  %v2798 = vsel %vm2671, %v2797, 0.0
  %2799 = vadd.xlane.f32.xlu0 %v2798
  %v2800 = vpop.xlane.xlu0 %2799
  %v2801 = vld [vmem:[#allocation4] sm:$0x1]
  %v2802 = vadd.f32 %v2800, %v2801
  %2804 = vset.pattern.permute.xlu0 0
  %2805 = vperm.xlu0 %2804, %v2802
  %v2806 = vpop.permute.xlu0 %2805
  %v2808 = vlaneseq
  %v2809 = vshrl.u32 %v2808, 7
  %v2810 = vsub.s32 0, %v2809
  %v2811 = vrot.slane %v2806, %v2810
  %2812 = vst [vmem:[%s8] sm:$0x1] %v2811
  %v2813 = vld [vmem:[%s6] sm:$0xff]
  %v2814 = vld [vmem:[%s6 + $0x8] sm:$0xff]
  %v2815 = vld [vmem:[%s6 + $0x10] sm:$0xff]
  %v2816 = vld [vmem:[%s6 + $0x18] sm:$0x1]
  %v2821 = vrot.slane %v2813, 7
  %v2822 = vrot.slane %v2814, 7
  %v2823 = vsel %vm1906, %v2821, %v2822
  %v2824 = vrot.slane %v2815, 7
  %v2825 = vsel %vm1906, %v2822, %v2824
  %v2826 = vrot.slane %v2816, 7
  %v2827 = vsel %vm1906, %v2824, %v2826
  %v2832 = vmul.f32 %v2772, %v2821
  %v2833 = vmul.f32 %v2773, %v2823
  %v2834 = vmul.f32 %v2774, %v2825
  %v2835 = vmul.f32 %v2775, %v2827
  %v2840 = vrot.slane %v2832, 1
  %v2841 = vrot.slane %v2833, 1
  %v2842 = vsel %vm1735, %v2840, %v2841
  %v2843 = vrot.slane %v2834, 1
  %v2844 = vsel %vm1735, %v2841, %v2843
  %v2845 = vrot.slane %v2835, 1
  %v2846 = vsel %vm1735, %v2843, %v2845
  %v2851 = vsel %vm2671, %v2842, 0.0
  %v2852 = vsel %vm2671, %v2844, 0.0
  %v2853 = vadd.f32 %v2851, %v2852
  %v2854 = vsel %vm2671, %v2846, 0.0
  %v2855 = vadd.f32 %v2853, %v2854
  %v2856 = vsel %vm2789, %v2845, 0.0
  %v2857 = vadd.f32 %v2855, %v2856
  %v2858 = vrot.slane %v2857, 4
  %v2859 = vadd.f32 %v2857, %v2858
  %v2860 = vrot.slane %v2859, 2
  %v2861 = vadd.f32 %v2859, %v2860
  %v2862 = vrot.slane %v2861, 1
  %v2863 = vadd.f32 %v2861, %v2862
  %v2864 = vsel %vm2671, %v2863, 0.0
  %2865 = vadd.xlane.f32.xlu0 %v2864
  %v2866 = vpop.xlane.xlu0 %2865
  %v2867 = vld [vmem:[#allocation4] sm:$0x1]
  %v2868 = vadd.f32 %v2866, %v2867
  %2870 = vset.pattern.permute.xlu0 0
  %2871 = vperm.xlu0 %2870, %v2868
  %v2872 = vpop.permute.xlu0 %2871
  %v2874 = vlaneseq
  %v2875 = vshrl.u32 %v2874, 7
  %v2876 = vsub.s32 0, %v2875
  %v2877 = vrot.slane %v2872, %v2876
  %2878 = vst [vmem:[%s8 + $0x1] sm:$0x1] %v2877
  // Predicated region
  $region34: #{spectral_norm_discriminator.1} parent=0 // pred_check
    _
  $region35: #{spectral_norm_discriminator.1} parent=0 // pred_check_branch
    %2880 = sbr.rel (0) target = $region37
  $region36: #{spectral_norm_discriminator.1} parent=0 // pred_region
    _
  $region37: #{spectral_norm_discriminator.1} parent=0 // pred_fallthru
    _
  // Predicated region
  $region38: #{spectral_norm_discriminator.1} parent=0 // pred_check
    _
  $region39: #{spectral_norm_discriminator.1} parent=0 // pred_check_branch
    %2882 = sbr.rel (0) target = $region41
  $region40: #{spectral_norm_discriminator.1} parent=0 // pred_region
    _
  $region41: #{spectral_norm_discriminator.1} parent=0 // pred_fallthru
    _

</llo_original>
